<compile_context>
chip_gen: v6e
topology: v6e:2x2x1
jax: 0.10.0
libtpu: 0.0.40
codegen_flags: <defaults>
</compile_context>

<pallas_src>
import math

import jax
import jax.numpy as jnp
from jax.experimental import pallas as pl
from jax.experimental.pallas import tpu as pltpu

B, S, V, D, H, DFF, LAYERS = 2, 8, 16, 32, 4, 64, 2
DH = D // H
EPS = 1e-6
PER_LAYER = 16  # wq,bq,wk,bk,wv,bv,wo,bo,w1,b1,w2,b2,g1,be1,g2,be2
_LAYER_KEYS = ('wq', 'bq', 'wk', 'bk', 'wv', 'bv', 'wo', 'bo',
               'w1', 'b1', 'w2', 'b2', 'g1', 'be1', 'g2', 'be2')


# ----------------------------------------------------------------------------- kernel
def _layernorm(y, gamma, beta):
    mean = jnp.mean(y, axis=-1, keepdims=True)
    cent = y - mean
    var = jnp.mean(cent * cent, axis=-1, keepdims=True)
    return cent * jax.lax.rsqrt(var + EPS) * gamma + beta


def fused_transformer_kernel(*refs):
    """refs = [ids, mask, pe, emb] + LAYERS*PER_LAYER layer params + [wg, bg] + [out]."""
    ids_ref, mask_ref, pe_ref, emb_ref = refs[:4]
    layer_refs = refs[4:4 + LAYERS * PER_LAYER]
    wg_ref, bg_ref, o_ref = refs[4 + LAYERS * PER_LAYER:]

    # ---- embed: in-kernel one-hot gather (exact) * sqrt(D) + positional encoding
    ids = ids_ref[...]                                                     # (B*S, 1) int32
    onehot = (ids == jax.lax.broadcasted_iota(jnp.int32, (B * S, V), 1)
              ).astype(jnp.float32)                                        # (B*S, V)
    x = jnp.dot(onehot, emb_ref[...], preferred_element_type=jnp.float32)  # (B*S, D)
    x = x * jnp.float32(math.sqrt(D)) + jnp.concatenate([pe_ref[...]] * B, axis=0)

    # ---- additive attention-mask bias, hoisted once for all layers & heads
    bias3 = ((mask_ref[...] - 1.0) * jnp.float32(1e9))[:, None, :]         # (B, 1, S)

    scale = jnp.float32(1.0 / math.sqrt(DH))

    for l in range(LAYERS):                                                # static unroll
        base = l * PER_LAYER
        (wq, bq, wk, bk, wv, bv, wo, bo,
         w1, b1, w2, b2, g1, be1, g2, be2) = (layer_refs[base + i][...]
                                              for i in range(PER_LAYER))

        # -- multi-head self-attention (one batched einsum per head, batch dim = B)
        q = jnp.dot(x, wq, preferred_element_type=jnp.float32) + bq        # (B*S, D)
        k = jnp.dot(x, wk, preferred_element_type=jnp.float32) + bk
        v = jnp.dot(x, wv, preferred_element_type=jnp.float32) + bv
        q3 = q.reshape(B, S, D)
        k3 = k.reshape(B, S, D)
        v3 = v.reshape(B, S, D)

        head_outs = []
        for h in range(H):                                                 # H=4, static
            lo, hi = h * DH, (h + 1) * DH
            qh, kh, vh = q3[:, :, lo:hi], k3[:, :, lo:hi], v3[:, :, lo:hi]  # (B, S, DH)
            s = jnp.einsum('bqd,bkd->bqk', qh, kh,
                           preferred_element_type=jnp.float32) * scale + bias3
            s = s - jnp.max(s, axis=-1, keepdims=True)
            p = jnp.exp(s)
            p = p * pl.reciprocal(jnp.sum(p, axis=-1, keepdims=True), approx=False)
            head_outs.append(jnp.einsum('bqk,bkd->bqd', p, vh,
                                        preferred_element_type=jnp.float32))
        attn = jnp.concatenate(head_outs, axis=-1).reshape(B * S, D)
        attn = jnp.dot(attn, wo, preferred_element_type=jnp.float32) + bo

        # -- Add & LayerNorm -> FFN -> Add & LayerNorm (x never leaves VMEM)
        x = _layernorm(x + attn, g1, be1)
        hmid = jnp.maximum(jnp.dot(x, w1, preferred_element_type=jnp.float32) + b1, 0.0)
        ff = jnp.dot(hmid, w2, preferred_element_type=jnp.float32) + b2
        x = _layernorm(x + ff, g2, be2)

    # ---- generator: Linear(D, V) + log_softmax
    logits = jnp.dot(x, wg_ref[...], preferred_element_type=jnp.float32) + bg_ref[...]
    z = logits - jnp.max(logits, axis=-1, keepdims=True)
    o_ref[...] = z - jnp.log(jnp.sum(jnp.exp(z), axis=-1, keepdims=True))


# ----------------------------------------------------------------------------- wrapper
@jax.jit
def narrow_transformer_forward(params, src, src_mask):
    """src: (B, S) int32 token ids; src_mask: (B, 1, S) 1=keep / 0=mask key positions."""
    ids = src.reshape(B * S, 1).astype(jnp.int32)
    mask2d = src_mask.reshape(B, S).astype(jnp.float32)
    inputs = [ids, mask2d, params['pe'], params['emb']]
    for lyr in params['layers']:
        inputs.extend(lyr[k] for k in _LAYER_KEYS)
    inputs.extend([params['wg'], params['bg']])

    logp = pl.pallas_call(
        fused_transformer_kernel,
        out_shape=jax.ShapeDtypeStruct((B * S, V), jnp.float32),
        in_specs=[pl.BlockSpec(memory_space=pltpu.MemorySpace.VMEM)] * len(inputs),
        out_specs=pl.BlockSpec(memory_space=pltpu.MemorySpace.VMEM),
    )(*inputs)
    return logp.reshape(B, S, V)


# ----------------------------------------------------------------------------- params
def positional_encoding(seq, dim):
    pos = jnp.arange(seq, dtype=jnp.float32)[:, None]
    div = jnp.exp(jnp.arange(0, dim, 2, dtype=jnp.float32) * (-math.log(10000.0) / dim))
    pe = jnp.zeros((seq, dim), jnp.float32)
    pe = pe.at[:, 0::2].set(jnp.sin(pos * div))
    pe = pe.at[:, 1::2].set(jnp.cos(pos * div))
    return pe


def _dense(key, fan_in, fan_out):
    w = jax.random.normal(key, (fan_in, fan_out), jnp.float32) / math.sqrt(fan_in)
    b = jnp.zeros((1, fan_out), jnp.float32)
    return w, b


def init_params(key):
    keys = iter(jax.random.split(key, 2 + LAYERS * 6))
    emb = jax.random.normal(next(keys), (V, D), jnp.float32) * 0.1
    layers = []
    for _ in range(LAYERS):
        wq, bq = _dense(next(keys), D, D)
        wk, bk = _dense(next(keys), D, D)
        wv, bv = _dense(next(keys), D, D)
        wo, bo = _dense(next(keys), D, D)
        w1, b1 = _dense(next(keys), D, DFF)
        w2, b2 = _dense(next(keys), DFF, D)
        layers.append(dict(wq=wq, bq=bq, wk=wk, bk=bk, wv=wv, bv=bv, wo=wo, bo=bo,
                           w1=w1, b1=b1, w2=w2, b2=b2,
                           g1=jnp.ones((1, D), jnp.float32),
                           be1=jnp.zeros((1, D), jnp.float32),
                           g2=jnp.ones((1, D), jnp.float32),
                           be2=jnp.zeros((1, D), jnp.float32)))
    wg, bg = _dense(next(keys), D, V)
    return dict(emb=emb, pe=positional_encoding(S, D), layers=layers, wg=wg, bg=bg)


# ----------------------------------------------------------------------------- reference
_PREC = jax.lax.Precision.HIGHEST


def _ln(y, g, b):
    mean = jnp.mean(y, axis=-1, keepdims=True)
    var = jnp.mean((y - mean) ** 2, axis=-1, keepdims=True)
    return (y - mean) * jax.lax.rsqrt(var + EPS) * g + b


def reference_forward(params, src, src_mask):
    x = params['emb'][src] * math.sqrt(D) + params['pe'][None]
    mask = src_mask.reshape(B, 1, 1, S).astype(jnp.float32)
    for lyr in params['layers']:
        q = jnp.dot(x, lyr['wq'], precision=_PREC) + lyr['bq'][0]
        k = jnp.dot(x, lyr['wk'], precision=_PREC) + lyr['bk'][0]
        v = jnp.dot(x, lyr['wv'], precision=_PREC) + lyr['bv'][0]
        sp = lambda t: t.reshape(B, S, H, DH).transpose(0, 2, 1, 3)
        s = jnp.einsum('bhqd,bhkd->bhqk', sp(q), sp(k), precision=_PREC) / math.sqrt(DH)
        s = jnp.where(mask == 0, -1e9, s)
        p = jax.nn.softmax(s, axis=-1)
        a = jnp.einsum('bhqk,bhkd->bhqd', p, sp(v),
                       precision=_PREC).transpose(0, 2, 1, 3).reshape(B, S, D)
        a = jnp.dot(a, lyr['wo'], precision=_PREC) + lyr['bo'][0]
        x = _ln(x + a, lyr['g1'][0], lyr['be1'][0])
        f = jnp.dot(jnp.maximum(jnp.dot(x, lyr['w1'], precision=_PREC) + lyr['b1'][0], 0.0),
                    lyr['w2'], precision=_PREC) + lyr['b2'][0]
        x = _ln(x + f, lyr['g2'][0], lyr['be2'][0])
    logits = jnp.dot(x, params['wg'], precision=_PREC) + params['bg'][0]
    return jax.nn.log_softmax(logits, axis=-1)


if __name__ == "__main__":
    key = jax.random.PRNGKey(0)
    pkey, skey = jax.random.split(key)
    params = init_params(pkey)

    src = jax.random.randint(skey, (B, S), 0, V)                          # (2, 8) ids
    src_mask = jnp.ones((B, 1, S), jnp.float32).at[1, 0, 6:].set(0.0)     # pad last 2 keys of batch 1

    out = jax.block_until_ready(narrow_transformer_forward(params, src, src_mask))

    ref = reference_forward(params, src, src_mask)
    assert out.shape == (B, S, V)
    max_err = float(jnp.max(jnp.abs(out - ref)))
    assert jnp.allclose(out, ref, atol=1e-3, rtol=1e-3), max_err
    print("KERNEL_OK")
</pallas_src>

<mosaic_0001>
module attributes {stable_mosaic.version = 11 : i64} {
  func.func @fused_transformer_kernel(%arg0: memref<16x1xi32, #tpu.memory_space<vmem>>, %arg1: memref<2x8xf32, #tpu.memory_space<vmem>>, %arg2: memref<8x32xf32, #tpu.memory_space<vmem>>, %arg3: memref<16x32xf32, #tpu.memory_space<vmem>>, %arg4: memref<32x32xf32, #tpu.memory_space<vmem>>, %arg5: memref<1x32xf32, #tpu.memory_space<vmem>>, %arg6: memref<32x32xf32, #tpu.memory_space<vmem>>, %arg7: memref<1x32xf32, #tpu.memory_space<vmem>>, %arg8: memref<32x32xf32, #tpu.memory_space<vmem>>, %arg9: memref<1x32xf32, #tpu.memory_space<vmem>>, %arg10: memref<32x32xf32, #tpu.memory_space<vmem>>, %arg11: memref<1x32xf32, #tpu.memory_space<vmem>>, %arg12: memref<32x64xf32, #tpu.memory_space<vmem>>, %arg13: memref<1x64xf32, #tpu.memory_space<vmem>>, %arg14: memref<64x32xf32, #tpu.memory_space<vmem>>, %arg15: memref<1x32xf32, #tpu.memory_space<vmem>>, %arg16: memref<1x32xf32, #tpu.memory_space<vmem>>, %arg17: memref<1x32xf32, #tpu.memory_space<vmem>>, %arg18: memref<1x32xf32, #tpu.memory_space<vmem>>, %arg19: memref<1x32xf32, #tpu.memory_space<vmem>>, %arg20: memref<32x32xf32, #tpu.memory_space<vmem>>, %arg21: memref<1x32xf32, #tpu.memory_space<vmem>>, %arg22: memref<32x32xf32, #tpu.memory_space<vmem>>, %arg23: memref<1x32xf32, #tpu.memory_space<vmem>>, %arg24: memref<32x32xf32, #tpu.memory_space<vmem>>, %arg25: memref<1x32xf32, #tpu.memory_space<vmem>>, %arg26: memref<32x32xf32, #tpu.memory_space<vmem>>, %arg27: memref<1x32xf32, #tpu.memory_space<vmem>>, %arg28: memref<32x64xf32, #tpu.memory_space<vmem>>, %arg29: memref<1x64xf32, #tpu.memory_space<vmem>>, %arg30: memref<64x32xf32, #tpu.memory_space<vmem>>, %arg31: memref<1x32xf32, #tpu.memory_space<vmem>>, %arg32: memref<1x32xf32, #tpu.memory_space<vmem>>, %arg33: memref<1x32xf32, #tpu.memory_space<vmem>>, %arg34: memref<1x32xf32, #tpu.memory_space<vmem>>, %arg35: memref<1x32xf32, #tpu.memory_space<vmem>>, %arg36: memref<32x16xf32, #tpu.memory_space<vmem>>, %arg37: memref<1x16xf32, #tpu.memory_space<vmem>>, %arg38: memref<16x16xf32, #tpu.memory_space<vmem>>) attributes {dimension_semantics = [], scalar_prefetch = 0 : i64, scratch_operands = 0 : i64, tpu.core_type = #tpu.core_type<tc>} {
    %c0 = arith.constant 0 : index
    %c0_0 = arith.constant 0 : index
    %0 = vector.load %arg0[%c0, %c0_0] : memref<16x1xi32, #tpu.memory_space<vmem>>, vector<16x1xi32>
    %1 = tpu.iota {dimensions = array<i32: 1>} : vector<16x16xi32>
    %2 = vector.broadcast %0 : vector<16x1xi32> to vector<16x16xi32>
    %3 = arith.cmpi eq, %2, %1 : vector<16x16xi32>
    %4 = arith.extui %3 : vector<16x16xi1> to vector<16x16xi32>
    %5 = arith.sitofp %4 : vector<16x16xi32> to vector<16x16xf32>
    %c0_1 = arith.constant 0 : index
    %c0_2 = arith.constant 0 : index
    %6 = vector.load %arg3[%c0_1, %c0_2] : memref<16x32xf32, #tpu.memory_space<vmem>>, vector<16x32xf32>
    %cst = arith.constant dense<0.000000e+00> : vector<16x32xf32>
    %7 = tpu.matmul %5, %6, %cst {dimension_numbers = #tpu.dot_dimension_numbers<[1], [0], [0], [1], [0, 0, 1, 1], [], []>} : vector<16x16xf32>, vector<16x32xf32>, vector<16x32xf32> -> vector<16x32xf32>
    %cst_3 = arith.constant 5.65685415 : f32
    %8 = vector.broadcast %cst_3 : f32 to vector<16x32xf32>
    %9 = arith.mulf %7, %8 : vector<16x32xf32>
    %c0_4 = arith.constant 0 : index
    %c0_5 = arith.constant 0 : index
    %10 = vector.load %arg2[%c0_4, %c0_5] : memref<8x32xf32, #tpu.memory_space<vmem>>, vector<8x32xf32>
    %11 = tpu.concatenate %10, %10 in 0 : vector<8x32xf32>, vector<8x32xf32> -> vector<16x32xf32>
    %12 = arith.addf %9, %11 : vector<16x32xf32>
    %c0_6 = arith.constant 0 : index
    %c0_7 = arith.constant 0 : index
    %13 = vector.load %arg1[%c0_6, %c0_7] : memref<2x8xf32, #tpu.memory_space<vmem>>, vector<2x8xf32>
    %cst_8 = arith.constant 1.000000e+00 : f32
    %14 = vector.broadcast %cst_8 : f32 to vector<2x8xf32>
    %15 = arith.subf %13, %14 : vector<2x8xf32>
    %cst_9 = arith.constant 1.000000e+09 : f32
    %16 = vector.broadcast %cst_9 : f32 to vector<2x8xf32>
    %17 = arith.mulf %15, %16 : vector<2x8xf32>
    %18 = vector.shape_cast %17 : vector<2x8xf32> to vector<2x1x8xf32>
    %c0_10 = arith.constant 0 : index
    %c0_11 = arith.constant 0 : index
    %19 = vector.load %arg4[%c0_10, %c0_11] : memref<32x32xf32, #tpu.memory_space<vmem>>, vector<32x32xf32>
    %c0_12 = arith.constant 0 : index
    %c0_13 = arith.constant 0 : index
    %20 = vector.load %arg5[%c0_12, %c0_13] : memref<1x32xf32, #tpu.memory_space<vmem>>, vector<1x32xf32>
    %c0_14 = arith.constant 0 : index
    %c0_15 = arith.constant 0 : index
    %21 = vector.load %arg6[%c0_14, %c0_15] : memref<32x32xf32, #tpu.memory_space<vmem>>, vector<32x32xf32>
    %c0_16 = arith.constant 0 : index
    %c0_17 = arith.constant 0 : index
    %22 = vector.load %arg7[%c0_16, %c0_17] : memref<1x32xf32, #tpu.memory_space<vmem>>, vector<1x32xf32>
    %c0_18 = arith.constant 0 : index
    %c0_19 = arith.constant 0 : index
    %23 = vector.load %arg8[%c0_18, %c0_19] : memref<32x32xf32, #tpu.memory_space<vmem>>, vector<32x32xf32>
    %c0_20 = arith.constant 0 : index
    %c0_21 = arith.constant 0 : index
    %24 = vector.load %arg9[%c0_20, %c0_21] : memref<1x32xf32, #tpu.memory_space<vmem>>, vector<1x32xf32>
    %c0_22 = arith.constant 0 : index
    %c0_23 = arith.constant 0 : index
    %25 = vector.load %arg10[%c0_22, %c0_23] : memref<32x32xf32, #tpu.memory_space<vmem>>, vector<32x32xf32>
    %c0_24 = arith.constant 0 : index
    %c0_25 = arith.constant 0 : index
    %26 = vector.load %arg11[%c0_24, %c0_25] : memref<1x32xf32, #tpu.memory_space<vmem>>, vector<1x32xf32>
    %c0_26 = arith.constant 0 : index
    %c0_27 = arith.constant 0 : index
    %27 = vector.load %arg12[%c0_26, %c0_27] : memref<32x64xf32, #tpu.memory_space<vmem>>, vector<32x64xf32>
    %c0_28 = arith.constant 0 : index
    %c0_29 = arith.constant 0 : index
    %28 = vector.load %arg13[%c0_28, %c0_29] : memref<1x64xf32, #tpu.memory_space<vmem>>, vector<1x64xf32>
    %c0_30 = arith.constant 0 : index
    %c0_31 = arith.constant 0 : index
    %29 = vector.load %arg14[%c0_30, %c0_31] : memref<64x32xf32, #tpu.memory_space<vmem>>, vector<64x32xf32>
    %c0_32 = arith.constant 0 : index
    %c0_33 = arith.constant 0 : index
    %30 = vector.load %arg15[%c0_32, %c0_33] : memref<1x32xf32, #tpu.memory_space<vmem>>, vector<1x32xf32>
    %c0_34 = arith.constant 0 : index
    %c0_35 = arith.constant 0 : index
    %31 = vector.load %arg16[%c0_34, %c0_35] : memref<1x32xf32, #tpu.memory_space<vmem>>, vector<1x32xf32>
    %c0_36 = arith.constant 0 : index
    %c0_37 = arith.constant 0 : index
    %32 = vector.load %arg17[%c0_36, %c0_37] : memref<1x32xf32, #tpu.memory_space<vmem>>, vector<1x32xf32>
    %c0_38 = arith.constant 0 : index
    %c0_39 = arith.constant 0 : index
    %33 = vector.load %arg18[%c0_38, %c0_39] : memref<1x32xf32, #tpu.memory_space<vmem>>, vector<1x32xf32>
    %c0_40 = arith.constant 0 : index
    %c0_41 = arith.constant 0 : index
    %34 = vector.load %arg19[%c0_40, %c0_41] : memref<1x32xf32, #tpu.memory_space<vmem>>, vector<1x32xf32>
    %cst_42 = arith.constant dense<0.000000e+00> : vector<16x32xf32>
    %35 = tpu.matmul %12, %19, %cst_42 {dimension_numbers = #tpu.dot_dimension_numbers<[1], [0], [0], [1], [0, 0, 1, 1], [], []>} : vector<16x32xf32>, vector<32x32xf32>, vector<16x32xf32> -> vector<16x32xf32>
    %36 = vector.broadcast %20 : vector<1x32xf32> to vector<16x32xf32>
    %37 = arith.addf %35, %36 : vector<16x32xf32>
    %cst_43 = arith.constant dense<0.000000e+00> : vector<16x32xf32>
    %38 = tpu.matmul %12, %21, %cst_43 {dimension_numbers = #tpu.dot_dimension_numbers<[1], [0], [0], [1], [0, 0, 1, 1], [], []>} : vector<16x32xf32>, vector<32x32xf32>, vector<16x32xf32> -> vector<16x32xf32>
    %39 = vector.broadcast %22 : vector<1x32xf32> to vector<16x32xf32>
    %40 = arith.addf %38, %39 : vector<16x32xf32>
    %cst_44 = arith.constant dense<0.000000e+00> : vector<16x32xf32>
    %41 = tpu.matmul %12, %23, %cst_44 {dimension_numbers = #tpu.dot_dimension_numbers<[1], [0], [0], [1], [0, 0, 1, 1], [], []>} : vector<16x32xf32>, vector<32x32xf32>, vector<16x32xf32> -> vector<16x32xf32>
    %42 = vector.broadcast %24 : vector<1x32xf32> to vector<16x32xf32>
    %43 = arith.addf %41, %42 : vector<16x32xf32>
    %44 = vector.shape_cast %37 : vector<16x32xf32> to vector<2x8x32xf32>
    %45 = vector.shape_cast %40 : vector<16x32xf32> to vector<2x8x32xf32>
    %46 = vector.shape_cast %43 : vector<16x32xf32> to vector<2x8x32xf32>
    %47 = vector.extract_strided_slice %44 {offsets = [0, 0, 0], sizes = [2, 8, 8], strides = [1, 1, 1]} : vector<2x8x32xf32> to vector<2x8x8xf32>
    %48 = vector.extract_strided_slice %45 {offsets = [0, 0, 0], sizes = [2, 8, 8], strides = [1, 1, 1]} : vector<2x8x32xf32> to vector<2x8x8xf32>
    %49 = vector.extract_strided_slice %46 {offsets = [0, 0, 0], sizes = [2, 8, 8], strides = [1, 1, 1]} : vector<2x8x32xf32> to vector<2x8x8xf32>
    "tpu.trace_start"() <{level = 10 : i32, message = "bqd,bkd->bqk"}> : () -> ()
    %cst_45 = arith.constant dense<0.000000e+00> : vector<2x8x8xf32>
    %50 = tpu.matmul %47, %48, %cst_45 {dimension_numbers = #tpu.dot_dimension_numbers<[2], [2], [1], [1], [0, 0, 0, 1, 1, 1], [0], [0]>} : vector<2x8x8xf32>, vector<2x8x8xf32>, vector<2x8x8xf32> -> vector<2x8x8xf32>
    "tpu.trace_stop"() : () -> ()
    %cst_46 = arith.constant 0.353553385 : f32
    %51 = vector.broadcast %cst_46 : f32 to vector<2x8x8xf32>
    %52 = arith.mulf %50, %51 : vector<2x8x8xf32>
    %53 = vector.broadcast %18 : vector<2x1x8xf32> to vector<2x8x8xf32>
    %54 = arith.addf %52, %53 : vector<2x8x8xf32>
    %cst_47 = arith.constant dense<0xFF800000> : vector<2x8xf32>
    %55 = vector.multi_reduction <maximumf>, %54, %cst_47 [2] : vector<2x8x8xf32> to vector<2x8xf32>
    %56 = vector.shape_cast %55 : vector<2x8xf32> to vector<2x8x1xf32>
    %57 = vector.broadcast %56 : vector<2x8x1xf32> to vector<2x8x8xf32>
    %58 = arith.subf %54, %57 : vector<2x8x8xf32>
    %59 = math.exp %58 : vector<2x8x8xf32>
    %cst_48 = arith.constant dense<0.000000e+00> : vector<2x8xf32>
    %60 = vector.multi_reduction <add>, %59, %cst_48 [2] : vector<2x8x8xf32> to vector<2x8xf32>
    %61 = vector.shape_cast %60 : vector<2x8xf32> to vector<2x8x1xf32>
    %62 = tpu.reciprocal %61 : vector<2x8x1xf32> -> vector<2x8x1xf32>
    %63 = vector.broadcast %62 : vector<2x8x1xf32> to vector<2x8x8xf32>
    %64 = arith.mulf %59, %63 : vector<2x8x8xf32>
    "tpu.trace_start"() <{level = 10 : i32, message = "bqk,bkd->bqd"}> : () -> ()
    %cst_49 = arith.constant dense<0.000000e+00> : vector<2x8x8xf32>
    %65 = tpu.matmul %64, %49, %cst_49 {dimension_numbers = #tpu.dot_dimension_numbers<[2], [1], [1], [2], [0, 0, 0, 1, 1, 2], [0], [0]>} : vector<2x8x8xf32>, vector<2x8x8xf32>, vector<2x8x8xf32> -> vector<2x8x8xf32>
    "tpu.trace_stop"() : () -> ()
    %66 = vector.extract_strided_slice %44 {offsets = [0, 0, 8], sizes = [2, 8, 8], strides = [1, 1, 1]} : vector<2x8x32xf32> to vector<2x8x8xf32>
    %67 = vector.extract_strided_slice %45 {offsets = [0, 0, 8], sizes = [2, 8, 8], strides = [1, 1, 1]} : vector<2x8x32xf32> to vector<2x8x8xf32>
    %68 = vector.extract_strided_slice %46 {offsets = [0, 0, 8], sizes = [2, 8, 8], strides = [1, 1, 1]} : vector<2x8x32xf32> to vector<2x8x8xf32>
    "tpu.trace_start"() <{level = 10 : i32, message = "bqd,bkd->bqk"}> : () -> ()
    %cst_50 = arith.constant dense<0.000000e+00> : vector<2x8x8xf32>
    %69 = tpu.matmul %66, %67, %cst_50 {dimension_numbers = #tpu.dot_dimension_numbers<[2], [2], [1], [1], [0, 0, 0, 1, 1, 1], [0], [0]>} : vector<2x8x8xf32>, vector<2x8x8xf32>, vector<2x8x8xf32> -> vector<2x8x8xf32>
    "tpu.trace_stop"() : () -> ()
    %cst_51 = arith.constant 0.353553385 : f32
    %70 = vector.broadcast %cst_51 : f32 to vector<2x8x8xf32>
    %71 = arith.mulf %69, %70 : vector<2x8x8xf32>
    %72 = vector.broadcast %18 : vector<2x1x8xf32> to vector<2x8x8xf32>
    %73 = arith.addf %71, %72 : vector<2x8x8xf32>
    %cst_52 = arith.constant dense<0xFF800000> : vector<2x8xf32>
    %74 = vector.multi_reduction <maximumf>, %73, %cst_52 [2] : vector<2x8x8xf32> to vector<2x8xf32>
    %75 = vector.shape_cast %74 : vector<2x8xf32> to vector<2x8x1xf32>
    %76 = vector.broadcast %75 : vector<2x8x1xf32> to vector<2x8x8xf32>
    %77 = arith.subf %73, %76 : vector<2x8x8xf32>
    %78 = math.exp %77 : vector<2x8x8xf32>
    %cst_53 = arith.constant dense<0.000000e+00> : vector<2x8xf32>
    %79 = vector.multi_reduction <add>, %78, %cst_53 [2] : vector<2x8x8xf32> to vector<2x8xf32>
    %80 = vector.shape_cast %79 : vector<2x8xf32> to vector<2x8x1xf32>
    %81 = tpu.reciprocal %80 : vector<2x8x1xf32> -> vector<2x8x1xf32>
    %82 = vector.broadcast %81 : vector<2x8x1xf32> to vector<2x8x8xf32>
    %83 = arith.mulf %78, %82 : vector<2x8x8xf32>
    "tpu.trace_start"() <{level = 10 : i32, message = "bqk,bkd->bqd"}> : () -> ()
    %cst_54 = arith.constant dense<0.000000e+00> : vector<2x8x8xf32>
    %84 = tpu.matmul %83, %68, %cst_54 {dimension_numbers = #tpu.dot_dimension_numbers<[2], [1], [1], [2], [0, 0, 0, 1, 1, 2], [0], [0]>} : vector<2x8x8xf32>, vector<2x8x8xf32>, vector<2x8x8xf32> -> vector<2x8x8xf32>
    "tpu.trace_stop"() : () -> ()
    %85 = vector.extract_strided_slice %44 {offsets = [0, 0, 16], sizes = [2, 8, 8], strides = [1, 1, 1]} : vector<2x8x32xf32> to vector<2x8x8xf32>
    %86 = vector.extract_strided_slice %45 {offsets = [0, 0, 16], sizes = [2, 8, 8], strides = [1, 1, 1]} : vector<2x8x32xf32> to vector<2x8x8xf32>
    %87 = vector.extract_strided_slice %46 {offsets = [0, 0, 16], sizes = [2, 8, 8], strides = [1, 1, 1]} : vector<2x8x32xf32> to vector<2x8x8xf32>
    "tpu.trace_start"() <{level = 10 : i32, message = "bqd,bkd->bqk"}> : () -> ()
    %cst_55 = arith.constant dense<0.000000e+00> : vector<2x8x8xf32>
    %88 = tpu.matmul %85, %86, %cst_55 {dimension_numbers = #tpu.dot_dimension_numbers<[2], [2], [1], [1], [0, 0, 0, 1, 1, 1], [0], [0]>} : vector<2x8x8xf32>, vector<2x8x8xf32>, vector<2x8x8xf32> -> vector<2x8x8xf32>
    "tpu.trace_stop"() : () -> ()
    %cst_56 = arith.constant 0.353553385 : f32
    %89 = vector.broadcast %cst_56 : f32 to vector<2x8x8xf32>
    %90 = arith.mulf %88, %89 : vector<2x8x8xf32>
    %91 = vector.broadcast %18 : vector<2x1x8xf32> to vector<2x8x8xf32>
    %92 = arith.addf %90, %91 : vector<2x8x8xf32>
    %cst_57 = arith.constant dense<0xFF800000> : vector<2x8xf32>
    %93 = vector.multi_reduction <maximumf>, %92, %cst_57 [2] : vector<2x8x8xf32> to vector<2x8xf32>
    %94 = vector.shape_cast %93 : vector<2x8xf32> to vector<2x8x1xf32>
    %95 = vector.broadcast %94 : vector<2x8x1xf32> to vector<2x8x8xf32>
    %96 = arith.subf %92, %95 : vector<2x8x8xf32>
    %97 = math.exp %96 : vector<2x8x8xf32>
    %cst_58 = arith.constant dense<0.000000e+00> : vector<2x8xf32>
    %98 = vector.multi_reduction <add>, %97, %cst_58 [2] : vector<2x8x8xf32> to vector<2x8xf32>
    %99 = vector.shape_cast %98 : vector<2x8xf32> to vector<2x8x1xf32>
    %100 = tpu.reciprocal %99 : vector<2x8x1xf32> -> vector<2x8x1xf32>
    %101 = vector.broadcast %100 : vector<2x8x1xf32> to vector<2x8x8xf32>
    %102 = arith.mulf %97, %101 : vector<2x8x8xf32>
    "tpu.trace_start"() <{level = 10 : i32, message = "bqk,bkd->bqd"}> : () -> ()
    %cst_59 = arith.constant dense<0.000000e+00> : vector<2x8x8xf32>
    %103 = tpu.matmul %102, %87, %cst_59 {dimension_numbers = #tpu.dot_dimension_numbers<[2], [1], [1], [2], [0, 0, 0, 1, 1, 2], [0], [0]>} : vector<2x8x8xf32>, vector<2x8x8xf32>, vector<2x8x8xf32> -> vector<2x8x8xf32>
    "tpu.trace_stop"() : () -> ()
    %104 = vector.extract_strided_slice %44 {offsets = [0, 0, 24], sizes = [2, 8, 8], strides = [1, 1, 1]} : vector<2x8x32xf32> to vector<2x8x8xf32>
    %105 = vector.extract_strided_slice %45 {offsets = [0, 0, 24], sizes = [2, 8, 8], strides = [1, 1, 1]} : vector<2x8x32xf32> to vector<2x8x8xf32>
    %106 = vector.extract_strided_slice %46 {offsets = [0, 0, 24], sizes = [2, 8, 8], strides = [1, 1, 1]} : vector<2x8x32xf32> to vector<2x8x8xf32>
    "tpu.trace_start"() <{level = 10 : i32, message = "bqd,bkd->bqk"}> : () -> ()
    %cst_60 = arith.constant dense<0.000000e+00> : vector<2x8x8xf32>
    %107 = tpu.matmul %104, %105, %cst_60 {dimension_numbers = #tpu.dot_dimension_numbers<[2], [2], [1], [1], [0, 0, 0, 1, 1, 1], [0], [0]>} : vector<2x8x8xf32>, vector<2x8x8xf32>, vector<2x8x8xf32> -> vector<2x8x8xf32>
    "tpu.trace_stop"() : () -> ()
    %cst_61 = arith.constant 0.353553385 : f32
    %108 = vector.broadcast %cst_61 : f32 to vector<2x8x8xf32>
    %109 = arith.mulf %107, %108 : vector<2x8x8xf32>
    %110 = vector.broadcast %18 : vector<2x1x8xf32> to vector<2x8x8xf32>
    %111 = arith.addf %109, %110 : vector<2x8x8xf32>
    %cst_62 = arith.constant dense<0xFF800000> : vector<2x8xf32>
    %112 = vector.multi_reduction <maximumf>, %111, %cst_62 [2] : vector<2x8x8xf32> to vector<2x8xf32>
    %113 = vector.shape_cast %112 : vector<2x8xf32> to vector<2x8x1xf32>
    %114 = vector.broadcast %113 : vector<2x8x1xf32> to vector<2x8x8xf32>
    %115 = arith.subf %111, %114 : vector<2x8x8xf32>
    %116 = math.exp %115 : vector<2x8x8xf32>
    %cst_63 = arith.constant dense<0.000000e+00> : vector<2x8xf32>
    %117 = vector.multi_reduction <add>, %116, %cst_63 [2] : vector<2x8x8xf32> to vector<2x8xf32>
    %118 = vector.shape_cast %117 : vector<2x8xf32> to vector<2x8x1xf32>
    %119 = tpu.reciprocal %118 : vector<2x8x1xf32> -> vector<2x8x1xf32>
    %120 = vector.broadcast %119 : vector<2x8x1xf32> to vector<2x8x8xf32>
    %121 = arith.mulf %116, %120 : vector<2x8x8xf32>
    "tpu.trace_start"() <{level = 10 : i32, message = "bqk,bkd->bqd"}> : () -> ()
    %cst_64 = arith.constant dense<0.000000e+00> : vector<2x8x8xf32>
    %122 = tpu.matmul %121, %106, %cst_64 {dimension_numbers = #tpu.dot_dimension_numbers<[2], [1], [1], [2], [0, 0, 0, 1, 1, 2], [0], [0]>} : vector<2x8x8xf32>, vector<2x8x8xf32>, vector<2x8x8xf32> -> vector<2x8x8xf32>
    "tpu.trace_stop"() : () -> ()
    %123 = tpu.concatenate %65, %84, %103, %122 in 2 : vector<2x8x8xf32>, vector<2x8x8xf32>, vector<2x8x8xf32>, vector<2x8x8xf32> -> vector<2x8x32xf32>
    %124 = vector.shape_cast %123 : vector<2x8x32xf32> to vector<16x32xf32>
    %cst_65 = arith.constant dense<0.000000e+00> : vector<16x32xf32>
    %125 = tpu.matmul %124, %25, %cst_65 {dimension_numbers = #tpu.dot_dimension_numbers<[1], [0], [0], [1], [0, 0, 1, 1], [], []>} : vector<16x32xf32>, vector<32x32xf32>, vector<16x32xf32> -> vector<16x32xf32>
    %126 = vector.broadcast %26 : vector<1x32xf32> to vector<16x32xf32>
    %127 = arith.addf %125, %126 : vector<16x32xf32>
    %128 = arith.addf %12, %127 : vector<16x32xf32>
    %cst_66 = arith.constant dense<0.000000e+00> : vector<16xf32>
    %129 = vector.multi_reduction <add>, %128, %cst_66 [1] : vector<16x32xf32> to vector<16xf32>
    %130 = vector.shape_cast %129 : vector<16xf32> to vector<16x1xf32>
    %cst_67 = arith.constant 3.200000e+01 : f32
    %131 = vector.broadcast %cst_67 : f32 to vector<16x1xf32>
    %132 = arith.divf %130, %131 : vector<16x1xf32>
    %133 = vector.broadcast %132 : vector<16x1xf32> to vector<16x32xf32>
    %134 = arith.subf %128, %133 : vector<16x32xf32>
    %135 = arith.mulf %134, %134 : vector<16x32xf32>
    %cst_68 = arith.constant dense<0.000000e+00> : vector<16xf32>
    %136 = vector.multi_reduction <add>, %135, %cst_68 [1] : vector<16x32xf32> to vector<16xf32>
    %137 = vector.shape_cast %136 : vector<16xf32> to vector<16x1xf32>
    %cst_69 = arith.constant 3.200000e+01 : f32
    %138 = vector.broadcast %cst_69 : f32 to vector<16x1xf32>
    %139 = arith.divf %137, %138 : vector<16x1xf32>
    %cst_70 = arith.constant 9.99999997E-7 : f32
    %140 = vector.broadcast %cst_70 : f32 to vector<16x1xf32>
    %141 = arith.addf %139, %140 : vector<16x1xf32>
    %142 = math.rsqrt %141 : vector<16x1xf32>
    %143 = vector.broadcast %142 : vector<16x1xf32> to vector<16x32xf32>
    %144 = arith.mulf %134, %143 : vector<16x32xf32>
    %145 = vector.broadcast %31 : vector<1x32xf32> to vector<16x32xf32>
    %146 = arith.mulf %144, %145 : vector<16x32xf32>
    %147 = vector.broadcast %32 : vector<1x32xf32> to vector<16x32xf32>
    %148 = arith.addf %146, %147 : vector<16x32xf32>
    %cst_71 = arith.constant dense<0.000000e+00> : vector<16x64xf32>
    %149 = tpu.matmul %148, %27, %cst_71 {dimension_numbers = #tpu.dot_dimension_numbers<[1], [0], [0], [1], [0, 0, 1, 1], [], []>} : vector<16x32xf32>, vector<32x64xf32>, vector<16x64xf32> -> vector<16x64xf32>
    %150 = vector.broadcast %28 : vector<1x64xf32> to vector<16x64xf32>
    %151 = arith.addf %149, %150 : vector<16x64xf32>
    %cst_72 = arith.constant 0.000000e+00 : f32
    %152 = vector.broadcast %cst_72 : f32 to vector<16x64xf32>
    %153 = arith.maximumf %151, %152 : vector<16x64xf32>
    %cst_73 = arith.constant dense<0.000000e+00> : vector<16x32xf32>
    %154 = tpu.matmul %153, %29, %cst_73 {dimension_numbers = #tpu.dot_dimension_numbers<[1], [0], [0], [1], [0, 0, 1, 1], [], []>} : vector<16x64xf32>, vector<64x32xf32>, vector<16x32xf32> -> vector<16x32xf32>
    %155 = vector.broadcast %30 : vector<1x32xf32> to vector<16x32xf32>
    %156 = arith.addf %154, %155 : vector<16x32xf32>
    %157 = arith.addf %148, %156 : vector<16x32xf32>
    %cst_74 = arith.constant dense<0.000000e+00> : vector<16xf32>
    %158 = vector.multi_reduction <add>, %157, %cst_74 [1] : vector<16x32xf32> to vector<16xf32>
    %159 = vector.shape_cast %158 : vector<16xf32> to vector<16x1xf32>
    %cst_75 = arith.constant 3.200000e+01 : f32
    %160 = vector.broadcast %cst_75 : f32 to vector<16x1xf32>
    %161 = arith.divf %159, %160 : vector<16x1xf32>
    %162 = vector.broadcast %161 : vector<16x1xf32> to vector<16x32xf32>
    %163 = arith.subf %157, %162 : vector<16x32xf32>
    %164 = arith.mulf %163, %163 : vector<16x32xf32>
    %cst_76 = arith.constant dense<0.000000e+00> : vector<16xf32>
    %165 = vector.multi_reduction <add>, %164, %cst_76 [1] : vector<16x32xf32> to vector<16xf32>
    %166 = vector.shape_cast %165 : vector<16xf32> to vector<16x1xf32>
    %cst_77 = arith.constant 3.200000e+01 : f32
    %167 = vector.broadcast %cst_77 : f32 to vector<16x1xf32>
    %168 = arith.divf %166, %167 : vector<16x1xf32>
    %cst_78 = arith.constant 9.99999997E-7 : f32
    %169 = vector.broadcast %cst_78 : f32 to vector<16x1xf32>
    %170 = arith.addf %168, %169 : vector<16x1xf32>
    %171 = math.rsqrt %170 : vector<16x1xf32>
    %172 = vector.broadcast %171 : vector<16x1xf32> to vector<16x32xf32>
    %173 = arith.mulf %163, %172 : vector<16x32xf32>
    %174 = vector.broadcast %33 : vector<1x32xf32> to vector<16x32xf32>
    %175 = arith.mulf %173, %174 : vector<16x32xf32>
    %176 = vector.broadcast %34 : vector<1x32xf32> to vector<16x32xf32>
    %177 = arith.addf %175, %176 : vector<16x32xf32>
    %c0_79 = arith.constant 0 : index
    %c0_80 = arith.constant 0 : index
    %178 = vector.load %arg20[%c0_79, %c0_80] : memref<32x32xf32, #tpu.memory_space<vmem>>, vector<32x32xf32>
    %c0_81 = arith.constant 0 : index
    %c0_82 = arith.constant 0 : index
    %179 = vector.load %arg21[%c0_81, %c0_82] : memref<1x32xf32, #tpu.memory_space<vmem>>, vector<1x32xf32>
    %c0_83 = arith.constant 0 : index
    %c0_84 = arith.constant 0 : index
    %180 = vector.load %arg22[%c0_83, %c0_84] : memref<32x32xf32, #tpu.memory_space<vmem>>, vector<32x32xf32>
    %c0_85 = arith.constant 0 : index
    %c0_86 = arith.constant 0 : index
    %181 = vector.load %arg23[%c0_85, %c0_86] : memref<1x32xf32, #tpu.memory_space<vmem>>, vector<1x32xf32>
    %c0_87 = arith.constant 0 : index
    %c0_88 = arith.constant 0 : index
    %182 = vector.load %arg24[%c0_87, %c0_88] : memref<32x32xf32, #tpu.memory_space<vmem>>, vector<32x32xf32>
    %c0_89 = arith.constant 0 : index
    %c0_90 = arith.constant 0 : index
    %183 = vector.load %arg25[%c0_89, %c0_90] : memref<1x32xf32, #tpu.memory_space<vmem>>, vector<1x32xf32>
    %c0_91 = arith.constant 0 : index
    %c0_92 = arith.constant 0 : index
    %184 = vector.load %arg26[%c0_91, %c0_92] : memref<32x32xf32, #tpu.memory_space<vmem>>, vector<32x32xf32>
    %c0_93 = arith.constant 0 : index
    %c0_94 = arith.constant 0 : index
    %185 = vector.load %arg27[%c0_93, %c0_94] : memref<1x32xf32, #tpu.memory_space<vmem>>, vector<1x32xf32>
    %c0_95 = arith.constant 0 : index
    %c0_96 = arith.constant 0 : index
    %186 = vector.load %arg28[%c0_95, %c0_96] : memref<32x64xf32, #tpu.memory_space<vmem>>, vector<32x64xf32>
    %c0_97 = arith.constant 0 : index
    %c0_98 = arith.constant 0 : index
    %187 = vector.load %arg29[%c0_97, %c0_98] : memref<1x64xf32, #tpu.memory_space<vmem>>, vector<1x64xf32>
    %c0_99 = arith.constant 0 : index
    %c0_100 = arith.constant 0 : index
    %188 = vector.load %arg30[%c0_99, %c0_100] : memref<64x32xf32, #tpu.memory_space<vmem>>, vector<64x32xf32>
    %c0_101 = arith.constant 0 : index
    %c0_102 = arith.constant 0 : index
    %189 = vector.load %arg31[%c0_101, %c0_102] : memref<1x32xf32, #tpu.memory_space<vmem>>, vector<1x32xf32>
    %c0_103 = arith.constant 0 : index
    %c0_104 = arith.constant 0 : index
    %190 = vector.load %arg32[%c0_103, %c0_104] : memref<1x32xf32, #tpu.memory_space<vmem>>, vector<1x32xf32>
    %c0_105 = arith.constant 0 : index
    %c0_106 = arith.constant 0 : index
    %191 = vector.load %arg33[%c0_105, %c0_106] : memref<1x32xf32, #tpu.memory_space<vmem>>, vector<1x32xf32>
    %c0_107 = arith.constant 0 : index
    %c0_108 = arith.constant 0 : index
    %192 = vector.load %arg34[%c0_107, %c0_108] : memref<1x32xf32, #tpu.memory_space<vmem>>, vector<1x32xf32>
    %c0_109 = arith.constant 0 : index
    %c0_110 = arith.constant 0 : index
    %193 = vector.load %arg35[%c0_109, %c0_110] : memref<1x32xf32, #tpu.memory_space<vmem>>, vector<1x32xf32>
    %cst_111 = arith.constant dense<0.000000e+00> : vector<16x32xf32>
    %194 = tpu.matmul %177, %178, %cst_111 {dimension_numbers = #tpu.dot_dimension_numbers<[1], [0], [0], [1], [0, 0, 1, 1], [], []>} : vector<16x32xf32>, vector<32x32xf32>, vector<16x32xf32> -> vector<16x32xf32>
    %195 = vector.broadcast %179 : vector<1x32xf32> to vector<16x32xf32>
    %196 = arith.addf %194, %195 : vector<16x32xf32>
    %cst_112 = arith.constant dense<0.000000e+00> : vector<16x32xf32>
    %197 = tpu.matmul %177, %180, %cst_112 {dimension_numbers = #tpu.dot_dimension_numbers<[1], [0], [0], [1], [0, 0, 1, 1], [], []>} : vector<16x32xf32>, vector<32x32xf32>, vector<16x32xf32> -> vector<16x32xf32>
    %198 = vector.broadcast %181 : vector<1x32xf32> to vector<16x32xf32>
    %199 = arith.addf %197, %198 : vector<16x32xf32>
    %cst_113 = arith.constant dense<0.000000e+00> : vector<16x32xf32>
    %200 = tpu.matmul %177, %182, %cst_113 {dimension_numbers = #tpu.dot_dimension_numbers<[1], [0], [0], [1], [0, 0, 1, 1], [], []>} : vector<16x32xf32>, vector<32x32xf32>, vector<16x32xf32> -> vector<16x32xf32>
    %201 = vector.broadcast %183 : vector<1x32xf32> to vector<16x32xf32>
    %202 = arith.addf %200, %201 : vector<16x32xf32>
    %203 = vector.shape_cast %196 : vector<16x32xf32> to vector<2x8x32xf32>
    %204 = vector.shape_cast %199 : vector<16x32xf32> to vector<2x8x32xf32>
    %205 = vector.shape_cast %202 : vector<16x32xf32> to vector<2x8x32xf32>
    %206 = vector.extract_strided_slice %203 {offsets = [0, 0, 0], sizes = [2, 8, 8], strides = [1, 1, 1]} : vector<2x8x32xf32> to vector<2x8x8xf32>
    %207 = vector.extract_strided_slice %204 {offsets = [0, 0, 0], sizes = [2, 8, 8], strides = [1, 1, 1]} : vector<2x8x32xf32> to vector<2x8x8xf32>
    %208 = vector.extract_strided_slice %205 {offsets = [0, 0, 0], sizes = [2, 8, 8], strides = [1, 1, 1]} : vector<2x8x32xf32> to vector<2x8x8xf32>
    "tpu.trace_start"() <{level = 10 : i32, message = "bqd,bkd->bqk"}> : () -> ()
    %cst_114 = arith.constant dense<0.000000e+00> : vector<2x8x8xf32>
    %209 = tpu.matmul %206, %207, %cst_114 {dimension_numbers = #tpu.dot_dimension_numbers<[2], [2], [1], [1], [0, 0, 0, 1, 1, 1], [0], [0]>} : vector<2x8x8xf32>, vector<2x8x8xf32>, vector<2x8x8xf32> -> vector<2x8x8xf32>
    "tpu.trace_stop"() : () -> ()
    %cst_115 = arith.constant 0.353553385 : f32
    %210 = vector.broadcast %cst_115 : f32 to vector<2x8x8xf32>
    %211 = arith.mulf %209, %210 : vector<2x8x8xf32>
    %212 = vector.broadcast %18 : vector<2x1x8xf32> to vector<2x8x8xf32>
    %213 = arith.addf %211, %212 : vector<2x8x8xf32>
    %cst_116 = arith.constant dense<0xFF800000> : vector<2x8xf32>
    %214 = vector.multi_reduction <maximumf>, %213, %cst_116 [2] : vector<2x8x8xf32> to vector<2x8xf32>
    %215 = vector.shape_cast %214 : vector<2x8xf32> to vector<2x8x1xf32>
    %216 = vector.broadcast %215 : vector<2x8x1xf32> to vector<2x8x8xf32>
    %217 = arith.subf %213, %216 : vector<2x8x8xf32>
    %218 = math.exp %217 : vector<2x8x8xf32>
    %cst_117 = arith.constant dense<0.000000e+00> : vector<2x8xf32>
    %219 = vector.multi_reduction <add>, %218, %cst_117 [2] : vector<2x8x8xf32> to vector<2x8xf32>
    %220 = vector.shape_cast %219 : vector<2x8xf32> to vector<2x8x1xf32>
    %221 = tpu.reciprocal %220 : vector<2x8x1xf32> -> vector<2x8x1xf32>
    %222 = vector.broadcast %221 : vector<2x8x1xf32> to vector<2x8x8xf32>
    %223 = arith.mulf %218, %222 : vector<2x8x8xf32>
    "tpu.trace_start"() <{level = 10 : i32, message = "bqk,bkd->bqd"}> : () -> ()
    %cst_118 = arith.constant dense<0.000000e+00> : vector<2x8x8xf32>
    %224 = tpu.matmul %223, %208, %cst_118 {dimension_numbers = #tpu.dot_dimension_numbers<[2], [1], [1], [2], [0, 0, 0, 1, 1, 2], [0], [0]>} : vector<2x8x8xf32>, vector<2x8x8xf32>, vector<2x8x8xf32> -> vector<2x8x8xf32>
    "tpu.trace_stop"() : () -> ()
    %225 = vector.extract_strided_slice %203 {offsets = [0, 0, 8], sizes = [2, 8, 8], strides = [1, 1, 1]} : vector<2x8x32xf32> to vector<2x8x8xf32>
    %226 = vector.extract_strided_slice %204 {offsets = [0, 0, 8], sizes = [2, 8, 8], strides = [1, 1, 1]} : vector<2x8x32xf32> to vector<2x8x8xf32>
    %227 = vector.extract_strided_slice %205 {offsets = [0, 0, 8], sizes = [2, 8, 8], strides = [1, 1, 1]} : vector<2x8x32xf32> to vector<2x8x8xf32>
    "tpu.trace_start"() <{level = 10 : i32, message = "bqd,bkd->bqk"}> : () -> ()
    %cst_119 = arith.constant dense<0.000000e+00> : vector<2x8x8xf32>
    %228 = tpu.matmul %225, %226, %cst_119 {dimension_numbers = #tpu.dot_dimension_numbers<[2], [2], [1], [1], [0, 0, 0, 1, 1, 1], [0], [0]>} : vector<2x8x8xf32>, vector<2x8x8xf32>, vector<2x8x8xf32> -> vector<2x8x8xf32>
    "tpu.trace_stop"() : () -> ()
    %cst_120 = arith.constant 0.353553385 : f32
    %229 = vector.broadcast %cst_120 : f32 to vector<2x8x8xf32>
    %230 = arith.mulf %228, %229 : vector<2x8x8xf32>
    %231 = vector.broadcast %18 : vector<2x1x8xf32> to vector<2x8x8xf32>
    %232 = arith.addf %230, %231 : vector<2x8x8xf32>
    %cst_121 = arith.constant dense<0xFF800000> : vector<2x8xf32>
    %233 = vector.multi_reduction <maximumf>, %232, %cst_121 [2] : vector<2x8x8xf32> to vector<2x8xf32>
    %234 = vector.shape_cast %233 : vector<2x8xf32> to vector<2x8x1xf32>
    %235 = vector.broadcast %234 : vector<2x8x1xf32> to vector<2x8x8xf32>
    %236 = arith.subf %232, %235 : vector<2x8x8xf32>
    %237 = math.exp %236 : vector<2x8x8xf32>
    %cst_122 = arith.constant dense<0.000000e+00> : vector<2x8xf32>
    %238 = vector.multi_reduction <add>, %237, %cst_122 [2] : vector<2x8x8xf32> to vector<2x8xf32>
    %239 = vector.shape_cast %238 : vector<2x8xf32> to vector<2x8x1xf32>
    %240 = tpu.reciprocal %239 : vector<2x8x1xf32> -> vector<2x8x1xf32>
    %241 = vector.broadcast %240 : vector<2x8x1xf32> to vector<2x8x8xf32>
    %242 = arith.mulf %237, %241 : vector<2x8x8xf32>
    "tpu.trace_start"() <{level = 10 : i32, message = "bqk,bkd->bqd"}> : () -> ()
    %cst_123 = arith.constant dense<0.000000e+00> : vector<2x8x8xf32>
    %243 = tpu.matmul %242, %227, %cst_123 {dimension_numbers = #tpu.dot_dimension_numbers<[2], [1], [1], [2], [0, 0, 0, 1, 1, 2], [0], [0]>} : vector<2x8x8xf32>, vector<2x8x8xf32>, vector<2x8x8xf32> -> vector<2x8x8xf32>
    "tpu.trace_stop"() : () -> ()
    %244 = vector.extract_strided_slice %203 {offsets = [0, 0, 16], sizes = [2, 8, 8], strides = [1, 1, 1]} : vector<2x8x32xf32> to vector<2x8x8xf32>
    %245 = vector.extract_strided_slice %204 {offsets = [0, 0, 16], sizes = [2, 8, 8], strides = [1, 1, 1]} : vector<2x8x32xf32> to vector<2x8x8xf32>
    %246 = vector.extract_strided_slice %205 {offsets = [0, 0, 16], sizes = [2, 8, 8], strides = [1, 1, 1]} : vector<2x8x32xf32> to vector<2x8x8xf32>
    "tpu.trace_start"() <{level = 10 : i32, message = "bqd,bkd->bqk"}> : () -> ()
    %cst_124 = arith.constant dense<0.000000e+00> : vector<2x8x8xf32>
    %247 = tpu.matmul %244, %245, %cst_124 {dimension_numbers = #tpu.dot_dimension_numbers<[2], [2], [1], [1], [0, 0, 0, 1, 1, 1], [0], [0]>} : vector<2x8x8xf32>, vector<2x8x8xf32>, vector<2x8x8xf32> -> vector<2x8x8xf32>
    "tpu.trace_stop"() : () -> ()
    %cst_125 = arith.constant 0.353553385 : f32
    %248 = vector.broadcast %cst_125 : f32 to vector<2x8x8xf32>
    %249 = arith.mulf %247, %248 : vector<2x8x8xf32>
    %250 = vector.broadcast %18 : vector<2x1x8xf32> to vector<2x8x8xf32>
    %251 = arith.addf %249, %250 : vector<2x8x8xf32>
    %cst_126 = arith.constant dense<0xFF800000> : vector<2x8xf32>
    %252 = vector.multi_reduction <maximumf>, %251, %cst_126 [2] : vector<2x8x8xf32> to vector<2x8xf32>
    %253 = vector.shape_cast %252 : vector<2x8xf32> to vector<2x8x1xf32>
    %254 = vector.broadcast %253 : vector<2x8x1xf32> to vector<2x8x8xf32>
    %255 = arith.subf %251, %254 : vector<2x8x8xf32>
    %256 = math.exp %255 : vector<2x8x8xf32>
    %cst_127 = arith.constant dense<0.000000e+00> : vector<2x8xf32>
    %257 = vector.multi_reduction <add>, %256, %cst_127 [2] : vector<2x8x8xf32> to vector<2x8xf32>
    %258 = vector.shape_cast %257 : vector<2x8xf32> to vector<2x8x1xf32>
    %259 = tpu.reciprocal %258 : vector<2x8x1xf32> -> vector<2x8x1xf32>
    %260 = vector.broadcast %259 : vector<2x8x1xf32> to vector<2x8x8xf32>
    %261 = arith.mulf %256, %260 : vector<2x8x8xf32>
    "tpu.trace_start"() <{level = 10 : i32, message = "bqk,bkd->bqd"}> : () -> ()
    %cst_128 = arith.constant dense<0.000000e+00> : vector<2x8x8xf32>
    %262 = tpu.matmul %261, %246, %cst_128 {dimension_numbers = #tpu.dot_dimension_numbers<[2], [1], [1], [2], [0, 0, 0, 1, 1, 2], [0], [0]>} : vector<2x8x8xf32>, vector<2x8x8xf32>, vector<2x8x8xf32> -> vector<2x8x8xf32>
    "tpu.trace_stop"() : () -> ()
    %263 = vector.extract_strided_slice %203 {offsets = [0, 0, 24], sizes = [2, 8, 8], strides = [1, 1, 1]} : vector<2x8x32xf32> to vector<2x8x8xf32>
    %264 = vector.extract_strided_slice %204 {offsets = [0, 0, 24], sizes = [2, 8, 8], strides = [1, 1, 1]} : vector<2x8x32xf32> to vector<2x8x8xf32>
    %265 = vector.extract_strided_slice %205 {offsets = [0, 0, 24], sizes = [2, 8, 8], strides = [1, 1, 1]} : vector<2x8x32xf32> to vector<2x8x8xf32>
    "tpu.trace_start"() <{level = 10 : i32, message = "bqd,bkd->bqk"}> : () -> ()
    %cst_129 = arith.constant dense<0.000000e+00> : vector<2x8x8xf32>
    %266 = tpu.matmul %263, %264, %cst_129 {dimension_numbers = #tpu.dot_dimension_numbers<[2], [2], [1], [1], [0, 0, 0, 1, 1, 1], [0], [0]>} : vector<2x8x8xf32>, vector<2x8x8xf32>, vector<2x8x8xf32> -> vector<2x8x8xf32>
    "tpu.trace_stop"() : () -> ()
    %cst_130 = arith.constant 0.353553385 : f32
    %267 = vector.broadcast %cst_130 : f32 to vector<2x8x8xf32>
    %268 = arith.mulf %266, %267 : vector<2x8x8xf32>
    %269 = vector.broadcast %18 : vector<2x1x8xf32> to vector<2x8x8xf32>
    %270 = arith.addf %268, %269 : vector<2x8x8xf32>
    %cst_131 = arith.constant dense<0xFF800000> : vector<2x8xf32>
    %271 = vector.multi_reduction <maximumf>, %270, %cst_131 [2] : vector<2x8x8xf32> to vector<2x8xf32>
    %272 = vector.shape_cast %271 : vector<2x8xf32> to vector<2x8x1xf32>
    %273 = vector.broadcast %272 : vector<2x8x1xf32> to vector<2x8x8xf32>
    %274 = arith.subf %270, %273 : vector<2x8x8xf32>
    %275 = math.exp %274 : vector<2x8x8xf32>
    %cst_132 = arith.constant dense<0.000000e+00> : vector<2x8xf32>
    %276 = vector.multi_reduction <add>, %275, %cst_132 [2] : vector<2x8x8xf32> to vector<2x8xf32>
    %277 = vector.shape_cast %276 : vector<2x8xf32> to vector<2x8x1xf32>
    %278 = tpu.reciprocal %277 : vector<2x8x1xf32> -> vector<2x8x1xf32>
    %279 = vector.broadcast %278 : vector<2x8x1xf32> to vector<2x8x8xf32>
    %280 = arith.mulf %275, %279 : vector<2x8x8xf32>
    "tpu.trace_start"() <{level = 10 : i32, message = "bqk,bkd->bqd"}> : () -> ()
    %cst_133 = arith.constant dense<0.000000e+00> : vector<2x8x8xf32>
    %281 = tpu.matmul %280, %265, %cst_133 {dimension_numbers = #tpu.dot_dimension_numbers<[2], [1], [1], [2], [0, 0, 0, 1, 1, 2], [0], [0]>} : vector<2x8x8xf32>, vector<2x8x8xf32>, vector<2x8x8xf32> -> vector<2x8x8xf32>
    "tpu.trace_stop"() : () -> ()
    %282 = tpu.concatenate %224, %243, %262, %281 in 2 : vector<2x8x8xf32>, vector<2x8x8xf32>, vector<2x8x8xf32>, vector<2x8x8xf32> -> vector<2x8x32xf32>
    %283 = vector.shape_cast %282 : vector<2x8x32xf32> to vector<16x32xf32>
    %cst_134 = arith.constant dense<0.000000e+00> : vector<16x32xf32>
    %284 = tpu.matmul %283, %184, %cst_134 {dimension_numbers = #tpu.dot_dimension_numbers<[1], [0], [0], [1], [0, 0, 1, 1], [], []>} : vector<16x32xf32>, vector<32x32xf32>, vector<16x32xf32> -> vector<16x32xf32>
    %285 = vector.broadcast %185 : vector<1x32xf32> to vector<16x32xf32>
    %286 = arith.addf %284, %285 : vector<16x32xf32>
    %287 = arith.addf %177, %286 : vector<16x32xf32>
    %cst_135 = arith.constant dense<0.000000e+00> : vector<16xf32>
    %288 = vector.multi_reduction <add>, %287, %cst_135 [1] : vector<16x32xf32> to vector<16xf32>
    %289 = vector.shape_cast %288 : vector<16xf32> to vector<16x1xf32>
    %cst_136 = arith.constant 3.200000e+01 : f32
    %290 = vector.broadcast %cst_136 : f32 to vector<16x1xf32>
    %291 = arith.divf %289, %290 : vector<16x1xf32>
    %292 = vector.broadcast %291 : vector<16x1xf32> to vector<16x32xf32>
    %293 = arith.subf %287, %292 : vector<16x32xf32>
    %294 = arith.mulf %293, %293 : vector<16x32xf32>
    %cst_137 = arith.constant dense<0.000000e+00> : vector<16xf32>
    %295 = vector.multi_reduction <add>, %294, %cst_137 [1] : vector<16x32xf32> to vector<16xf32>
    %296 = vector.shape_cast %295 : vector<16xf32> to vector<16x1xf32>
    %cst_138 = arith.constant 3.200000e+01 : f32
    %297 = vector.broadcast %cst_138 : f32 to vector<16x1xf32>
    %298 = arith.divf %296, %297 : vector<16x1xf32>
    %cst_139 = arith.constant 9.99999997E-7 : f32
    %299 = vector.broadcast %cst_139 : f32 to vector<16x1xf32>
    %300 = arith.addf %298, %299 : vector<16x1xf32>
    %301 = math.rsqrt %300 : vector<16x1xf32>
    %302 = vector.broadcast %301 : vector<16x1xf32> to vector<16x32xf32>
    %303 = arith.mulf %293, %302 : vector<16x32xf32>
    %304 = vector.broadcast %190 : vector<1x32xf32> to vector<16x32xf32>
    %305 = arith.mulf %303, %304 : vector<16x32xf32>
    %306 = vector.broadcast %191 : vector<1x32xf32> to vector<16x32xf32>
    %307 = arith.addf %305, %306 : vector<16x32xf32>
    %cst_140 = arith.constant dense<0.000000e+00> : vector<16x64xf32>
    %308 = tpu.matmul %307, %186, %cst_140 {dimension_numbers = #tpu.dot_dimension_numbers<[1], [0], [0], [1], [0, 0, 1, 1], [], []>} : vector<16x32xf32>, vector<32x64xf32>, vector<16x64xf32> -> vector<16x64xf32>
    %309 = vector.broadcast %187 : vector<1x64xf32> to vector<16x64xf32>
    %310 = arith.addf %308, %309 : vector<16x64xf32>
    %cst_141 = arith.constant 0.000000e+00 : f32
    %311 = vector.broadcast %cst_141 : f32 to vector<16x64xf32>
    %312 = arith.maximumf %310, %311 : vector<16x64xf32>
    %cst_142 = arith.constant dense<0.000000e+00> : vector<16x32xf32>
    %313 = tpu.matmul %312, %188, %cst_142 {dimension_numbers = #tpu.dot_dimension_numbers<[1], [0], [0], [1], [0, 0, 1, 1], [], []>} : vector<16x64xf32>, vector<64x32xf32>, vector<16x32xf32> -> vector<16x32xf32>
    %314 = vector.broadcast %189 : vector<1x32xf32> to vector<16x32xf32>
    %315 = arith.addf %313, %314 : vector<16x32xf32>
    %316 = arith.addf %307, %315 : vector<16x32xf32>
    %cst_143 = arith.constant dense<0.000000e+00> : vector<16xf32>
    %317 = vector.multi_reduction <add>, %316, %cst_143 [1] : vector<16x32xf32> to vector<16xf32>
    %318 = vector.shape_cast %317 : vector<16xf32> to vector<16x1xf32>
    %cst_144 = arith.constant 3.200000e+01 : f32
    %319 = vector.broadcast %cst_144 : f32 to vector<16x1xf32>
    %320 = arith.divf %318, %319 : vector<16x1xf32>
    %321 = vector.broadcast %320 : vector<16x1xf32> to vector<16x32xf32>
    %322 = arith.subf %316, %321 : vector<16x32xf32>
    %323 = arith.mulf %322, %322 : vector<16x32xf32>
    %cst_145 = arith.constant dense<0.000000e+00> : vector<16xf32>
    %324 = vector.multi_reduction <add>, %323, %cst_145 [1] : vector<16x32xf32> to vector<16xf32>
    %325 = vector.shape_cast %324 : vector<16xf32> to vector<16x1xf32>
    %cst_146 = arith.constant 3.200000e+01 : f32
    %326 = vector.broadcast %cst_146 : f32 to vector<16x1xf32>
    %327 = arith.divf %325, %326 : vector<16x1xf32>
    %cst_147 = arith.constant 9.99999997E-7 : f32
    %328 = vector.broadcast %cst_147 : f32 to vector<16x1xf32>
    %329 = arith.addf %327, %328 : vector<16x1xf32>
    %330 = math.rsqrt %329 : vector<16x1xf32>
    %331 = vector.broadcast %330 : vector<16x1xf32> to vector<16x32xf32>
    %332 = arith.mulf %322, %331 : vector<16x32xf32>
    %333 = vector.broadcast %192 : vector<1x32xf32> to vector<16x32xf32>
    %334 = arith.mulf %332, %333 : vector<16x32xf32>
    %335 = vector.broadcast %193 : vector<1x32xf32> to vector<16x32xf32>
    %336 = arith.addf %334, %335 : vector<16x32xf32>
    %c0_148 = arith.constant 0 : index
    %c0_149 = arith.constant 0 : index
    %337 = vector.load %arg36[%c0_148, %c0_149] : memref<32x16xf32, #tpu.memory_space<vmem>>, vector<32x16xf32>
    %cst_150 = arith.constant dense<0.000000e+00> : vector<16x16xf32>
    %338 = tpu.matmul %336, %337, %cst_150 {dimension_numbers = #tpu.dot_dimension_numbers<[1], [0], [0], [1], [0, 0, 1, 1], [], []>} : vector<16x32xf32>, vector<32x16xf32>, vector<16x16xf32> -> vector<16x16xf32>
    %c0_151 = arith.constant 0 : index
    %c0_152 = arith.constant 0 : index
    %339 = vector.load %arg37[%c0_151, %c0_152] : memref<1x16xf32, #tpu.memory_space<vmem>>, vector<1x16xf32>
    %340 = vector.broadcast %339 : vector<1x16xf32> to vector<16x16xf32>
    %341 = arith.addf %338, %340 : vector<16x16xf32>
    %cst_153 = arith.constant dense<0xFF800000> : vector<16xf32>
    %342 = vector.multi_reduction <maximumf>, %341, %cst_153 [1] : vector<16x16xf32> to vector<16xf32>
    %343 = vector.shape_cast %342 : vector<16xf32> to vector<16x1xf32>
    %344 = vector.broadcast %343 : vector<16x1xf32> to vector<16x16xf32>
    %345 = arith.subf %341, %344 : vector<16x16xf32>
    %346 = math.exp %345 : vector<16x16xf32>
    %cst_154 = arith.constant dense<0.000000e+00> : vector<16xf32>
    %347 = vector.multi_reduction <add>, %346, %cst_154 [1] : vector<16x16xf32> to vector<16xf32>
    %348 = vector.shape_cast %347 : vector<16xf32> to vector<16x1xf32>
    %349 = math.log %348 : vector<16x1xf32>
    %350 = vector.broadcast %349 : vector<16x1xf32> to vector<16x16xf32>
    %351 = arith.subf %345, %350 : vector<16x16xf32>
    %c0_155 = arith.constant 0 : index
    %c0_156 = arith.constant 0 : index
    %352 = vector.load %arg38[%c0_155, %c0_156] : memref<16x16xf32, #tpu.memory_space<vmem>>, vector<16x16xf32>
    tpu.vector_store %arg38[%c0_155, %c0_156], %351 {strides = array<i32>} : memref<16x16xf32, #tpu.memory_space<vmem>>, vector<16x16xf32>,
    return
  }
}

</mosaic_0001>

<llo_original>
// kernel: narrow_transformer_forward.1
$region0: #{narrow_transformer_forward.1}
  #allocation0 [shape = 'u32[]', space=smem, size = 0x4, offset = 0x4, fixed_abs, tag = 'smem constant byte address 0x4 - core index']
  #allocation1 [shape = 'u32[144,128]{1,0:T(1,128)}', space=vmem, size = 0x12000, scoped, tag = 'internal scratch']
  %s0 = inlined_call_operand.smem [shape: u32[39], index: -1, kind: input, shape index: {}]
  %s1 = sld [smem:[%s0]]
  %s2 = scalar_lea.smem %s0, 1
  %s3 = sld [smem:[%s2]]
  %s4 = scalar_lea.smem %s0, 2
  %s5 = sld [smem:[%s4]]
  %s6 = scalar_lea.smem %s0, 3
  %s7 = sld [smem:[%s6]]
  %s8 = scalar_lea.smem %s0, 4
  %s9 = sld [smem:[%s8]]
  %s10 = scalar_lea.smem %s0, 5
  %s11 = sld [smem:[%s10]]
  %s12 = scalar_lea.smem %s0, 6
  %s13 = sld [smem:[%s12]]
  %s14 = scalar_lea.smem %s0, 7
  %s15 = sld [smem:[%s14]]
  %s16 = scalar_lea.smem %s0, 8
  %s17 = sld [smem:[%s16]]
  %s18 = scalar_lea.smem %s0, 9
  %s19 = sld [smem:[%s18]]
  %s20 = scalar_lea.smem %s0, 10
  %s21 = sld [smem:[%s20]]
  %s22 = scalar_lea.smem %s0, 11
  %s23 = sld [smem:[%s22]]
  %s24 = scalar_lea.smem %s0, 12
  %s25 = sld [smem:[%s24]]
  %s26 = scalar_lea.smem %s0, 13
  %s27 = sld [smem:[%s26]]
  %s28 = scalar_lea.smem %s0, 14
  %s29 = sld [smem:[%s28]]
  %s30 = scalar_lea.smem %s0, 15
  %s31 = sld [smem:[%s30]]
  %s32 = scalar_lea.smem %s0, 16
  %s33 = sld [smem:[%s32]]
  %s34 = scalar_lea.smem %s0, 17
  %s35 = sld [smem:[%s34]]
  %s36 = scalar_lea.smem %s0, 18
  %s37 = sld [smem:[%s36]]
  %s38 = scalar_lea.smem %s0, 19
  %s39 = sld [smem:[%s38]]
  %s40 = scalar_lea.smem %s0, 20
  %s41 = sld [smem:[%s40]]
  %s42 = scalar_lea.smem %s0, 21
  %s43 = sld [smem:[%s42]]
  %s44 = scalar_lea.smem %s0, 22
  %s45 = sld [smem:[%s44]]
  %s46 = scalar_lea.smem %s0, 23
  %s47 = sld [smem:[%s46]]
  %s48 = scalar_lea.smem %s0, 24
  %s49 = sld [smem:[%s48]]
  %s50 = scalar_lea.smem %s0, 25
  %s51 = sld [smem:[%s50]]
  %s52 = scalar_lea.smem %s0, 26
  %s53 = sld [smem:[%s52]]
  %s54 = scalar_lea.smem %s0, 27
  %s55 = sld [smem:[%s54]]
  %s56 = scalar_lea.smem %s0, 28
  %s57 = sld [smem:[%s56]]
  %s58 = scalar_lea.smem %s0, 29
  %s59 = sld [smem:[%s58]]
  %s60 = scalar_lea.smem %s0, 30
  %s61 = sld [smem:[%s60]]
  %s62 = scalar_lea.smem %s0, 31
  %s63 = sld [smem:[%s62]]
  %s64 = scalar_lea.smem %s0, 32
  %s65 = sld [smem:[%s64]]
  %s66 = scalar_lea.smem %s0, 33
  %s67 = sld [smem:[%s66]]
  %s68 = scalar_lea.smem %s0, 34
  %s69 = sld [smem:[%s68]]
  %s70 = scalar_lea.smem %s0, 35
  %s71 = sld [smem:[%s70]]
  %s72 = scalar_lea.smem %s0, 36
  %s73 = sld [smem:[%s72]]
  %s74 = scalar_lea.smem %s0, 37
  %s75 = sld [smem:[%s74]]
  %s76 = scalar_lea.smem %s0, 38
  %s77 = sld [smem:[%s76]]
  %s78 = sld [smem:[#allocation0]]
  $region262: #{narrow_transformer_forward.1} parent=0
    _
  %s80 = ssub.s32 1, %s78
  %s81 = scalar_select 0, %s80, %s78
  $region1: #{narrow_transformer_forward.1} parent=0
    #allocation2 [shape = 'u8[4096]{0}', space=vmem, size = 0x1000, scoped, tag = 'input window, operand 2, single buffered']
    #allocation3 [shape = 's32[1]{0}', space=sflag, size = 0x4, scoped, tag = 'scoped memory for narrow_transformer_forward.1']
    #allocation4 [shape = 's32[1]{0}', space=sflag, size = 0x4, scoped, tag = 'scoped memory for narrow_transformer_forward.1']
    #allocation5 [shape = 'u8[8192]{0}', space=vmem, size = 0x2000, scoped, tag = 'input window, operand 3, single buffered']
    #allocation6 [shape = 's32[1]{0}', space=sflag, size = 0x4, scoped, tag = 'scoped memory for narrow_transformer_forward.1']
    #allocation7 [shape = 'u8[512]{0}', space=vmem, size = 0x400, scoped, tag = 'input window, operand 5, single buffered']
    #allocation8 [shape = 'u8[512]{0}', space=vmem, size = 0x400, scoped, tag = 'input window, operand 7, single buffered']
    #allocation9 [shape = 's32[1]{0}', space=sflag, size = 0x4, scoped, tag = 'scoped memory for narrow_transformer_forward.1']
    #allocation10 [shape = 'u8[512]{0}', space=vmem, size = 0x400, scoped, tag = 'input window, operand 9, single buffered']
    #allocation11 [shape = 'u8[512]{0}', space=vmem, size = 0x400, scoped, tag = 'input window, operand 11, single buffered']
    #allocation12 [shape = 's32[1]{0}', space=sflag, size = 0x4, scoped, tag = 'scoped memory for narrow_transformer_forward.1']
    #allocation13 [shape = 'u8[512]{0}', space=vmem, size = 0x400, scoped, tag = 'input window, operand 13, single buffered']
    #allocation14 [shape = 'u8[512]{0}', space=vmem, size = 0x400, scoped, tag = 'input window, operand 15, single buffered']
    #allocation15 [shape = 's32[1]{0}', space=sflag, size = 0x4, scoped, tag = 'scoped memory for narrow_transformer_forward.1']
    #allocation16 [shape = 'u8[512]{0}', space=vmem, size = 0x400, scoped, tag = 'input window, operand 16, single buffered']
    #allocation17 [shape = 'u8[512]{0}', space=vmem, size = 0x400, scoped, tag = 'input window, operand 17, single buffered']
    #allocation18 [shape = 's32[1]{0}', space=sflag, size = 0x4, scoped, tag = 'scoped memory for narrow_transformer_forward.1']
    #allocation19 [shape = 'u8[512]{0}', space=vmem, size = 0x400, scoped, tag = 'input window, operand 18, single buffered']
    #allocation20 [shape = 'u8[512]{0}', space=vmem, size = 0x400, scoped, tag = 'input window, operand 19, single buffered']
    #allocation21 [shape = 's32[1]{0}', space=sflag, size = 0x4, scoped, tag = 'scoped memory for narrow_transformer_forward.1']
    #allocation22 [shape = 'u8[512]{0}', space=vmem, size = 0x400, scoped, tag = 'input window, operand 21, single buffered']
    #allocation23 [shape = 'u8[512]{0}', space=vmem, size = 0x400, scoped, tag = 'input window, operand 23, single buffered']
    #allocation24 [shape = 's32[1]{0}', space=sflag, size = 0x4, scoped, tag = 'scoped memory for narrow_transformer_forward.1']
    #allocation25 [shape = 'u8[512]{0}', space=vmem, size = 0x400, scoped, tag = 'input window, operand 25, single buffered']
    #allocation26 [shape = 'u8[16384]{0}', space=vmem, size = 0x4000, scoped, tag = 'input window, operand 26, single buffered']
    #allocation27 [shape = 's32[1]{0}', space=sflag, size = 0x4, scoped, tag = 'scoped memory for narrow_transformer_forward.1']
    #allocation28 [shape = 'u8[512]{0}', space=vmem, size = 0x400, scoped, tag = 'input window, operand 27, single buffered']
    #allocation29 [shape = 'u8[16384]{0}', space=vmem, size = 0x4000, scoped, tag = 'input window, operand 28, single buffered']
    #allocation30 [shape = 's32[1]{0}', space=sflag, size = 0x4, scoped, tag = 'scoped memory for narrow_transformer_forward.1']
    #allocation31 [shape = 'u8[512]{0}', space=vmem, size = 0x400, scoped, tag = 'input window, operand 29, single buffered']
    #allocation32 [shape = 'u8[512]{0}', space=vmem, size = 0x400, scoped, tag = 'input window, operand 31, single buffered']
    #allocation33 [shape = 's32[1]{0}', space=sflag, size = 0x4, scoped, tag = 'scoped memory for narrow_transformer_forward.1']
    #allocation34 [shape = 'u8[512]{0}', space=vmem, size = 0x400, scoped, tag = 'input window, operand 32, single buffered']
    #allocation35 [shape = 'u8[512]{0}', space=vmem, size = 0x400, scoped, tag = 'input window, operand 33, single buffered']
    #allocation36 [shape = 's32[1]{0}', space=sflag, size = 0x4, scoped, tag = 'scoped memory for narrow_transformer_forward.1']
    #allocation37 [shape = 'u8[512]{0}', space=vmem, size = 0x400, scoped, tag = 'input window, operand 34, single buffered']
    #allocation38 [shape = 'u8[512]{0}', space=vmem, size = 0x400, scoped, tag = 'input window, operand 35, single buffered']
    #allocation39 [shape = 's32[1]{0}', space=sflag, size = 0x4, scoped, tag = 'scoped memory for narrow_transformer_forward.1']
    #allocation40 [shape = 'u8[512]{0}', space=vmem, size = 0x400, scoped, tag = 'input window, operand 37, single buffered']
    #allocation41 [shape = 'u8[8192]{0}', space=vmem, size = 0x2000, scoped, tag = 'output window, operand 0, single buffered']
    %82 = vsyncpa [#allocation3], 0
    %83 = vsyncpa [#allocation6], 0
    %84 = vsyncpa [#allocation9], 0
    %85 = vsyncpa [#allocation12], 0
    %86 = vsyncpa [#allocation15], 0
    %87 = vsyncpa [#allocation18], 0
    %88 = vsyncpa [#allocation21], 0
    %89 = vsyncpa [#allocation24], 0
    %90 = vsyncpa [#allocation27], 0
    %91 = vsyncpa [#allocation30], 0
    %92 = vsyncpa [#allocation33], 0
    %93 = vsyncpa [#allocation36], 0
    %94 = vsyncpa [#allocation39], 0
    %95 = vsyncpa [#allocation4], 0
    // Predicated region
    $region2: #{narrow_transformer_forward.1} parent=1 // pred_check
      _
    $region3: #{narrow_transformer_forward.1} parent=1 // pred_check_branch
      %97 = sbr.rel (0) target = $region5
    $region4: #{narrow_transformer_forward.1} parent=1 // pred_region
      _
    $region5: #{narrow_transformer_forward.1} parent=1 // pred_fallthru
      _
    // Predicated region
    $region6: #{narrow_transformer_forward.1} parent=1 // pred_check
      _
    $region7: #{narrow_transformer_forward.1} parent=1 // pred_check_branch
      %99 = sbr.rel (0) target = $region9
    $region8: #{narrow_transformer_forward.1} parent=1 // pred_region
      _
    $region9: #{narrow_transformer_forward.1} parent=1 // pred_fallthru
      _
    // Predicated region
    $region10: #{narrow_transformer_forward.1} parent=1 // pred_check
      _
    $region11: #{narrow_transformer_forward.1} parent=1 // pred_check_branch
      %101 = sbr.rel (0) target = $region13
    $region12: #{narrow_transformer_forward.1} parent=1 // pred_region
      %s103 = ssub.s32 128, 128
      %104 = vsyncadd [#allocation3], %s103
      %s106 = sshll.u32 [#allocation2], 4
      %s107 = int_to_ptr.vmem [resolvable:$true] %s106
      %109 = dma.hbm_to_vmem [thread:$0]  %s5, 128, %s107, [#allocation3]
    $region13: #{narrow_transformer_forward.1} parent=1 // pred_fallthru
      _
    // Predicated region
    $region14: #{narrow_transformer_forward.1} parent=1 // pred_check
      _
    $region15: #{narrow_transformer_forward.1} parent=1 // pred_check_branch
      %111 = sbr.rel (0) target = $region17
    $region16: #{narrow_transformer_forward.1} parent=1 // pred_region
      %s113 = ssub.s32 256, 256
      %114 = vsyncadd [#allocation6], %s113
      %s115 = sshll.u32 [#allocation5], 4
      %s116 = int_to_ptr.vmem [resolvable:$true] %s115
      %121 = dma.hbm_to_vmem [thread:$0]  %s7, 256, %s116, [#allocation6], 128, 128, 8
    $region17: #{narrow_transformer_forward.1} parent=1 // pred_fallthru
      _
    // Predicated region
    $region18: #{narrow_transformer_forward.1} parent=1 // pred_check
      _
    $region19: #{narrow_transformer_forward.1} parent=1 // pred_check_branch
      %123 = sbr.rel (0) target = $region21
    $region20: #{narrow_transformer_forward.1} parent=1 // pred_region
      _
    $region21: #{narrow_transformer_forward.1} parent=1 // pred_fallthru
      _
    // Predicated region
    $region22: #{narrow_transformer_forward.1} parent=1 // pred_check
      _
    $region23: #{narrow_transformer_forward.1} parent=1 // pred_check_branch
      %125 = sbr.rel (0) target = $region25
    $region24: #{narrow_transformer_forward.1} parent=1 // pred_region
      %s127 = ssub.s32 16, 16
      %128 = vsyncadd [#allocation6], %s127
      %s130 = sshll.u32 [#allocation7], 4
      %s131 = int_to_ptr.vmem [resolvable:$true] %s130
      %133 = dma.hbm_to_vmem [thread:$0]  %s11, 16, %s131, [#allocation6]
    $region25: #{narrow_transformer_forward.1} parent=1 // pred_fallthru
      _
    // Predicated region
    $region26: #{narrow_transformer_forward.1} parent=1 // pred_check
      _
    $region27: #{narrow_transformer_forward.1} parent=1 // pred_check_branch
      %135 = sbr.rel (0) target = $region29
    $region28: #{narrow_transformer_forward.1} parent=1 // pred_region
      _
    $region29: #{narrow_transformer_forward.1} parent=1 // pred_fallthru
      _
    // Predicated region
    $region30: #{narrow_transformer_forward.1} parent=1 // pred_check
      _
    $region31: #{narrow_transformer_forward.1} parent=1 // pred_check_branch
      %137 = sbr.rel (0) target = $region33
    $region32: #{narrow_transformer_forward.1} parent=1 // pred_region
      %s139 = ssub.s32 16, 16
      %140 = vsyncadd [#allocation9], %s139
      %s142 = sshll.u32 [#allocation8], 4
      %s143 = int_to_ptr.vmem [resolvable:$true] %s142
      %145 = dma.hbm_to_vmem [thread:$0]  %s15, 16, %s143, [#allocation9]
    $region33: #{narrow_transformer_forward.1} parent=1 // pred_fallthru
      _
    // Predicated region
    $region34: #{narrow_transformer_forward.1} parent=1 // pred_check
      _
    $region35: #{narrow_transformer_forward.1} parent=1 // pred_check_branch
      %147 = sbr.rel (0) target = $region37
    $region36: #{narrow_transformer_forward.1} parent=1 // pred_region
      _
    $region37: #{narrow_transformer_forward.1} parent=1 // pred_fallthru
      _
    // Predicated region
    $region38: #{narrow_transformer_forward.1} parent=1 // pred_check
      _
    $region39: #{narrow_transformer_forward.1} parent=1 // pred_check_branch
      %149 = sbr.rel (0) target = $region41
    $region40: #{narrow_transformer_forward.1} parent=1 // pred_region
      %s151 = ssub.s32 16, 16
      %152 = vsyncadd [#allocation9], %s151
      %s154 = sshll.u32 [#allocation10], 4
      %s155 = int_to_ptr.vmem [resolvable:$true] %s154
      %157 = dma.hbm_to_vmem [thread:$0]  %s19, 16, %s155, [#allocation9]
    $region41: #{narrow_transformer_forward.1} parent=1 // pred_fallthru
      _
    // Predicated region
    $region42: #{narrow_transformer_forward.1} parent=1 // pred_check
      _
    $region43: #{narrow_transformer_forward.1} parent=1 // pred_check_branch
      %159 = sbr.rel (0) target = $region45
    $region44: #{narrow_transformer_forward.1} parent=1 // pred_region
      _
    $region45: #{narrow_transformer_forward.1} parent=1 // pred_fallthru
      _
    // Predicated region
    $region46: #{narrow_transformer_forward.1} parent=1 // pred_check
      _
    $region47: #{narrow_transformer_forward.1} parent=1 // pred_check_branch
      %161 = sbr.rel (0) target = $region49
    $region48: #{narrow_transformer_forward.1} parent=1 // pred_region
      %s163 = ssub.s32 16, 16
      %164 = vsyncadd [#allocation12], %s163
      %s166 = sshll.u32 [#allocation11], 4
      %s167 = int_to_ptr.vmem [resolvable:$true] %s166
      %169 = dma.hbm_to_vmem [thread:$0]  %s23, 16, %s167, [#allocation12]
    $region49: #{narrow_transformer_forward.1} parent=1 // pred_fallthru
      _
    // Predicated region
    $region50: #{narrow_transformer_forward.1} parent=1 // pred_check
      _
    $region51: #{narrow_transformer_forward.1} parent=1 // pred_check_branch
      %171 = sbr.rel (0) target = $region53
    $region52: #{narrow_transformer_forward.1} parent=1 // pred_region
      _
    $region53: #{narrow_transformer_forward.1} parent=1 // pred_fallthru
      _
    // Predicated region
    $region54: #{narrow_transformer_forward.1} parent=1 // pred_check
      _
    $region55: #{narrow_transformer_forward.1} parent=1 // pred_check_branch
      %173 = sbr.rel (0) target = $region57
    $region56: #{narrow_transformer_forward.1} parent=1 // pred_region
      %s175 = ssub.s32 16, 16
      %176 = vsyncadd [#allocation12], %s175
      %s178 = sshll.u32 [#allocation13], 4
      %s179 = int_to_ptr.vmem [resolvable:$true] %s178
      %181 = dma.hbm_to_vmem [thread:$0]  %s27, 16, %s179, [#allocation12]
    $region57: #{narrow_transformer_forward.1} parent=1 // pred_fallthru
      _
    // Predicated region
    $region58: #{narrow_transformer_forward.1} parent=1 // pred_check
      _
    $region59: #{narrow_transformer_forward.1} parent=1 // pred_check_branch
      %183 = sbr.rel (0) target = $region61
    $region60: #{narrow_transformer_forward.1} parent=1 // pred_region
      _
    $region61: #{narrow_transformer_forward.1} parent=1 // pred_fallthru
      _
    // Predicated region
    $region62: #{narrow_transformer_forward.1} parent=1 // pred_check
      _
    $region63: #{narrow_transformer_forward.1} parent=1 // pred_check_branch
      %185 = sbr.rel (0) target = $region65
    $region64: #{narrow_transformer_forward.1} parent=1 // pred_region
      %s187 = ssub.s32 16, 16
      %188 = vsyncadd [#allocation15], %s187
      %s190 = sshll.u32 [#allocation14], 4
      %s191 = int_to_ptr.vmem [resolvable:$true] %s190
      %193 = dma.hbm_to_vmem [thread:$0]  %s31, 16, %s191, [#allocation15]
    $region65: #{narrow_transformer_forward.1} parent=1 // pred_fallthru
      _
    // Predicated region
    $region66: #{narrow_transformer_forward.1} parent=1 // pred_check
      _
    $region67: #{narrow_transformer_forward.1} parent=1 // pred_check_branch
      %195 = sbr.rel (0) target = $region69
    $region68: #{narrow_transformer_forward.1} parent=1 // pred_region
      %s197 = ssub.s32 16, 16
      %198 = vsyncadd [#allocation15], %s197
      %s200 = sshll.u32 [#allocation16], 4
      %s201 = int_to_ptr.vmem [resolvable:$true] %s200
      %203 = dma.hbm_to_vmem [thread:$0]  %s33, 16, %s201, [#allocation15]
    $region69: #{narrow_transformer_forward.1} parent=1 // pred_fallthru
      _
    // Predicated region
    $region70: #{narrow_transformer_forward.1} parent=1 // pred_check
      _
    $region71: #{narrow_transformer_forward.1} parent=1 // pred_check_branch
      %205 = sbr.rel (0) target = $region73
    $region72: #{narrow_transformer_forward.1} parent=1 // pred_region
      %s207 = ssub.s32 16, 16
      %208 = vsyncadd [#allocation18], %s207
      %s210 = sshll.u32 [#allocation17], 4
      %s211 = int_to_ptr.vmem [resolvable:$true] %s210
      %213 = dma.hbm_to_vmem [thread:$0]  %s35, 16, %s211, [#allocation18]
    $region73: #{narrow_transformer_forward.1} parent=1 // pred_fallthru
      _
    // Predicated region
    $region74: #{narrow_transformer_forward.1} parent=1 // pred_check
      _
    $region75: #{narrow_transformer_forward.1} parent=1 // pred_check_branch
      %215 = sbr.rel (0) target = $region77
    $region76: #{narrow_transformer_forward.1} parent=1 // pred_region
      %s217 = ssub.s32 16, 16
      %218 = vsyncadd [#allocation18], %s217
      %s220 = sshll.u32 [#allocation19], 4
      %s221 = int_to_ptr.vmem [resolvable:$true] %s220
      %223 = dma.hbm_to_vmem [thread:$0]  %s37, 16, %s221, [#allocation18]
    $region77: #{narrow_transformer_forward.1} parent=1 // pred_fallthru
      _
    // Predicated region
    $region78: #{narrow_transformer_forward.1} parent=1 // pred_check
      _
    $region79: #{narrow_transformer_forward.1} parent=1 // pred_check_branch
      %225 = sbr.rel (0) target = $region81
    $region80: #{narrow_transformer_forward.1} parent=1 // pred_region
      %s227 = ssub.s32 16, 16
      %228 = vsyncadd [#allocation21], %s227
      %s230 = sshll.u32 [#allocation20], 4
      %s231 = int_to_ptr.vmem [resolvable:$true] %s230
      %233 = dma.hbm_to_vmem [thread:$0]  %s39, 16, %s231, [#allocation21]
    $region81: #{narrow_transformer_forward.1} parent=1 // pred_fallthru
      _
    // Predicated region
    $region82: #{narrow_transformer_forward.1} parent=1 // pred_check
      _
    $region83: #{narrow_transformer_forward.1} parent=1 // pred_check_branch
      %235 = sbr.rel (0) target = $region85
    $region84: #{narrow_transformer_forward.1} parent=1 // pred_region
      _
    $region85: #{narrow_transformer_forward.1} parent=1 // pred_fallthru
      _
    // Predicated region
    $region86: #{narrow_transformer_forward.1} parent=1 // pred_check
      _
    $region87: #{narrow_transformer_forward.1} parent=1 // pred_check_branch
      %237 = sbr.rel (0) target = $region89
    $region88: #{narrow_transformer_forward.1} parent=1 // pred_region
      %s239 = ssub.s32 16, 16
      %240 = vsyncadd [#allocation21], %s239
      %s242 = sshll.u32 [#allocation22], 4
      %s243 = int_to_ptr.vmem [resolvable:$true] %s242
      %245 = dma.hbm_to_vmem [thread:$0]  %s43, 16, %s243, [#allocation21]
    $region89: #{narrow_transformer_forward.1} parent=1 // pred_fallthru
      _
    // Predicated region
    $region90: #{narrow_transformer_forward.1} parent=1 // pred_check
      _
    $region91: #{narrow_transformer_forward.1} parent=1 // pred_check_branch
      %247 = sbr.rel (0) target = $region93
    $region92: #{narrow_transformer_forward.1} parent=1 // pred_region
      _
    $region93: #{narrow_transformer_forward.1} parent=1 // pred_fallthru
      _
    // Predicated region
    $region94: #{narrow_transformer_forward.1} parent=1 // pred_check
      _
    $region95: #{narrow_transformer_forward.1} parent=1 // pred_check_branch
      %249 = sbr.rel (0) target = $region97
    $region96: #{narrow_transformer_forward.1} parent=1 // pred_region
      %s251 = ssub.s32 16, 16
      %252 = vsyncadd [#allocation24], %s251
      %s254 = sshll.u32 [#allocation23], 4
      %s255 = int_to_ptr.vmem [resolvable:$true] %s254
      %257 = dma.hbm_to_vmem [thread:$0]  %s47, 16, %s255, [#allocation24]
    $region97: #{narrow_transformer_forward.1} parent=1 // pred_fallthru
      _
    // Predicated region
    $region98: #{narrow_transformer_forward.1} parent=1 // pred_check
      _
    $region99: #{narrow_transformer_forward.1} parent=1 // pred_check_branch
      %259 = sbr.rel (0) target = $region101
    $region100: #{narrow_transformer_forward.1} parent=1 // pred_region
      _
    $region101: #{narrow_transformer_forward.1} parent=1 // pred_fallthru
      _
    // Predicated region
    $region102: #{narrow_transformer_forward.1} parent=1 // pred_check
      _
    $region103: #{narrow_transformer_forward.1} parent=1 // pred_check_branch
      %261 = sbr.rel (0) target = $region105
    $region104: #{narrow_transformer_forward.1} parent=1 // pred_region
      %s263 = ssub.s32 16, 16
      %264 = vsyncadd [#allocation24], %s263
      %s266 = sshll.u32 [#allocation25], 4
      %s267 = int_to_ptr.vmem [resolvable:$true] %s266
      %269 = dma.hbm_to_vmem [thread:$0]  %s51, 16, %s267, [#allocation24]
    $region105: #{narrow_transformer_forward.1} parent=1 // pred_fallthru
      _
    // Predicated region
    $region106: #{narrow_transformer_forward.1} parent=1 // pred_check
      _
    $region107: #{narrow_transformer_forward.1} parent=1 // pred_check_branch
      %271 = sbr.rel (0) target = $region109
    $region108: #{narrow_transformer_forward.1} parent=1 // pred_region
      %s273 = ssub.s32 512, 512
      %274 = vsyncadd [#allocation27], %s273
      %s275 = sshll.u32 [#allocation26], 4
      %s276 = int_to_ptr.vmem [resolvable:$true] %s275
      %281 = dma.hbm_to_vmem [thread:$0]  %s53, 512, %s276, [#allocation27], 128, 128, 8
    $region109: #{narrow_transformer_forward.1} parent=1 // pred_fallthru
      _
    // Predicated region
    $region110: #{narrow_transformer_forward.1} parent=1 // pred_check
      _
    $region111: #{narrow_transformer_forward.1} parent=1 // pred_check_branch
      %283 = sbr.rel (0) target = $region113
    $region112: #{narrow_transformer_forward.1} parent=1 // pred_region
      %s285 = ssub.s32 16, 16
      %286 = vsyncadd [#allocation27], %s285
      %s288 = sshll.u32 [#allocation28], 4
      %s289 = int_to_ptr.vmem [resolvable:$true] %s288
      %291 = dma.hbm_to_vmem [thread:$0]  %s55, 16, %s289, [#allocation27]
    $region113: #{narrow_transformer_forward.1} parent=1 // pred_fallthru
      _
    // Predicated region
    $region114: #{narrow_transformer_forward.1} parent=1 // pred_check
      _
    $region115: #{narrow_transformer_forward.1} parent=1 // pred_check_branch
      %293 = sbr.rel (0) target = $region117
    $region116: #{narrow_transformer_forward.1} parent=1 // pred_region
      %s295 = ssub.s32 512, 512
      %296 = vsyncadd [#allocation30], %s295
      %s297 = sshll.u32 [#allocation29], 4
      %s298 = int_to_ptr.vmem [resolvable:$true] %s297
      %303 = dma.hbm_to_vmem [thread:$0]  %s57, 512, %s298, [#allocation30], 128, 128, 8
    $region117: #{narrow_transformer_forward.1} parent=1 // pred_fallthru
      _
    // Predicated region
    $region118: #{narrow_transformer_forward.1} parent=1 // pred_check
      _
    $region119: #{narrow_transformer_forward.1} parent=1 // pred_check_branch
      %305 = sbr.rel (0) target = $region121
    $region120: #{narrow_transformer_forward.1} parent=1 // pred_region
      %s307 = ssub.s32 16, 16
      %308 = vsyncadd [#allocation30], %s307
      %s310 = sshll.u32 [#allocation31], 4
      %s311 = int_to_ptr.vmem [resolvable:$true] %s310
      %313 = dma.hbm_to_vmem [thread:$0]  %s59, 16, %s311, [#allocation30]
    $region121: #{narrow_transformer_forward.1} parent=1 // pred_fallthru
      _
    // Predicated region
    $region122: #{narrow_transformer_forward.1} parent=1 // pred_check
      _
    $region123: #{narrow_transformer_forward.1} parent=1 // pred_check_branch
      %315 = sbr.rel (0) target = $region125
    $region124: #{narrow_transformer_forward.1} parent=1 // pred_region
      _
    $region125: #{narrow_transformer_forward.1} parent=1 // pred_fallthru
      _
    // Predicated region
    $region126: #{narrow_transformer_forward.1} parent=1 // pred_check
      _
    $region127: #{narrow_transformer_forward.1} parent=1 // pred_check_branch
      %317 = sbr.rel (0) target = $region129
    $region128: #{narrow_transformer_forward.1} parent=1 // pred_region
      %s319 = ssub.s32 16, 16
      %320 = vsyncadd [#allocation33], %s319
      %s322 = sshll.u32 [#allocation32], 4
      %s323 = int_to_ptr.vmem [resolvable:$true] %s322
      %325 = dma.hbm_to_vmem [thread:$0]  %s63, 16, %s323, [#allocation33]
    $region129: #{narrow_transformer_forward.1} parent=1 // pred_fallthru
      _
    // Predicated region
    $region130: #{narrow_transformer_forward.1} parent=1 // pred_check
      _
    $region131: #{narrow_transformer_forward.1} parent=1 // pred_check_branch
      %327 = sbr.rel (0) target = $region133
    $region132: #{narrow_transformer_forward.1} parent=1 // pred_region
      %s329 = ssub.s32 16, 16
      %330 = vsyncadd [#allocation33], %s329
      %s332 = sshll.u32 [#allocation34], 4
      %s333 = int_to_ptr.vmem [resolvable:$true] %s332
      %335 = dma.hbm_to_vmem [thread:$0]  %s65, 16, %s333, [#allocation33]
    $region133: #{narrow_transformer_forward.1} parent=1 // pred_fallthru
      _
    // Predicated region
    $region134: #{narrow_transformer_forward.1} parent=1 // pred_check
      _
    $region135: #{narrow_transformer_forward.1} parent=1 // pred_check_branch
      %337 = sbr.rel (0) target = $region137
    $region136: #{narrow_transformer_forward.1} parent=1 // pred_region
      %s339 = ssub.s32 16, 16
      %340 = vsyncadd [#allocation36], %s339
      %s342 = sshll.u32 [#allocation35], 4
      %s343 = int_to_ptr.vmem [resolvable:$true] %s342
      %345 = dma.hbm_to_vmem [thread:$0]  %s67, 16, %s343, [#allocation36]
    $region137: #{narrow_transformer_forward.1} parent=1 // pred_fallthru
      _
    // Predicated region
    $region138: #{narrow_transformer_forward.1} parent=1 // pred_check
      _
    $region139: #{narrow_transformer_forward.1} parent=1 // pred_check_branch
      %347 = sbr.rel (0) target = $region141
    $region140: #{narrow_transformer_forward.1} parent=1 // pred_region
      %s349 = ssub.s32 16, 16
      %350 = vsyncadd [#allocation36], %s349
      %s352 = sshll.u32 [#allocation37], 4
      %s353 = int_to_ptr.vmem [resolvable:$true] %s352
      %355 = dma.hbm_to_vmem [thread:$0]  %s69, 16, %s353, [#allocation36]
    $region141: #{narrow_transformer_forward.1} parent=1 // pred_fallthru
      _
    // Predicated region
    $region142: #{narrow_transformer_forward.1} parent=1 // pred_check
      _
    $region143: #{narrow_transformer_forward.1} parent=1 // pred_check_branch
      %357 = sbr.rel (0) target = $region145
    $region144: #{narrow_transformer_forward.1} parent=1 // pred_region
      %s359 = ssub.s32 16, 16
      %360 = vsyncadd [#allocation39], %s359
      %s362 = sshll.u32 [#allocation38], 4
      %s363 = int_to_ptr.vmem [resolvable:$true] %s362
      %365 = dma.hbm_to_vmem [thread:$0]  %s71, 16, %s363, [#allocation39]
    $region145: #{narrow_transformer_forward.1} parent=1 // pred_fallthru
      _
    // Predicated region
    $region146: #{narrow_transformer_forward.1} parent=1 // pred_check
      _
    $region147: #{narrow_transformer_forward.1} parent=1 // pred_check_branch
      %367 = sbr.rel (0) target = $region149
    $region148: #{narrow_transformer_forward.1} parent=1 // pred_region
      _
    $region149: #{narrow_transformer_forward.1} parent=1 // pred_fallthru
      _
    // Predicated region
    $region150: #{narrow_transformer_forward.1} parent=1 // pred_check
      _
    $region151: #{narrow_transformer_forward.1} parent=1 // pred_check_branch
      %369 = sbr.rel (0) target = $region153
    $region152: #{narrow_transformer_forward.1} parent=1 // pred_region
      %s371 = ssub.s32 16, 16
      %372 = vsyncadd [#allocation39], %s371
      %s374 = sshll.u32 [#allocation40], 4
      %s375 = int_to_ptr.vmem [resolvable:$true] %s374
      %377 = dma.hbm_to_vmem [thread:$0]  %s75, 16, %s375, [#allocation39]
    $region153: #{narrow_transformer_forward.1} parent=1 // pred_fallthru
      _
    // Predicated region
    $region154: #{narrow_transformer_forward.1} parent=1 // pred_check
      _
    $region155: #{narrow_transformer_forward.1} parent=1 // pred_check_branch
      %379 = sbr.rel (0) target = $region157
    $region156: #{narrow_transformer_forward.1} parent=1 // pred_region
      %380 = dma.done [#allocation3], 128
    $region157: #{narrow_transformer_forward.1} parent=1 // pred_fallthru
      _
    // Predicated region
    $region158: #{narrow_transformer_forward.1} parent=1 // pred_check
      _
    $region159: #{narrow_transformer_forward.1} parent=1 // pred_check_branch
      %382 = sbr.rel (0) target = $region161
    $region160: #{narrow_transformer_forward.1} parent=1 // pred_region
      %383 = dma.done [#allocation6], 256
    $region161: #{narrow_transformer_forward.1} parent=1 // pred_fallthru
      _
    // Predicated region
    $region162: #{narrow_transformer_forward.1} parent=1 // pred_check
      _
    $region163: #{narrow_transformer_forward.1} parent=1 // pred_check_branch
      %385 = sbr.rel (0) target = $region165
    $region164: #{narrow_transformer_forward.1} parent=1 // pred_region
      %386 = dma.done [#allocation6], 16
    $region165: #{narrow_transformer_forward.1} parent=1 // pred_fallthru
      _
    // Predicated region
    $region166: #{narrow_transformer_forward.1} parent=1 // pred_check
      _
    $region167: #{narrow_transformer_forward.1} parent=1 // pred_check_branch
      %388 = sbr.rel (0) target = $region169
    $region168: #{narrow_transformer_forward.1} parent=1 // pred_region
      %389 = dma.done [#allocation9], 16
    $region169: #{narrow_transformer_forward.1} parent=1 // pred_fallthru
      _
    // Predicated region
    $region170: #{narrow_transformer_forward.1} parent=1 // pred_check
      _
    $region171: #{narrow_transformer_forward.1} parent=1 // pred_check_branch
      %391 = sbr.rel (0) target = $region173
    $region172: #{narrow_transformer_forward.1} parent=1 // pred_region
      %392 = dma.done [#allocation9], 16
    $region173: #{narrow_transformer_forward.1} parent=1 // pred_fallthru
      _
    // Predicated region
    $region174: #{narrow_transformer_forward.1} parent=1 // pred_check
      _
    $region175: #{narrow_transformer_forward.1} parent=1 // pred_check_branch
      %394 = sbr.rel (0) target = $region177
    $region176: #{narrow_transformer_forward.1} parent=1 // pred_region
      %395 = dma.done [#allocation12], 16
    $region177: #{narrow_transformer_forward.1} parent=1 // pred_fallthru
      _
    // Predicated region
    $region178: #{narrow_transformer_forward.1} parent=1 // pred_check
      _
    $region179: #{narrow_transformer_forward.1} parent=1 // pred_check_branch
      %397 = sbr.rel (0) target = $region181
    $region180: #{narrow_transformer_forward.1} parent=1 // pred_region
      %398 = dma.done [#allocation12], 16
    $region181: #{narrow_transformer_forward.1} parent=1 // pred_fallthru
      _
    // Predicated region
    $region182: #{narrow_transformer_forward.1} parent=1 // pred_check
      _
    $region183: #{narrow_transformer_forward.1} parent=1 // pred_check_branch
      %400 = sbr.rel (0) target = $region185
    $region184: #{narrow_transformer_forward.1} parent=1 // pred_region
      %401 = dma.done [#allocation15], 16
    $region185: #{narrow_transformer_forward.1} parent=1 // pred_fallthru
      _
    // Predicated region
    $region186: #{narrow_transformer_forward.1} parent=1 // pred_check
      _
    $region187: #{narrow_transformer_forward.1} parent=1 // pred_check_branch
      %403 = sbr.rel (0) target = $region189
    $region188: #{narrow_transformer_forward.1} parent=1 // pred_region
      %404 = dma.done [#allocation15], 16
    $region189: #{narrow_transformer_forward.1} parent=1 // pred_fallthru
      _
    // Predicated region
    $region190: #{narrow_transformer_forward.1} parent=1 // pred_check
      _
    $region191: #{narrow_transformer_forward.1} parent=1 // pred_check_branch
      %406 = sbr.rel (0) target = $region193
    $region192: #{narrow_transformer_forward.1} parent=1 // pred_region
      %407 = dma.done [#allocation18], 16
    $region193: #{narrow_transformer_forward.1} parent=1 // pred_fallthru
      _
    // Predicated region
    $region194: #{narrow_transformer_forward.1} parent=1 // pred_check
      _
    $region195: #{narrow_transformer_forward.1} parent=1 // pred_check_branch
      %409 = sbr.rel (0) target = $region197
    $region196: #{narrow_transformer_forward.1} parent=1 // pred_region
      %410 = dma.done [#allocation18], 16
    $region197: #{narrow_transformer_forward.1} parent=1 // pred_fallthru
      _
    // Predicated region
    $region198: #{narrow_transformer_forward.1} parent=1 // pred_check
      _
    $region199: #{narrow_transformer_forward.1} parent=1 // pred_check_branch
      %412 = sbr.rel (0) target = $region201
    $region200: #{narrow_transformer_forward.1} parent=1 // pred_region
      %413 = dma.done [#allocation21], 16
    $region201: #{narrow_transformer_forward.1} parent=1 // pred_fallthru
      _
    // Predicated region
    $region202: #{narrow_transformer_forward.1} parent=1 // pred_check
      _
    $region203: #{narrow_transformer_forward.1} parent=1 // pred_check_branch
      %415 = sbr.rel (0) target = $region205
    $region204: #{narrow_transformer_forward.1} parent=1 // pred_region
      %416 = dma.done [#allocation21], 16
    $region205: #{narrow_transformer_forward.1} parent=1 // pred_fallthru
      _
    // Predicated region
    $region206: #{narrow_transformer_forward.1} parent=1 // pred_check
      _
    $region207: #{narrow_transformer_forward.1} parent=1 // pred_check_branch
      %418 = sbr.rel (0) target = $region209
    $region208: #{narrow_transformer_forward.1} parent=1 // pred_region
      %419 = dma.done [#allocation24], 16
    $region209: #{narrow_transformer_forward.1} parent=1 // pred_fallthru
      _
    // Predicated region
    $region210: #{narrow_transformer_forward.1} parent=1 // pred_check
      _
    $region211: #{narrow_transformer_forward.1} parent=1 // pred_check_branch
      %421 = sbr.rel (0) target = $region213
    $region212: #{narrow_transformer_forward.1} parent=1 // pred_region
      %422 = dma.done [#allocation24], 16
    $region213: #{narrow_transformer_forward.1} parent=1 // pred_fallthru
      _
    // Predicated region
    $region214: #{narrow_transformer_forward.1} parent=1 // pred_check
      _
    $region215: #{narrow_transformer_forward.1} parent=1 // pred_check_branch
      %424 = sbr.rel (0) target = $region217
    $region216: #{narrow_transformer_forward.1} parent=1 // pred_region
      %425 = dma.done [#allocation27], 512
    $region217: #{narrow_transformer_forward.1} parent=1 // pred_fallthru
      _
    // Predicated region
    $region218: #{narrow_transformer_forward.1} parent=1 // pred_check
      _
    $region219: #{narrow_transformer_forward.1} parent=1 // pred_check_branch
      %427 = sbr.rel (0) target = $region221
    $region220: #{narrow_transformer_forward.1} parent=1 // pred_region
      %428 = dma.done [#allocation27], 16
    $region221: #{narrow_transformer_forward.1} parent=1 // pred_fallthru
      _
    // Predicated region
    $region222: #{narrow_transformer_forward.1} parent=1 // pred_check
      _
    $region223: #{narrow_transformer_forward.1} parent=1 // pred_check_branch
      %430 = sbr.rel (0) target = $region225
    $region224: #{narrow_transformer_forward.1} parent=1 // pred_region
      %431 = dma.done [#allocation30], 512
    $region225: #{narrow_transformer_forward.1} parent=1 // pred_fallthru
      _
    // Predicated region
    $region226: #{narrow_transformer_forward.1} parent=1 // pred_check
      _
    $region227: #{narrow_transformer_forward.1} parent=1 // pred_check_branch
      %433 = sbr.rel (0) target = $region229
    $region228: #{narrow_transformer_forward.1} parent=1 // pred_region
      %434 = dma.done [#allocation30], 16
    $region229: #{narrow_transformer_forward.1} parent=1 // pred_fallthru
      _
    // Predicated region
    $region230: #{narrow_transformer_forward.1} parent=1 // pred_check
      _
    $region231: #{narrow_transformer_forward.1} parent=1 // pred_check_branch
      %436 = sbr.rel (0) target = $region233
    $region232: #{narrow_transformer_forward.1} parent=1 // pred_region
      %437 = dma.done [#allocation33], 16
    $region233: #{narrow_transformer_forward.1} parent=1 // pred_fallthru
      _
    // Predicated region
    $region234: #{narrow_transformer_forward.1} parent=1 // pred_check
      _
    $region235: #{narrow_transformer_forward.1} parent=1 // pred_check_branch
      %439 = sbr.rel (0) target = $region237
    $region236: #{narrow_transformer_forward.1} parent=1 // pred_region
      %440 = dma.done [#allocation33], 16
    $region237: #{narrow_transformer_forward.1} parent=1 // pred_fallthru
      _
    // Predicated region
    $region238: #{narrow_transformer_forward.1} parent=1 // pred_check
      _
    $region239: #{narrow_transformer_forward.1} parent=1 // pred_check_branch
      %442 = sbr.rel (0) target = $region241
    $region240: #{narrow_transformer_forward.1} parent=1 // pred_region
      %443 = dma.done [#allocation36], 16
    $region241: #{narrow_transformer_forward.1} parent=1 // pred_fallthru
      _
    // Predicated region
    $region242: #{narrow_transformer_forward.1} parent=1 // pred_check
      _
    $region243: #{narrow_transformer_forward.1} parent=1 // pred_check_branch
      %445 = sbr.rel (0) target = $region245
    $region244: #{narrow_transformer_forward.1} parent=1 // pred_region
      %446 = dma.done [#allocation36], 16
    $region245: #{narrow_transformer_forward.1} parent=1 // pred_fallthru
      _
    // Predicated region
    $region246: #{narrow_transformer_forward.1} parent=1 // pred_check
      _
    $region247: #{narrow_transformer_forward.1} parent=1 // pred_check_branch
      %448 = sbr.rel (0) target = $region249
    $region248: #{narrow_transformer_forward.1} parent=1 // pred_region
      %449 = dma.done [#allocation39], 16
    $region249: #{narrow_transformer_forward.1} parent=1 // pred_fallthru
      _
    // Predicated region
    $region250: #{narrow_transformer_forward.1} parent=1 // pred_check
      _
    $region251: #{narrow_transformer_forward.1} parent=1 // pred_check_branch
      %451 = sbr.rel (0) target = $region253
    $region252: #{narrow_transformer_forward.1} parent=1 // pred_region
      %452 = dma.done [#allocation39], 16
    $region253: #{narrow_transformer_forward.1} parent=1 // pred_fallthru
      _
    %v453 = vld [vmem:[%s1] sm:$0xff]
    %v454 = vld [vmem:[%s1 + $0x8] sm:$0xff]
    %v455 = vlaneseq
    %v456 = vand.u32 %v455, 127
    %457 = vset.pattern.permute.xlu0 0
    %458 = vperm.xlu0 %457, %v453
    %v459 = vpop.permute.xlu0 %458
    %460 = vset.pattern.permute.xlu0 0
    %461 = vperm.xlu0 %460, %v454
    %v462 = vpop.permute.xlu0 %461
    %vm463 = vcmp.eq.s32.totalorder %v459, %v456
    %vm464 = vcmp.eq.s32.totalorder %v462, %v456
    %v465 = vsel %vm463, 1, 0
    %v466 = vsel %vm464, 1, 0
    %v467 = vcvt.s32.f32 %v465
    %v468 = vcvt.s32.f32 %v466
    %v469 = vld [vmem:[#allocation5] sm:$0xff]
    %v470 = vld [vmem:[#allocation5 + $0x8] sm:$0xff]
    %vm471 = vcmask 130048
    %v473 = vsel %vm471, %v467, 0
    %v476 = vsel %vm471, %v468, 0
    %478 = vmatprep.subr.mxu0 0.0
    %479 = vmatpush1.msra.mxu0 0.0
    %480 = vmatprep.subr.mxu0 0.0
    %481 = vmatpush1.msra.mxu0 0.0
    %482 = vmatprep.subr.mxu0 0.0
    %483 = vmatpush1.msra.mxu0 0.0
    %484 = vmatprep.subr.mxu0 0.0
    %485 = vmatpush1.msra.mxu0 0.0
    %486 = vmatprep.subr.mxu0 0.0
    %487 = vmatpush1.msra.mxu0 0.0
    %488 = vmatprep.subr.mxu0 0.0
    %489 = vmatpush1.msra.mxu0 0.0
    %490 = vmatprep.subr.mxu0 0.0
    %491 = vmatpush1.msra.mxu0 0.0
    %492 = vmatprep.subr.mxu0 0.0
    %493 = vmatpush1.msra.mxu0 0.0
    %494 = vmatprep.subr.mxu0 0.0
    %495 = vmatpush1.msra.mxu0 0.0
    %496 = vmatprep.subr.mxu0 0.0
    %497 = vmatpush1.msra.mxu0 0.0
    %498 = vmatprep.subr.mxu0 0.0
    %499 = vmatpush1.msra.mxu0 0.0
    %500 = vmatprep.subr.mxu0 0.0
    %501 = vmatpush1.msra.mxu0 0.0
    %502 = vmatprep.subr.mxu0 0.0
    %503 = vmatpush1.msra.mxu0 0.0
    %504 = vmatprep.subr.mxu0 0.0
    %505 = vmatpush1.msra.mxu0 0.0
    %506 = vmatprep.subr.mxu0 0.0
    %507 = vmatpush1.msra.mxu0 %v470
    %508 = vmatprep.subr.mxu0 0.0
    %509 = vmatpush1.msra.mxu0 %v469
    %510 = vmatprep.subr.mxu0 0.0
    %511 = vmatpush2.msra.mxu0 0.0
    %512 = vmatprep.subr.mxu0 0.0
    %513 = vmatpush2.msra.mxu0 0.0
    %514 = vmatprep.subr.mxu0 0.0
    %515 = vmatpush2.msra.mxu0 0.0
    %516 = vmatprep.subr.mxu0 0.0
    %517 = vmatpush2.msra.mxu0 0.0
    %518 = vmatprep.subr.mxu0 0.0
    %519 = vmatpush2.msra.mxu0 0.0
    %520 = vmatprep.subr.mxu0 0.0
    %521 = vmatpush2.msra.mxu0 0.0
    %522 = vmatprep.subr.mxu0 0.0
    %523 = vmatpush2.msra.mxu0 0.0
    %524 = vmatprep.subr.mxu0 0.0
    %525 = vmatpush2.msra.mxu0 0.0
    %526 = vmatprep.subr.mxu0 0.0
    %527 = vmatpush2.msra.mxu0 0.0
    %528 = vmatprep.subr.mxu0 0.0
    %529 = vmatpush2.msra.mxu0 0.0
    %530 = vmatprep.subr.mxu0 0.0
    %531 = vmatpush2.msra.mxu0 0.0
    %532 = vmatprep.subr.mxu0 0.0
    %533 = vmatpush2.msra.mxu0 0.0
    %534 = vmatprep.subr.mxu0 0.0
    %535 = vmatpush2.msra.mxu0 0.0
    %536 = vmatprep.subr.mxu0 0.0
    %537 = vmatpush2.msra.mxu0 0.0
    %538 = vmatprep.subr.mxu0 0.0
    %539 = vmatpush2.msra.mxu0 0.0
    %540 = vmatprep.subr.mxu0 0.0
    %541 = vmatpush2.msra.mxu0 0.0
    %542 = vmatprep.mubr.f32.mxu0 0.0
    %543 = vmatmul.mubr.f32.gmra.mxu0 %v473
    %v544 = vpop.f32.mrf.mxu0
    %v545 = vadd.f32 0.0, %v544
    %v546 = vpop.f32.mrf.mxu0
    %547 = vmatprep.mubr.f32.mxu0 0.0
    %548 = vmatmul.mubr.f32.gmra.mxu0 %v476
    %v549 = vpop.f32.mrf.mxu0
    %v550 = vadd.f32 0.0, %v549
    %v551 = vpop.f32.mrf.mxu0
    %552 = vdwg.mxu0
    %v553 = vmul.f32 %v545, 5.656854
    %v554 = vmul.f32 %v550, 5.656854
    %v555 = vld [vmem:[#allocation2] sm:$0xff]
    %v556 = vadd.f32 %v553, %v555
    %v557 = vadd.f32 %v554, %v555
    %v558 = vld [vmem:[%s3] sm:$0x3]
    %v559 = vsub.f32 %v558, 1.0
    %v560 = vmul.f32 %v559, 1e+09
    %v563 = vunpack.c.l.s4 1966171168
    %v564 = vunpack.c.0.s8 %v563
    %v565 = vlaneseq
    %v566 = vshrl.u32 %v565, 7
    %v567 = vsub.s32 %v564, %v566
    %v568 = vrot.slane %v560, %v567
    %v569 = vcombine.high %v568, %v568
    %v571 = vunpack.c.l.s4 1966171168
    %v572 = vunpack.c.0.s8 %v571
    %v573 = vlaneseq
    %v574 = vshrl.u32 %v573, 7
    %v575 = vsub.s32 %v572, %v574
    %v576 = vrot.slane %v568, %v575
    %v578 = vunpack.c.l.s4 1966171168
    %v579 = vunpack.c.0.s8 %v578
    %v580 = vlaneseq
    %v581 = vshrl.u32 %v580, 7
    %v582 = vsub.s32 %v579, %v581
    %v583 = vrot.slane %v569, %v582
    %v584 = vld [vmem:[%s9] sm:$0xff]
    %v585 = vld [vmem:[%s9 + $0x8] sm:$0xff]
    %v586 = vld [vmem:[%s9 + $0x10] sm:$0xff]
    %v587 = vld [vmem:[%s9 + $0x18] sm:$0xff]
    %v588 = vld [vmem:[#allocation7] sm:$0x1]
    %v589 = vld [vmem:[%s13] sm:$0xff]
    %v590 = vld [vmem:[%s13 + $0x8] sm:$0xff]
    %v591 = vld [vmem:[%s13 + $0x10] sm:$0xff]
    %v592 = vld [vmem:[%s13 + $0x18] sm:$0xff]
    %v593 = vld [vmem:[#allocation8] sm:$0x1]
    %v594 = vld [vmem:[%s17] sm:$0xff]
    %v595 = vld [vmem:[%s17 + $0x8] sm:$0xff]
    %v596 = vld [vmem:[%s17 + $0x10] sm:$0xff]
    %v597 = vld [vmem:[%s17 + $0x18] sm:$0xff]
    %v598 = vld [vmem:[#allocation10] sm:$0x1]
    %v599 = vld [vmem:[%s21] sm:$0xff]
    %v600 = vld [vmem:[%s21 + $0x8] sm:$0xff]
    %v601 = vld [vmem:[%s21 + $0x10] sm:$0xff]
    %v602 = vld [vmem:[%s21 + $0x18] sm:$0xff]
    %v603 = vld [vmem:[#allocation11] sm:$0x1]
    %v604 = vld [vmem:[%s25] sm:$0xff]
    %v605 = vld [vmem:[%s25 + $0x8] sm:$0xff]
    %v606 = vld [vmem:[%s25 + $0x10] sm:$0xff]
    %v607 = vld [vmem:[%s25 + $0x18] sm:$0xff]
    %v608 = vld [vmem:[#allocation13] sm:$0x1]
    %v609 = vld [vmem:[%s29] sm:$0xff]
    %v610 = vld [vmem:[%s29 + $0x8] sm:$0xff]
    %v611 = vld [vmem:[%s29 + $0x10] sm:$0xff]
    %v612 = vld [vmem:[%s29 + $0x18] sm:$0xff]
    %v613 = vld [vmem:[%s29 + $0x20] sm:$0xff]
    %v614 = vld [vmem:[%s29 + $0x28] sm:$0xff]
    %v615 = vld [vmem:[%s29 + $0x30] sm:$0xff]
    %v616 = vld [vmem:[%s29 + $0x38] sm:$0xff]
    %v617 = vld [vmem:[#allocation14] sm:$0x1]
    %v618 = vld [vmem:[#allocation16] sm:$0x1]
    %v619 = vld [vmem:[#allocation17] sm:$0x1]
    %v620 = vld [vmem:[#allocation19] sm:$0x1]
    %v621 = vld [vmem:[#allocation20] sm:$0x1]
    %v623 = vlaneseq
    %v624 = vshrl.u32 %v623, 7
    %v625 = vsub.s32 0, %v624
    %v626 = vrot.slane %v588, %v625
    %vm628 = vcmask 261120
    %v630 = vsel %vm628, %v556, 0
    %v633 = vsel %vm628, %v557, 0
    %635 = vmatprep.subr.mxu0 0.0
    %636 = vmatpush1.msra.mxu0 0.0
    %637 = vmatprep.subr.mxu0 0.0
    %638 = vmatpush1.msra.mxu0 0.0
    %639 = vmatprep.subr.mxu0 0.0
    %640 = vmatpush1.msra.mxu0 0.0
    %641 = vmatprep.subr.mxu0 0.0
    %642 = vmatpush1.msra.mxu0 0.0
    %643 = vmatprep.subr.mxu0 0.0
    %644 = vmatpush1.msra.mxu0 0.0
    %645 = vmatprep.subr.mxu0 0.0
    %646 = vmatpush1.msra.mxu0 0.0
    %647 = vmatprep.subr.mxu0 0.0
    %648 = vmatpush1.msra.mxu0 0.0
    %649 = vmatprep.subr.mxu0 0.0
    %650 = vmatpush1.msra.mxu0 0.0
    %651 = vmatprep.subr.mxu0 0.0
    %652 = vmatpush1.msra.mxu0 0.0
    %653 = vmatprep.subr.mxu0 0.0
    %654 = vmatpush1.msra.mxu0 0.0
    %655 = vmatprep.subr.mxu0 0.0
    %656 = vmatpush1.msra.mxu0 0.0
    %657 = vmatprep.subr.mxu0 0.0
    %658 = vmatpush1.msra.mxu0 0.0
    %659 = vmatprep.subr.mxu0 0.0
    %660 = vmatpush1.msra.mxu0 %v587
    %661 = vmatprep.subr.mxu0 0.0
    %662 = vmatpush1.msra.mxu0 %v586
    %663 = vmatprep.subr.mxu0 0.0
    %664 = vmatpush1.msra.mxu0 %v585
    %665 = vmatprep.subr.mxu0 0.0
    %666 = vmatpush1.msra.mxu0 %v584
    %667 = vmatprep.subr.mxu0 0.0
    %668 = vmatpush2.msra.mxu0 0.0
    %669 = vmatprep.subr.mxu0 0.0
    %670 = vmatpush2.msra.mxu0 0.0
    %671 = vmatprep.subr.mxu0 0.0
    %672 = vmatpush2.msra.mxu0 0.0
    %673 = vmatprep.subr.mxu0 0.0
    %674 = vmatpush2.msra.mxu0 0.0
    %675 = vmatprep.subr.mxu0 0.0
    %676 = vmatpush2.msra.mxu0 0.0
    %677 = vmatprep.subr.mxu0 0.0
    %678 = vmatpush2.msra.mxu0 0.0
    %679 = vmatprep.subr.mxu0 0.0
    %680 = vmatpush2.msra.mxu0 0.0
    %681 = vmatprep.subr.mxu0 0.0
    %682 = vmatpush2.msra.mxu0 0.0
    %683 = vmatprep.subr.mxu0 0.0
    %684 = vmatpush2.msra.mxu0 0.0
    %685 = vmatprep.subr.mxu0 0.0
    %686 = vmatpush2.msra.mxu0 0.0
    %687 = vmatprep.subr.mxu0 0.0
    %688 = vmatpush2.msra.mxu0 0.0
    %689 = vmatprep.subr.mxu0 0.0
    %690 = vmatpush2.msra.mxu0 0.0
    %691 = vmatprep.subr.mxu0 0.0
    %692 = vmatpush2.msra.mxu0 0.0
    %693 = vmatprep.subr.mxu0 0.0
    %694 = vmatpush2.msra.mxu0 0.0
    %695 = vmatprep.subr.mxu0 0.0
    %696 = vmatpush2.msra.mxu0 0.0
    %697 = vmatprep.subr.mxu0 0.0
    %698 = vmatpush2.msra.mxu0 0.0
    %699 = vmatprep.mubr.f32.mxu0 0.0
    %700 = vmatmul.mubr.f32.gmra.mxu0 %v630
    %v701 = vpop.f32.mrf.mxu0
    %v702 = vadd.f32 %v626, %v701
    %v703 = vpop.f32.mrf.mxu0
    %704 = vmatprep.mubr.f32.mxu0 0.0
    %705 = vmatmul.mubr.f32.gmra.mxu0 %v633
    %v706 = vpop.f32.mrf.mxu0
    %v707 = vadd.f32 %v626, %v706
    %v708 = vpop.f32.mrf.mxu0
    %709 = vdwg.mxu0
    %v711 = vlaneseq
    %v712 = vshrl.u32 %v711, 7
    %v713 = vsub.s32 0, %v712
    %v714 = vrot.slane %v593, %v713
    %716 = vmatprep.subr.mxu0 0.0
    %717 = vmatpush1.msra.mxu0 0.0
    %718 = vmatprep.subr.mxu0 0.0
    %719 = vmatpush1.msra.mxu0 0.0
    %720 = vmatprep.subr.mxu0 0.0
    %721 = vmatpush1.msra.mxu0 0.0
    %722 = vmatprep.subr.mxu0 0.0
    %723 = vmatpush1.msra.mxu0 0.0
    %724 = vmatprep.subr.mxu0 0.0
    %725 = vmatpush1.msra.mxu0 0.0
    %726 = vmatprep.subr.mxu0 0.0
    %727 = vmatpush1.msra.mxu0 0.0
    %728 = vmatprep.subr.mxu0 0.0
    %729 = vmatpush1.msra.mxu0 0.0
    %730 = vmatprep.subr.mxu0 0.0
    %731 = vmatpush1.msra.mxu0 0.0
    %732 = vmatprep.subr.mxu0 0.0
    %733 = vmatpush1.msra.mxu0 0.0
    %734 = vmatprep.subr.mxu0 0.0
    %735 = vmatpush1.msra.mxu0 0.0
    %736 = vmatprep.subr.mxu0 0.0
    %737 = vmatpush1.msra.mxu0 0.0
    %738 = vmatprep.subr.mxu0 0.0
    %739 = vmatpush1.msra.mxu0 0.0
    %740 = vmatprep.subr.mxu0 0.0
    %741 = vmatpush1.msra.mxu0 %v592
    %742 = vmatprep.subr.mxu0 0.0
    %743 = vmatpush1.msra.mxu0 %v591
    %744 = vmatprep.subr.mxu0 0.0
    %745 = vmatpush1.msra.mxu0 %v590
    %746 = vmatprep.subr.mxu0 0.0
    %747 = vmatpush1.msra.mxu0 %v589
    %748 = vmatprep.subr.mxu0 0.0
    %749 = vmatpush2.msra.mxu0 0.0
    %750 = vmatprep.subr.mxu0 0.0
    %751 = vmatpush2.msra.mxu0 0.0
    %752 = vmatprep.subr.mxu0 0.0
    %753 = vmatpush2.msra.mxu0 0.0
    %754 = vmatprep.subr.mxu0 0.0
    %755 = vmatpush2.msra.mxu0 0.0
    %756 = vmatprep.subr.mxu0 0.0
    %757 = vmatpush2.msra.mxu0 0.0
    %758 = vmatprep.subr.mxu0 0.0
    %759 = vmatpush2.msra.mxu0 0.0
    %760 = vmatprep.subr.mxu0 0.0
    %761 = vmatpush2.msra.mxu0 0.0
    %762 = vmatprep.subr.mxu0 0.0
    %763 = vmatpush2.msra.mxu0 0.0
    %764 = vmatprep.subr.mxu0 0.0
    %765 = vmatpush2.msra.mxu0 0.0
    %766 = vmatprep.subr.mxu0 0.0
    %767 = vmatpush2.msra.mxu0 0.0
    %768 = vmatprep.subr.mxu0 0.0
    %769 = vmatpush2.msra.mxu0 0.0
    %770 = vmatprep.subr.mxu0 0.0
    %771 = vmatpush2.msra.mxu0 0.0
    %772 = vmatprep.subr.mxu0 0.0
    %773 = vmatpush2.msra.mxu0 0.0
    %774 = vmatprep.subr.mxu0 0.0
    %775 = vmatpush2.msra.mxu0 0.0
    %776 = vmatprep.subr.mxu0 0.0
    %777 = vmatpush2.msra.mxu0 0.0
    %778 = vmatprep.subr.mxu0 0.0
    %779 = vmatpush2.msra.mxu0 0.0
    %780 = vmatprep.mubr.f32.mxu0 0.0
    %781 = vmatmul.mubr.f32.gmra.mxu0 %v630
    %v782 = vpop.f32.mrf.mxu0
    %v783 = vadd.f32 %v714, %v782
    %v784 = vpop.f32.mrf.mxu0
    %785 = vmatprep.mubr.f32.mxu0 0.0
    %786 = vmatmul.mubr.f32.gmra.mxu0 %v633
    %v787 = vpop.f32.mrf.mxu0
    %v788 = vadd.f32 %v714, %v787
    %v789 = vpop.f32.mrf.mxu0
    %790 = vdwg.mxu0
    %v792 = vlaneseq
    %v793 = vshrl.u32 %v792, 7
    %v794 = vsub.s32 0, %v793
    %v795 = vrot.slane %v598, %v794
    %797 = vmatprep.subr.mxu0 0.0
    %798 = vmatpush1.msra.mxu0 0.0
    %799 = vmatprep.subr.mxu0 0.0
    %800 = vmatpush1.msra.mxu0 0.0
    %801 = vmatprep.subr.mxu0 0.0
    %802 = vmatpush1.msra.mxu0 0.0
    %803 = vmatprep.subr.mxu0 0.0
    %804 = vmatpush1.msra.mxu0 0.0
    %805 = vmatprep.subr.mxu0 0.0
    %806 = vmatpush1.msra.mxu0 0.0
    %807 = vmatprep.subr.mxu0 0.0
    %808 = vmatpush1.msra.mxu0 0.0
    %809 = vmatprep.subr.mxu0 0.0
    %810 = vmatpush1.msra.mxu0 0.0
    %811 = vmatprep.subr.mxu0 0.0
    %812 = vmatpush1.msra.mxu0 0.0
    %813 = vmatprep.subr.mxu0 0.0
    %814 = vmatpush1.msra.mxu0 0.0
    %815 = vmatprep.subr.mxu0 0.0
    %816 = vmatpush1.msra.mxu0 0.0
    %817 = vmatprep.subr.mxu0 0.0
    %818 = vmatpush1.msra.mxu0 0.0
    %819 = vmatprep.subr.mxu0 0.0
    %820 = vmatpush1.msra.mxu0 0.0
    %821 = vmatprep.subr.mxu0 0.0
    %822 = vmatpush1.msra.mxu0 %v597
    %823 = vmatprep.subr.mxu0 0.0
    %824 = vmatpush1.msra.mxu0 %v596
    %825 = vmatprep.subr.mxu0 0.0
    %826 = vmatpush1.msra.mxu0 %v595
    %827 = vmatprep.subr.mxu0 0.0
    %828 = vmatpush1.msra.mxu0 %v594
    %829 = vmatprep.subr.mxu0 0.0
    %830 = vmatpush2.msra.mxu0 0.0
    %831 = vmatprep.subr.mxu0 0.0
    %832 = vmatpush2.msra.mxu0 0.0
    %833 = vmatprep.subr.mxu0 0.0
    %834 = vmatpush2.msra.mxu0 0.0
    %835 = vmatprep.subr.mxu0 0.0
    %836 = vmatpush2.msra.mxu0 0.0
    %837 = vmatprep.subr.mxu0 0.0
    %838 = vmatpush2.msra.mxu0 0.0
    %839 = vmatprep.subr.mxu0 0.0
    %840 = vmatpush2.msra.mxu0 0.0
    %841 = vmatprep.subr.mxu0 0.0
    %842 = vmatpush2.msra.mxu0 0.0
    %843 = vmatprep.subr.mxu0 0.0
    %844 = vmatpush2.msra.mxu0 0.0
    %845 = vmatprep.subr.mxu0 0.0
    %846 = vmatpush2.msra.mxu0 0.0
    %847 = vmatprep.subr.mxu0 0.0
    %848 = vmatpush2.msra.mxu0 0.0
    %849 = vmatprep.subr.mxu0 0.0
    %850 = vmatpush2.msra.mxu0 0.0
    %851 = vmatprep.subr.mxu0 0.0
    %852 = vmatpush2.msra.mxu0 0.0
    %853 = vmatprep.subr.mxu0 0.0
    %854 = vmatpush2.msra.mxu0 0.0
    %855 = vmatprep.subr.mxu0 0.0
    %856 = vmatpush2.msra.mxu0 0.0
    %857 = vmatprep.subr.mxu0 0.0
    %858 = vmatpush2.msra.mxu0 0.0
    %859 = vmatprep.subr.mxu0 0.0
    %860 = vmatpush2.msra.mxu0 0.0
    %861 = vmatprep.mubr.f32.mxu0 0.0
    %862 = vmatmul.mubr.f32.gmra.mxu0 %v630
    %v863 = vpop.f32.mrf.mxu0
    %v864 = vadd.f32 %v795, %v863
    %v865 = vpop.f32.mrf.mxu0
    %866 = vmatprep.mubr.f32.mxu0 0.0
    %867 = vmatmul.mubr.f32.gmra.mxu0 %v633
    %v868 = vpop.f32.mrf.mxu0
    %v869 = vadd.f32 %v795, %v868
    %v870 = vpop.f32.mrf.mxu0
    %871 = vdwg.mxu0
    %vm872 = vcmask 64512
    %v874 = vsel %vm872, %v702, 0
    %v877 = vsel %vm872, %v783, 0
    %879 = vmatprep.subr.mxu0 0.0
    %880 = vmatpush1.xpose.msra.mxu0 0.0
    %881 = vmatprep.subr.mxu0 0.0
    %882 = vmatpush1.xpose.msra.mxu0 0.0
    %883 = vmatprep.subr.mxu0 0.0
    %884 = vmatpush1.xpose.msra.mxu0 0.0
    %885 = vmatprep.subr.mxu0 0.0
    %886 = vmatpush1.xpose.msra.mxu0 0.0
    %887 = vmatprep.subr.mxu0 0.0
    %888 = vmatpush1.xpose.msra.mxu0 0.0
    %889 = vmatprep.subr.mxu0 0.0
    %890 = vmatpush1.xpose.msra.mxu0 0.0
    %891 = vmatprep.subr.mxu0 0.0
    %892 = vmatpush1.xpose.msra.mxu0 0.0
    %893 = vmatprep.subr.mxu0 0.0
    %894 = vmatpush1.xpose.msra.mxu0 0.0
    %895 = vmatprep.subr.mxu0 0.0
    %896 = vmatpush1.xpose.msra.mxu0 0.0
    %897 = vmatprep.subr.mxu0 0.0
    %898 = vmatpush1.xpose.msra.mxu0 0.0
    %899 = vmatprep.subr.mxu0 0.0
    %900 = vmatpush1.xpose.msra.mxu0 0.0
    %901 = vmatprep.subr.mxu0 0.0
    %902 = vmatpush1.xpose.msra.mxu0 0.0
    %903 = vmatprep.subr.mxu0 0.0
    %904 = vmatpush1.xpose.msra.mxu0 0.0
    %905 = vmatprep.subr.mxu0 0.0
    %906 = vmatpush1.xpose.msra.mxu0 0.0
    %907 = vmatprep.subr.mxu0 0.0
    %908 = vmatpush1.xpose.msra.mxu0 0.0
    %909 = vmatprep.subr.mxu0 0.0
    %910 = vmatpush1.xpose.msra.mxu0 %v877
    %911 = vmatprep.subr.mxu0 0.0
    %912 = vmatpush2.xpose.msra.mxu0 0.0
    %913 = vmatprep.subr.mxu0 0.0
    %914 = vmatpush2.xpose.msra.mxu0 0.0
    %915 = vmatprep.subr.mxu0 0.0
    %916 = vmatpush2.xpose.msra.mxu0 0.0
    %917 = vmatprep.subr.mxu0 0.0
    %918 = vmatpush2.xpose.msra.mxu0 0.0
    %919 = vmatprep.subr.mxu0 0.0
    %920 = vmatpush2.xpose.msra.mxu0 0.0
    %921 = vmatprep.subr.mxu0 0.0
    %922 = vmatpush2.xpose.msra.mxu0 0.0
    %923 = vmatprep.subr.mxu0 0.0
    %924 = vmatpush2.xpose.msra.mxu0 0.0
    %925 = vmatprep.subr.mxu0 0.0
    %926 = vmatpush2.xpose.msra.mxu0 0.0
    %927 = vmatprep.subr.mxu0 0.0
    %928 = vmatpush2.xpose.msra.mxu0 0.0
    %929 = vmatprep.subr.mxu0 0.0
    %930 = vmatpush2.xpose.msra.mxu0 0.0
    %931 = vmatprep.subr.mxu0 0.0
    %932 = vmatpush2.xpose.msra.mxu0 0.0
    %933 = vmatprep.subr.mxu0 0.0
    %934 = vmatpush2.xpose.msra.mxu0 0.0
    %935 = vmatprep.subr.mxu0 0.0
    %936 = vmatpush2.xpose.msra.mxu0 0.0
    %937 = vmatprep.subr.mxu0 0.0
    %938 = vmatpush2.xpose.msra.mxu0 0.0
    %939 = vmatprep.subr.mxu0 0.0
    %940 = vmatpush2.xpose.msra.mxu0 0.0
    %941 = vmatprep.subr.mxu0 0.0
    %942 = vmatpush2.xpose.msra.mxu0 0.0
    %943 = vmatprep.mubr.f32.mxu0 0.0
    %944 = vmatmul.mubr.f32.gmra.mxu0 %v874
    %v945 = vpop.f32.mrf.mxu0
    %v946 = vadd.f32 0.0, %v945
    %v947 = vpop.f32.mrf.mxu0
    %948 = vdwg.mxu0
    %v950 = vsel %vm872, %v707, 0
    %v953 = vsel %vm872, %v788, 0
    %955 = vmatprep.subr.mxu0 0.0
    %956 = vmatpush1.xpose.msra.mxu0 0.0
    %957 = vmatprep.subr.mxu0 0.0
    %958 = vmatpush1.xpose.msra.mxu0 0.0
    %959 = vmatprep.subr.mxu0 0.0
    %960 = vmatpush1.xpose.msra.mxu0 0.0
    %961 = vmatprep.subr.mxu0 0.0
    %962 = vmatpush1.xpose.msra.mxu0 0.0
    %963 = vmatprep.subr.mxu0 0.0
    %964 = vmatpush1.xpose.msra.mxu0 0.0
    %965 = vmatprep.subr.mxu0 0.0
    %966 = vmatpush1.xpose.msra.mxu0 0.0
    %967 = vmatprep.subr.mxu0 0.0
    %968 = vmatpush1.xpose.msra.mxu0 0.0
    %969 = vmatprep.subr.mxu0 0.0
    %970 = vmatpush1.xpose.msra.mxu0 0.0
    %971 = vmatprep.subr.mxu0 0.0
    %972 = vmatpush1.xpose.msra.mxu0 0.0
    %973 = vmatprep.subr.mxu0 0.0
    %974 = vmatpush1.xpose.msra.mxu0 0.0
    %975 = vmatprep.subr.mxu0 0.0
    %976 = vmatpush1.xpose.msra.mxu0 0.0
    %977 = vmatprep.subr.mxu0 0.0
    %978 = vmatpush1.xpose.msra.mxu0 0.0
    %979 = vmatprep.subr.mxu0 0.0
    %980 = vmatpush1.xpose.msra.mxu0 0.0
    %981 = vmatprep.subr.mxu0 0.0
    %982 = vmatpush1.xpose.msra.mxu0 0.0
    %983 = vmatprep.subr.mxu0 0.0
    %984 = vmatpush1.xpose.msra.mxu0 0.0
    %985 = vmatprep.subr.mxu0 0.0
    %986 = vmatpush1.xpose.msra.mxu0 %v953
    %987 = vmatprep.subr.mxu0 0.0
    %988 = vmatpush2.xpose.msra.mxu0 0.0
    %989 = vmatprep.subr.mxu0 0.0
    %990 = vmatpush2.xpose.msra.mxu0 0.0
    %991 = vmatprep.subr.mxu0 0.0
    %992 = vmatpush2.xpose.msra.mxu0 0.0
    %993 = vmatprep.subr.mxu0 0.0
    %994 = vmatpush2.xpose.msra.mxu0 0.0
    %995 = vmatprep.subr.mxu0 0.0
    %996 = vmatpush2.xpose.msra.mxu0 0.0
    %997 = vmatprep.subr.mxu0 0.0
    %998 = vmatpush2.xpose.msra.mxu0 0.0
    %999 = vmatprep.subr.mxu0 0.0
    %1000 = vmatpush2.xpose.msra.mxu0 0.0
    %1001 = vmatprep.subr.mxu0 0.0
    %1002 = vmatpush2.xpose.msra.mxu0 0.0
    %1003 = vmatprep.subr.mxu0 0.0
    %1004 = vmatpush2.xpose.msra.mxu0 0.0
    %1005 = vmatprep.subr.mxu0 0.0
    %1006 = vmatpush2.xpose.msra.mxu0 0.0
    %1007 = vmatprep.subr.mxu0 0.0
    %1008 = vmatpush2.xpose.msra.mxu0 0.0
    %1009 = vmatprep.subr.mxu0 0.0
    %1010 = vmatpush2.xpose.msra.mxu0 0.0
    %1011 = vmatprep.subr.mxu0 0.0
    %1012 = vmatpush2.xpose.msra.mxu0 0.0
    %1013 = vmatprep.subr.mxu0 0.0
    %1014 = vmatpush2.xpose.msra.mxu0 0.0
    %1015 = vmatprep.subr.mxu0 0.0
    %1016 = vmatpush2.xpose.msra.mxu0 0.0
    %1017 = vmatprep.subr.mxu0 0.0
    %1018 = vmatpush2.xpose.msra.mxu0 0.0
    %1019 = vmatprep.mubr.f32.mxu0 0.0
    %1020 = vmatmul.mubr.f32.gmra.mxu0 %v950
    %v1021 = vpop.f32.mrf.mxu0
    %v1022 = vadd.f32 0.0, %v1021
    %v1023 = vpop.f32.mrf.mxu0
    %1024 = vdwg.mxu0
    %v1025 = vmul.f32 %v946, 0.35355338
    %v1026 = vmul.f32 %v1022, 0.35355338
    %v1027 = vlaneseq
    %v1028 = vshrl.u32 %v1027, 7
    %v1029 = vsub.s32 0, %v1028
    %v1030 = vrot.slane %v576, %v1029
    %v1031 = vlaneseq
    %v1032 = vshrl.u32 %v1031, 7
    %v1033 = vsub.s32 0, %v1032
    %v1034 = vrot.slane %v583, %v1033
    %v1037 = vadd.f32 %v1025, %v1030
    %v1038 = vadd.f32 %v1026, %v1034
    %v1039 = vsel %vm872, %v1037, -inf
    %1040 = vmax.xlane.f32.xlu0 %v1039
    %v1041 = vpop.xlane.xlu0 %1040
    %v1042 = vsel %vm872, %v1038, -inf
    %1043 = vmax.xlane.f32.xlu0 %v1042
    %v1044 = vpop.xlane.xlu0 %1043
    %v1045 = vsub.f32 %v1037, %v1041
    %v1046 = vsub.f32 %v1038, %v1044
    %v1047 = vmul.f32 %v1045, 1.442695
    %v1048 = vpow.pop %v1047
    %v1049 = vmul.f32 %v1046, 1.442695
    %v1050 = vpow.pop %v1049
    %v1051 = vsel %vm872, %v1048, 0.0
    %1052 = vadd.xlane.f32.xlu0 %v1051
    %v1053 = vpop.xlane.xlu0 %1052
    %v1054 = vsel %vm872, %v1050, 0.0
    %1055 = vadd.xlane.f32.xlu0 %v1054
    %v1056 = vpop.xlane.xlu0 %1055
    %v1057 = vrcp.pop %v1053
    %v1058 = vrcp.pop %v1056
    %v1059 = vmul.f32 %v1048, %v1057
    %v1060 = vmul.f32 %v1050, %v1058
    %v1062 = vsel %vm872, %v1059, 0
    %1064 = vmatprep.subr.mxu0 0.0
    %1065 = vmatpush1.msra.mxu0 0.0
    %1066 = vmatprep.subr.mxu0 0.0
    %1067 = vmatpush1.msra.mxu0 0.0
    %1068 = vmatprep.subr.mxu0 0.0
    %1069 = vmatpush1.msra.mxu0 0.0
    %1070 = vmatprep.subr.mxu0 0.0
    %1071 = vmatpush1.msra.mxu0 0.0
    %1072 = vmatprep.subr.mxu0 0.0
    %1073 = vmatpush1.msra.mxu0 0.0
    %1074 = vmatprep.subr.mxu0 0.0
    %1075 = vmatpush1.msra.mxu0 0.0
    %1076 = vmatprep.subr.mxu0 0.0
    %1077 = vmatpush1.msra.mxu0 0.0
    %1078 = vmatprep.subr.mxu0 0.0
    %1079 = vmatpush1.msra.mxu0 0.0
    %1080 = vmatprep.subr.mxu0 0.0
    %1081 = vmatpush1.msra.mxu0 0.0
    %1082 = vmatprep.subr.mxu0 0.0
    %1083 = vmatpush1.msra.mxu0 0.0
    %1084 = vmatprep.subr.mxu0 0.0
    %1085 = vmatpush1.msra.mxu0 0.0
    %1086 = vmatprep.subr.mxu0 0.0
    %1087 = vmatpush1.msra.mxu0 0.0
    %1088 = vmatprep.subr.mxu0 0.0
    %1089 = vmatpush1.msra.mxu0 0.0
    %1090 = vmatprep.subr.mxu0 0.0
    %1091 = vmatpush1.msra.mxu0 0.0
    %1092 = vmatprep.subr.mxu0 0.0
    %1093 = vmatpush1.msra.mxu0 0.0
    %1094 = vmatprep.subr.mxu0 0.0
    %1095 = vmatpush1.msra.mxu0 %v864
    %1096 = vmatprep.subr.mxu0 0.0
    %1097 = vmatpush2.msra.mxu0 0.0
    %1098 = vmatprep.subr.mxu0 0.0
    %1099 = vmatpush2.msra.mxu0 0.0
    %1100 = vmatprep.subr.mxu0 0.0
    %1101 = vmatpush2.msra.mxu0 0.0
    %1102 = vmatprep.subr.mxu0 0.0
    %1103 = vmatpush2.msra.mxu0 0.0
    %1104 = vmatprep.subr.mxu0 0.0
    %1105 = vmatpush2.msra.mxu0 0.0
    %1106 = vmatprep.subr.mxu0 0.0
    %1107 = vmatpush2.msra.mxu0 0.0
    %1108 = vmatprep.subr.mxu0 0.0
    %1109 = vmatpush2.msra.mxu0 0.0
    %1110 = vmatprep.subr.mxu0 0.0
    %1111 = vmatpush2.msra.mxu0 0.0
    %1112 = vmatprep.subr.mxu0 0.0
    %1113 = vmatpush2.msra.mxu0 0.0
    %1114 = vmatprep.subr.mxu0 0.0
    %1115 = vmatpush2.msra.mxu0 0.0
    %1116 = vmatprep.subr.mxu0 0.0
    %1117 = vmatpush2.msra.mxu0 0.0
    %1118 = vmatprep.subr.mxu0 0.0
    %1119 = vmatpush2.msra.mxu0 0.0
    %1120 = vmatprep.subr.mxu0 0.0
    %1121 = vmatpush2.msra.mxu0 0.0
    %1122 = vmatprep.subr.mxu0 0.0
    %1123 = vmatpush2.msra.mxu0 0.0
    %1124 = vmatprep.subr.mxu0 0.0
    %1125 = vmatpush2.msra.mxu0 0.0
    %1126 = vmatprep.subr.mxu0 0.0
    %1127 = vmatpush2.msra.mxu0 0.0
    %1128 = vmatprep.mubr.f32.mxu0 0.0
    %1129 = vmatmul.mubr.f32.gmra.mxu0 %v1062
    %v1130 = vpop.f32.mrf.mxu0
    %v1131 = vadd.f32 0.0, %v1130
    %v1132 = vpop.f32.mrf.mxu0
    %1133 = vdwg.mxu0
    %v1135 = vsel %vm872, %v1060, 0
    %1137 = vmatprep.subr.mxu0 0.0
    %1138 = vmatpush1.msra.mxu0 0.0
    %1139 = vmatprep.subr.mxu0 0.0
    %1140 = vmatpush1.msra.mxu0 0.0
    %1141 = vmatprep.subr.mxu0 0.0
    %1142 = vmatpush1.msra.mxu0 0.0
    %1143 = vmatprep.subr.mxu0 0.0
    %1144 = vmatpush1.msra.mxu0 0.0
    %1145 = vmatprep.subr.mxu0 0.0
    %1146 = vmatpush1.msra.mxu0 0.0
    %1147 = vmatprep.subr.mxu0 0.0
    %1148 = vmatpush1.msra.mxu0 0.0
    %1149 = vmatprep.subr.mxu0 0.0
    %1150 = vmatpush1.msra.mxu0 0.0
    %1151 = vmatprep.subr.mxu0 0.0
    %1152 = vmatpush1.msra.mxu0 0.0
    %1153 = vmatprep.subr.mxu0 0.0
    %1154 = vmatpush1.msra.mxu0 0.0
    %1155 = vmatprep.subr.mxu0 0.0
    %1156 = vmatpush1.msra.mxu0 0.0
    %1157 = vmatprep.subr.mxu0 0.0
    %1158 = vmatpush1.msra.mxu0 0.0
    %1159 = vmatprep.subr.mxu0 0.0
    %1160 = vmatpush1.msra.mxu0 0.0
    %1161 = vmatprep.subr.mxu0 0.0
    %1162 = vmatpush1.msra.mxu0 0.0
    %1163 = vmatprep.subr.mxu0 0.0
    %1164 = vmatpush1.msra.mxu0 0.0
    %1165 = vmatprep.subr.mxu0 0.0
    %1166 = vmatpush1.msra.mxu0 0.0
    %1167 = vmatprep.subr.mxu0 0.0
    %1168 = vmatpush1.msra.mxu0 %v869
    %1169 = vmatprep.subr.mxu0 0.0
    %1170 = vmatpush2.msra.mxu0 0.0
    %1171 = vmatprep.subr.mxu0 0.0
    %1172 = vmatpush2.msra.mxu0 0.0
    %1173 = vmatprep.subr.mxu0 0.0
    %1174 = vmatpush2.msra.mxu0 0.0
    %1175 = vmatprep.subr.mxu0 0.0
    %1176 = vmatpush2.msra.mxu0 0.0
    %1177 = vmatprep.subr.mxu0 0.0
    %1178 = vmatpush2.msra.mxu0 0.0
    %1179 = vmatprep.subr.mxu0 0.0
    %1180 = vmatpush2.msra.mxu0 0.0
    %1181 = vmatprep.subr.mxu0 0.0
    %1182 = vmatpush2.msra.mxu0 0.0
    %1183 = vmatprep.subr.mxu0 0.0
    %1184 = vmatpush2.msra.mxu0 0.0
    %1185 = vmatprep.subr.mxu0 0.0
    %1186 = vmatpush2.msra.mxu0 0.0
    %1187 = vmatprep.subr.mxu0 0.0
    %1188 = vmatpush2.msra.mxu0 0.0
    %1189 = vmatprep.subr.mxu0 0.0
    %1190 = vmatpush2.msra.mxu0 0.0
    %1191 = vmatprep.subr.mxu0 0.0
    %1192 = vmatpush2.msra.mxu0 0.0
    %1193 = vmatprep.subr.mxu0 0.0
    %1194 = vmatpush2.msra.mxu0 0.0
    %1195 = vmatprep.subr.mxu0 0.0
    %1196 = vmatpush2.msra.mxu0 0.0
    %1197 = vmatprep.subr.mxu0 0.0
    %1198 = vmatpush2.msra.mxu0 0.0
    %1199 = vmatprep.subr.mxu0 0.0
    %1200 = vmatpush2.msra.mxu0 0.0
    %1201 = vmatprep.mubr.f32.mxu0 0.0
    %1202 = vmatmul.mubr.f32.gmra.mxu0 %v1135
    %v1203 = vpop.f32.mrf.mxu0
    %v1204 = vadd.f32 0.0, %v1203
    %v1205 = vpop.f32.mrf.mxu0
    %1206 = vdwg.mxu0
    %1207 = vrot.lane.b32.xlu0 %v702, 120
    %v1208 = vpop.permute.xlu0 %1207
    %1209 = vrot.lane.b32.xlu0 %v783, 120
    %v1210 = vpop.permute.xlu0 %1209
    %v1211 = vsel %vm872, %v1208, 0
    %v1213 = vsel %vm872, %v1210, 0
    %1215 = vmatprep.subr.mxu0 0.0
    %1216 = vmatpush1.xpose.msra.mxu0 0.0
    %1217 = vmatprep.subr.mxu0 0.0
    %1218 = vmatpush1.xpose.msra.mxu0 0.0
    %1219 = vmatprep.subr.mxu0 0.0
    %1220 = vmatpush1.xpose.msra.mxu0 0.0
    %1221 = vmatprep.subr.mxu0 0.0
    %1222 = vmatpush1.xpose.msra.mxu0 0.0
    %1223 = vmatprep.subr.mxu0 0.0
    %1224 = vmatpush1.xpose.msra.mxu0 0.0
    %1225 = vmatprep.subr.mxu0 0.0
    %1226 = vmatpush1.xpose.msra.mxu0 0.0
    %1227 = vmatprep.subr.mxu0 0.0
    %1228 = vmatpush1.xpose.msra.mxu0 0.0
    %1229 = vmatprep.subr.mxu0 0.0
    %1230 = vmatpush1.xpose.msra.mxu0 0.0
    %1231 = vmatprep.subr.mxu0 0.0
    %1232 = vmatpush1.xpose.msra.mxu0 0.0
    %1233 = vmatprep.subr.mxu0 0.0
    %1234 = vmatpush1.xpose.msra.mxu0 0.0
    %1235 = vmatprep.subr.mxu0 0.0
    %1236 = vmatpush1.xpose.msra.mxu0 0.0
    %1237 = vmatprep.subr.mxu0 0.0
    %1238 = vmatpush1.xpose.msra.mxu0 0.0
    %1239 = vmatprep.subr.mxu0 0.0
    %1240 = vmatpush1.xpose.msra.mxu0 0.0
    %1241 = vmatprep.subr.mxu0 0.0
    %1242 = vmatpush1.xpose.msra.mxu0 0.0
    %1243 = vmatprep.subr.mxu0 0.0
    %1244 = vmatpush1.xpose.msra.mxu0 0.0
    %1245 = vmatprep.subr.mxu0 0.0
    %1246 = vmatpush1.xpose.msra.mxu0 %v1213
    %1247 = vmatprep.subr.mxu0 0.0
    %1248 = vmatpush2.xpose.msra.mxu0 0.0
    %1249 = vmatprep.subr.mxu0 0.0
    %1250 = vmatpush2.xpose.msra.mxu0 0.0
    %1251 = vmatprep.subr.mxu0 0.0
    %1252 = vmatpush2.xpose.msra.mxu0 0.0
    %1253 = vmatprep.subr.mxu0 0.0
    %1254 = vmatpush2.xpose.msra.mxu0 0.0
    %1255 = vmatprep.subr.mxu0 0.0
    %1256 = vmatpush2.xpose.msra.mxu0 0.0
    %1257 = vmatprep.subr.mxu0 0.0
    %1258 = vmatpush2.xpose.msra.mxu0 0.0
    %1259 = vmatprep.subr.mxu0 0.0
    %1260 = vmatpush2.xpose.msra.mxu0 0.0
    %1261 = vmatprep.subr.mxu0 0.0
    %1262 = vmatpush2.xpose.msra.mxu0 0.0
    %1263 = vmatprep.subr.mxu0 0.0
    %1264 = vmatpush2.xpose.msra.mxu0 0.0
    %1265 = vmatprep.subr.mxu0 0.0
    %1266 = vmatpush2.xpose.msra.mxu0 0.0
    %1267 = vmatprep.subr.mxu0 0.0
    %1268 = vmatpush2.xpose.msra.mxu0 0.0
    %1269 = vmatprep.subr.mxu0 0.0
    %1270 = vmatpush2.xpose.msra.mxu0 0.0
    %1271 = vmatprep.subr.mxu0 0.0
    %1272 = vmatpush2.xpose.msra.mxu0 0.0
    %1273 = vmatprep.subr.mxu0 0.0
    %1274 = vmatpush2.xpose.msra.mxu0 0.0
    %1275 = vmatprep.subr.mxu0 0.0
    %1276 = vmatpush2.xpose.msra.mxu0 0.0
    %1277 = vmatprep.subr.mxu0 0.0
    %1278 = vmatpush2.xpose.msra.mxu0 0.0
    %1279 = vmatprep.mubr.f32.mxu0 0.0
    %1280 = vmatmul.mubr.f32.gmra.mxu0 %v1211
    %v1281 = vpop.f32.mrf.mxu0
    %v1282 = vadd.f32 0.0, %v1281
    %v1283 = vpop.f32.mrf.mxu0
    %1284 = vdwg.mxu0
    %1285 = vrot.lane.b32.xlu0 %v707, 120
    %v1286 = vpop.permute.xlu0 %1285
    %1287 = vrot.lane.b32.xlu0 %v788, 120
    %v1288 = vpop.permute.xlu0 %1287
    %v1289 = vsel %vm872, %v1286, 0
    %v1291 = vsel %vm872, %v1288, 0
    %1293 = vmatprep.subr.mxu0 0.0
    %1294 = vmatpush1.xpose.msra.mxu0 0.0
    %1295 = vmatprep.subr.mxu0 0.0
    %1296 = vmatpush1.xpose.msra.mxu0 0.0
    %1297 = vmatprep.subr.mxu0 0.0
    %1298 = vmatpush1.xpose.msra.mxu0 0.0
    %1299 = vmatprep.subr.mxu0 0.0
    %1300 = vmatpush1.xpose.msra.mxu0 0.0
    %1301 = vmatprep.subr.mxu0 0.0
    %1302 = vmatpush1.xpose.msra.mxu0 0.0
    %1303 = vmatprep.subr.mxu0 0.0
    %1304 = vmatpush1.xpose.msra.mxu0 0.0
    %1305 = vmatprep.subr.mxu0 0.0
    %1306 = vmatpush1.xpose.msra.mxu0 0.0
    %1307 = vmatprep.subr.mxu0 0.0
    %1308 = vmatpush1.xpose.msra.mxu0 0.0
    %1309 = vmatprep.subr.mxu0 0.0
    %1310 = vmatpush1.xpose.msra.mxu0 0.0
    %1311 = vmatprep.subr.mxu0 0.0
    %1312 = vmatpush1.xpose.msra.mxu0 0.0
    %1313 = vmatprep.subr.mxu0 0.0
    %1314 = vmatpush1.xpose.msra.mxu0 0.0
    %1315 = vmatprep.subr.mxu0 0.0
    %1316 = vmatpush1.xpose.msra.mxu0 0.0
    %1317 = vmatprep.subr.mxu0 0.0
    %1318 = vmatpush1.xpose.msra.mxu0 0.0
    %1319 = vmatprep.subr.mxu0 0.0
    %1320 = vmatpush1.xpose.msra.mxu0 0.0
    %1321 = vmatprep.subr.mxu0 0.0
    %1322 = vmatpush1.xpose.msra.mxu0 0.0
    %1323 = vmatprep.subr.mxu0 0.0
    %1324 = vmatpush1.xpose.msra.mxu0 %v1291
    %1325 = vmatprep.subr.mxu0 0.0
    %1326 = vmatpush2.xpose.msra.mxu0 0.0
    %1327 = vmatprep.subr.mxu0 0.0
    %1328 = vmatpush2.xpose.msra.mxu0 0.0
    %1329 = vmatprep.subr.mxu0 0.0
    %1330 = vmatpush2.xpose.msra.mxu0 0.0
    %1331 = vmatprep.subr.mxu0 0.0
    %1332 = vmatpush2.xpose.msra.mxu0 0.0
    %1333 = vmatprep.subr.mxu0 0.0
    %1334 = vmatpush2.xpose.msra.mxu0 0.0
    %1335 = vmatprep.subr.mxu0 0.0
    %1336 = vmatpush2.xpose.msra.mxu0 0.0
    %1337 = vmatprep.subr.mxu0 0.0
    %1338 = vmatpush2.xpose.msra.mxu0 0.0
    %1339 = vmatprep.subr.mxu0 0.0
    %1340 = vmatpush2.xpose.msra.mxu0 0.0
    %1341 = vmatprep.subr.mxu0 0.0
    %1342 = vmatpush2.xpose.msra.mxu0 0.0
    %1343 = vmatprep.subr.mxu0 0.0
    %1344 = vmatpush2.xpose.msra.mxu0 0.0
    %1345 = vmatprep.subr.mxu0 0.0
    %1346 = vmatpush2.xpose.msra.mxu0 0.0
    %1347 = vmatprep.subr.mxu0 0.0
    %1348 = vmatpush2.xpose.msra.mxu0 0.0
    %1349 = vmatprep.subr.mxu0 0.0
    %1350 = vmatpush2.xpose.msra.mxu0 0.0
    %1351 = vmatprep.subr.mxu0 0.0
    %1352 = vmatpush2.xpose.msra.mxu0 0.0
    %1353 = vmatprep.subr.mxu0 0.0
    %1354 = vmatpush2.xpose.msra.mxu0 0.0
    %1355 = vmatprep.subr.mxu0 0.0
    %1356 = vmatpush2.xpose.msra.mxu0 0.0
    %1357 = vmatprep.mubr.f32.mxu0 0.0
    %1358 = vmatmul.mubr.f32.gmra.mxu0 %v1289
    %v1359 = vpop.f32.mrf.mxu0
    %v1360 = vadd.f32 0.0, %v1359
    %v1361 = vpop.f32.mrf.mxu0
    %1362 = vdwg.mxu0
    %v1363 = vmul.f32 %v1282, 0.35355338
    %v1364 = vmul.f32 %v1360, 0.35355338
    %v1365 = vadd.f32 %v1363, %v1030
    %v1366 = vadd.f32 %v1364, %v1034
    %v1367 = vsel %vm872, %v1365, -inf
    %1368 = vmax.xlane.f32.xlu0 %v1367
    %v1369 = vpop.xlane.xlu0 %1368
    %v1370 = vsel %vm872, %v1366, -inf
    %1371 = vmax.xlane.f32.xlu0 %v1370
    %v1372 = vpop.xlane.xlu0 %1371
    %v1373 = vsub.f32 %v1365, %v1369
    %v1374 = vsub.f32 %v1366, %v1372
    %v1375 = vmul.f32 %v1373, 1.442695
    %v1376 = vpow.pop %v1375
    %v1377 = vmul.f32 %v1374, 1.442695
    %v1378 = vpow.pop %v1377
    %v1379 = vsel %vm872, %v1376, 0.0
    %1380 = vadd.xlane.f32.xlu0 %v1379
    %v1381 = vpop.xlane.xlu0 %1380
    %v1382 = vsel %vm872, %v1378, 0.0
    %1383 = vadd.xlane.f32.xlu0 %v1382
    %v1384 = vpop.xlane.xlu0 %1383
    %v1385 = vrcp.pop %v1381
    %v1386 = vrcp.pop %v1384
    %v1387 = vmul.f32 %v1376, %v1385
    %v1388 = vmul.f32 %v1378, %v1386
    %1390 = vrot.lane.b32.xlu0 %v864, 120
    %v1391 = vpop.permute.xlu0 %1390
    %v1394 = vsel %vm872, %v1387, 0
    %1396 = vmatprep.subr.mxu0 0.0
    %1397 = vmatpush1.msra.mxu0 0.0
    %1398 = vmatprep.subr.mxu0 0.0
    %1399 = vmatpush1.msra.mxu0 0.0
    %1400 = vmatprep.subr.mxu0 0.0
    %1401 = vmatpush1.msra.mxu0 0.0
    %1402 = vmatprep.subr.mxu0 0.0
    %1403 = vmatpush1.msra.mxu0 0.0
    %1404 = vmatprep.subr.mxu0 0.0
    %1405 = vmatpush1.msra.mxu0 0.0
    %1406 = vmatprep.subr.mxu0 0.0
    %1407 = vmatpush1.msra.mxu0 0.0
    %1408 = vmatprep.subr.mxu0 0.0
    %1409 = vmatpush1.msra.mxu0 0.0
    %1410 = vmatprep.subr.mxu0 0.0
    %1411 = vmatpush1.msra.mxu0 0.0
    %1412 = vmatprep.subr.mxu0 0.0
    %1413 = vmatpush1.msra.mxu0 0.0
    %1414 = vmatprep.subr.mxu0 0.0
    %1415 = vmatpush1.msra.mxu0 0.0
    %1416 = vmatprep.subr.mxu0 0.0
    %1417 = vmatpush1.msra.mxu0 0.0
    %1418 = vmatprep.subr.mxu0 0.0
    %1419 = vmatpush1.msra.mxu0 0.0
    %1420 = vmatprep.subr.mxu0 0.0
    %1421 = vmatpush1.msra.mxu0 0.0
    %1422 = vmatprep.subr.mxu0 0.0
    %1423 = vmatpush1.msra.mxu0 0.0
    %1424 = vmatprep.subr.mxu0 0.0
    %1425 = vmatpush1.msra.mxu0 0.0
    %1426 = vmatprep.subr.mxu0 0.0
    %1427 = vmatpush1.msra.mxu0 %v1391
    %1428 = vmatprep.subr.mxu0 0.0
    %1429 = vmatpush2.msra.mxu0 0.0
    %1430 = vmatprep.subr.mxu0 0.0
    %1431 = vmatpush2.msra.mxu0 0.0
    %1432 = vmatprep.subr.mxu0 0.0
    %1433 = vmatpush2.msra.mxu0 0.0
    %1434 = vmatprep.subr.mxu0 0.0
    %1435 = vmatpush2.msra.mxu0 0.0
    %1436 = vmatprep.subr.mxu0 0.0
    %1437 = vmatpush2.msra.mxu0 0.0
    %1438 = vmatprep.subr.mxu0 0.0
    %1439 = vmatpush2.msra.mxu0 0.0
    %1440 = vmatprep.subr.mxu0 0.0
    %1441 = vmatpush2.msra.mxu0 0.0
    %1442 = vmatprep.subr.mxu0 0.0
    %1443 = vmatpush2.msra.mxu0 0.0
    %1444 = vmatprep.subr.mxu0 0.0
    %1445 = vmatpush2.msra.mxu0 0.0
    %1446 = vmatprep.subr.mxu0 0.0
    %1447 = vmatpush2.msra.mxu0 0.0
    %1448 = vmatprep.subr.mxu0 0.0
    %1449 = vmatpush2.msra.mxu0 0.0
    %1450 = vmatprep.subr.mxu0 0.0
    %1451 = vmatpush2.msra.mxu0 0.0
    %1452 = vmatprep.subr.mxu0 0.0
    %1453 = vmatpush2.msra.mxu0 0.0
    %1454 = vmatprep.subr.mxu0 0.0
    %1455 = vmatpush2.msra.mxu0 0.0
    %1456 = vmatprep.subr.mxu0 0.0
    %1457 = vmatpush2.msra.mxu0 0.0
    %1458 = vmatprep.subr.mxu0 0.0
    %1459 = vmatpush2.msra.mxu0 0.0
    %1460 = vmatprep.mubr.f32.mxu0 0.0
    %1461 = vmatmul.mubr.f32.gmra.mxu0 %v1394
    %v1462 = vpop.f32.mrf.mxu0
    %v1463 = vadd.f32 0.0, %v1462
    %v1464 = vpop.f32.mrf.mxu0
    %1465 = vdwg.mxu0
    %1467 = vrot.lane.b32.xlu0 %v869, 120
    %v1468 = vpop.permute.xlu0 %1467
    %v1471 = vsel %vm872, %v1388, 0
    %1473 = vmatprep.subr.mxu0 0.0
    %1474 = vmatpush1.msra.mxu0 0.0
    %1475 = vmatprep.subr.mxu0 0.0
    %1476 = vmatpush1.msra.mxu0 0.0
    %1477 = vmatprep.subr.mxu0 0.0
    %1478 = vmatpush1.msra.mxu0 0.0
    %1479 = vmatprep.subr.mxu0 0.0
    %1480 = vmatpush1.msra.mxu0 0.0
    %1481 = vmatprep.subr.mxu0 0.0
    %1482 = vmatpush1.msra.mxu0 0.0
    %1483 = vmatprep.subr.mxu0 0.0
    %1484 = vmatpush1.msra.mxu0 0.0
    %1485 = vmatprep.subr.mxu0 0.0
    %1486 = vmatpush1.msra.mxu0 0.0
    %1487 = vmatprep.subr.mxu0 0.0
    %1488 = vmatpush1.msra.mxu0 0.0
    %1489 = vmatprep.subr.mxu0 0.0
    %1490 = vmatpush1.msra.mxu0 0.0
    %1491 = vmatprep.subr.mxu0 0.0
    %1492 = vmatpush1.msra.mxu0 0.0
    %1493 = vmatprep.subr.mxu0 0.0
    %1494 = vmatpush1.msra.mxu0 0.0
    %1495 = vmatprep.subr.mxu0 0.0
    %1496 = vmatpush1.msra.mxu0 0.0
    %1497 = vmatprep.subr.mxu0 0.0
    %1498 = vmatpush1.msra.mxu0 0.0
    %1499 = vmatprep.subr.mxu0 0.0
    %1500 = vmatpush1.msra.mxu0 0.0
    %1501 = vmatprep.subr.mxu0 0.0
    %1502 = vmatpush1.msra.mxu0 0.0
    %1503 = vmatprep.subr.mxu0 0.0
    %1504 = vmatpush1.msra.mxu0 %v1468
    %1505 = vmatprep.subr.mxu0 0.0
    %1506 = vmatpush2.msra.mxu0 0.0
    %1507 = vmatprep.subr.mxu0 0.0
    %1508 = vmatpush2.msra.mxu0 0.0
    %1509 = vmatprep.subr.mxu0 0.0
    %1510 = vmatpush2.msra.mxu0 0.0
    %1511 = vmatprep.subr.mxu0 0.0
    %1512 = vmatpush2.msra.mxu0 0.0
    %1513 = vmatprep.subr.mxu0 0.0
    %1514 = vmatpush2.msra.mxu0 0.0
    %1515 = vmatprep.subr.mxu0 0.0
    %1516 = vmatpush2.msra.mxu0 0.0
    %1517 = vmatprep.subr.mxu0 0.0
    %1518 = vmatpush2.msra.mxu0 0.0
    %1519 = vmatprep.subr.mxu0 0.0
    %1520 = vmatpush2.msra.mxu0 0.0
    %1521 = vmatprep.subr.mxu0 0.0
    %1522 = vmatpush2.msra.mxu0 0.0
    %1523 = vmatprep.subr.mxu0 0.0
    %1524 = vmatpush2.msra.mxu0 0.0
    %1525 = vmatprep.subr.mxu0 0.0
    %1526 = vmatpush2.msra.mxu0 0.0
    %1527 = vmatprep.subr.mxu0 0.0
    %1528 = vmatpush2.msra.mxu0 0.0
    %1529 = vmatprep.subr.mxu0 0.0
    %1530 = vmatpush2.msra.mxu0 0.0
    %1531 = vmatprep.subr.mxu0 0.0
    %1532 = vmatpush2.msra.mxu0 0.0
    %1533 = vmatprep.subr.mxu0 0.0
    %1534 = vmatpush2.msra.mxu0 0.0
    %1535 = vmatprep.subr.mxu0 0.0
    %1536 = vmatpush2.msra.mxu0 0.0
    %1537 = vmatprep.mubr.f32.mxu0 0.0
    %1538 = vmatmul.mubr.f32.gmra.mxu0 %v1471
    %v1539 = vpop.f32.mrf.mxu0
    %v1540 = vadd.f32 0.0, %v1539
    %v1541 = vpop.f32.mrf.mxu0
    %1542 = vdwg.mxu0
    %1543 = vrot.lane.b32.xlu0 %v702, 112
    %v1544 = vpop.permute.xlu0 %1543
    %1545 = vrot.lane.b32.xlu0 %v783, 112
    %v1546 = vpop.permute.xlu0 %1545
    %v1547 = vsel %vm872, %v1544, 0
    %v1549 = vsel %vm872, %v1546, 0
    %1551 = vmatprep.subr.mxu0 0.0
    %1552 = vmatpush1.xpose.msra.mxu0 0.0
    %1553 = vmatprep.subr.mxu0 0.0
    %1554 = vmatpush1.xpose.msra.mxu0 0.0
    %1555 = vmatprep.subr.mxu0 0.0
    %1556 = vmatpush1.xpose.msra.mxu0 0.0
    %1557 = vmatprep.subr.mxu0 0.0
    %1558 = vmatpush1.xpose.msra.mxu0 0.0
    %1559 = vmatprep.subr.mxu0 0.0
    %1560 = vmatpush1.xpose.msra.mxu0 0.0
    %1561 = vmatprep.subr.mxu0 0.0
    %1562 = vmatpush1.xpose.msra.mxu0 0.0
    %1563 = vmatprep.subr.mxu0 0.0
    %1564 = vmatpush1.xpose.msra.mxu0 0.0
    %1565 = vmatprep.subr.mxu0 0.0
    %1566 = vmatpush1.xpose.msra.mxu0 0.0
    %1567 = vmatprep.subr.mxu0 0.0
    %1568 = vmatpush1.xpose.msra.mxu0 0.0
    %1569 = vmatprep.subr.mxu0 0.0
    %1570 = vmatpush1.xpose.msra.mxu0 0.0
    %1571 = vmatprep.subr.mxu0 0.0
    %1572 = vmatpush1.xpose.msra.mxu0 0.0
    %1573 = vmatprep.subr.mxu0 0.0
    %1574 = vmatpush1.xpose.msra.mxu0 0.0
    %1575 = vmatprep.subr.mxu0 0.0
    %1576 = vmatpush1.xpose.msra.mxu0 0.0
    %1577 = vmatprep.subr.mxu0 0.0
    %1578 = vmatpush1.xpose.msra.mxu0 0.0
    %1579 = vmatprep.subr.mxu0 0.0
    %1580 = vmatpush1.xpose.msra.mxu0 0.0
    %1581 = vmatprep.subr.mxu0 0.0
    %1582 = vmatpush1.xpose.msra.mxu0 %v1549
    %1583 = vmatprep.subr.mxu0 0.0
    %1584 = vmatpush2.xpose.msra.mxu0 0.0
    %1585 = vmatprep.subr.mxu0 0.0
    %1586 = vmatpush2.xpose.msra.mxu0 0.0
    %1587 = vmatprep.subr.mxu0 0.0
    %1588 = vmatpush2.xpose.msra.mxu0 0.0
    %1589 = vmatprep.subr.mxu0 0.0
    %1590 = vmatpush2.xpose.msra.mxu0 0.0
    %1591 = vmatprep.subr.mxu0 0.0
    %1592 = vmatpush2.xpose.msra.mxu0 0.0
    %1593 = vmatprep.subr.mxu0 0.0
    %1594 = vmatpush2.xpose.msra.mxu0 0.0
    %1595 = vmatprep.subr.mxu0 0.0
    %1596 = vmatpush2.xpose.msra.mxu0 0.0
    %1597 = vmatprep.subr.mxu0 0.0
    %1598 = vmatpush2.xpose.msra.mxu0 0.0
    %1599 = vmatprep.subr.mxu0 0.0
    %1600 = vmatpush2.xpose.msra.mxu0 0.0
    %1601 = vmatprep.subr.mxu0 0.0
    %1602 = vmatpush2.xpose.msra.mxu0 0.0
    %1603 = vmatprep.subr.mxu0 0.0
    %1604 = vmatpush2.xpose.msra.mxu0 0.0
    %1605 = vmatprep.subr.mxu0 0.0
    %1606 = vmatpush2.xpose.msra.mxu0 0.0
    %1607 = vmatprep.subr.mxu0 0.0
    %1608 = vmatpush2.xpose.msra.mxu0 0.0
    %1609 = vmatprep.subr.mxu0 0.0
    %1610 = vmatpush2.xpose.msra.mxu0 0.0
    %1611 = vmatprep.subr.mxu0 0.0
    %1612 = vmatpush2.xpose.msra.mxu0 0.0
    %1613 = vmatprep.subr.mxu0 0.0
    %1614 = vmatpush2.xpose.msra.mxu0 0.0
    %1615 = vmatprep.mubr.f32.mxu0 0.0
    %1616 = vmatmul.mubr.f32.gmra.mxu0 %v1547
    %v1617 = vpop.f32.mrf.mxu0
    %v1618 = vadd.f32 0.0, %v1617
    %v1619 = vpop.f32.mrf.mxu0
    %1620 = vdwg.mxu0
    %1621 = vrot.lane.b32.xlu0 %v707, 112
    %v1622 = vpop.permute.xlu0 %1621
    %1623 = vrot.lane.b32.xlu0 %v788, 112
    %v1624 = vpop.permute.xlu0 %1623
    %v1625 = vsel %vm872, %v1622, 0
    %v1627 = vsel %vm872, %v1624, 0
    %1629 = vmatprep.subr.mxu0 0.0
    %1630 = vmatpush1.xpose.msra.mxu0 0.0
    %1631 = vmatprep.subr.mxu0 0.0
    %1632 = vmatpush1.xpose.msra.mxu0 0.0
    %1633 = vmatprep.subr.mxu0 0.0
    %1634 = vmatpush1.xpose.msra.mxu0 0.0
    %1635 = vmatprep.subr.mxu0 0.0
    %1636 = vmatpush1.xpose.msra.mxu0 0.0
    %1637 = vmatprep.subr.mxu0 0.0
    %1638 = vmatpush1.xpose.msra.mxu0 0.0
    %1639 = vmatprep.subr.mxu0 0.0
    %1640 = vmatpush1.xpose.msra.mxu0 0.0
    %1641 = vmatprep.subr.mxu0 0.0
    %1642 = vmatpush1.xpose.msra.mxu0 0.0
    %1643 = vmatprep.subr.mxu0 0.0
    %1644 = vmatpush1.xpose.msra.mxu0 0.0
    %1645 = vmatprep.subr.mxu0 0.0
    %1646 = vmatpush1.xpose.msra.mxu0 0.0
    %1647 = vmatprep.subr.mxu0 0.0
    %1648 = vmatpush1.xpose.msra.mxu0 0.0
    %1649 = vmatprep.subr.mxu0 0.0
    %1650 = vmatpush1.xpose.msra.mxu0 0.0
    %1651 = vmatprep.subr.mxu0 0.0
    %1652 = vmatpush1.xpose.msra.mxu0 0.0
    %1653 = vmatprep.subr.mxu0 0.0
    %1654 = vmatpush1.xpose.msra.mxu0 0.0
    %1655 = vmatprep.subr.mxu0 0.0
    %1656 = vmatpush1.xpose.msra.mxu0 0.0
    %1657 = vmatprep.subr.mxu0 0.0
    %1658 = vmatpush1.xpose.msra.mxu0 0.0
    %1659 = vmatprep.subr.mxu0 0.0
    %1660 = vmatpush1.xpose.msra.mxu0 %v1627
    %1661 = vmatprep.subr.mxu0 0.0
    %1662 = vmatpush2.xpose.msra.mxu0 0.0
    %1663 = vmatprep.subr.mxu0 0.0
    %1664 = vmatpush2.xpose.msra.mxu0 0.0
    %1665 = vmatprep.subr.mxu0 0.0
    %1666 = vmatpush2.xpose.msra.mxu0 0.0
    %1667 = vmatprep.subr.mxu0 0.0
    %1668 = vmatpush2.xpose.msra.mxu0 0.0
    %1669 = vmatprep.subr.mxu0 0.0
    %1670 = vmatpush2.xpose.msra.mxu0 0.0
    %1671 = vmatprep.subr.mxu0 0.0
    %1672 = vmatpush2.xpose.msra.mxu0 0.0
    %1673 = vmatprep.subr.mxu0 0.0
    %1674 = vmatpush2.xpose.msra.mxu0 0.0
    %1675 = vmatprep.subr.mxu0 0.0
    %1676 = vmatpush2.xpose.msra.mxu0 0.0
    %1677 = vmatprep.subr.mxu0 0.0
    %1678 = vmatpush2.xpose.msra.mxu0 0.0
    %1679 = vmatprep.subr.mxu0 0.0
    %1680 = vmatpush2.xpose.msra.mxu0 0.0
    %1681 = vmatprep.subr.mxu0 0.0
    %1682 = vmatpush2.xpose.msra.mxu0 0.0
    %1683 = vmatprep.subr.mxu0 0.0
    %1684 = vmatpush2.xpose.msra.mxu0 0.0
    %1685 = vmatprep.subr.mxu0 0.0
    %1686 = vmatpush2.xpose.msra.mxu0 0.0
    %1687 = vmatprep.subr.mxu0 0.0
    %1688 = vmatpush2.xpose.msra.mxu0 0.0
    %1689 = vmatprep.subr.mxu0 0.0
    %1690 = vmatpush2.xpose.msra.mxu0 0.0
    %1691 = vmatprep.subr.mxu0 0.0
    %1692 = vmatpush2.xpose.msra.mxu0 0.0
    %1693 = vmatprep.mubr.f32.mxu0 0.0
    %1694 = vmatmul.mubr.f32.gmra.mxu0 %v1625
    %v1695 = vpop.f32.mrf.mxu0
    %v1696 = vadd.f32 0.0, %v1695
    %v1697 = vpop.f32.mrf.mxu0
    %1698 = vdwg.mxu0
    %v1699 = vmul.f32 %v1618, 0.35355338
    %v1700 = vmul.f32 %v1696, 0.35355338
    %v1701 = vadd.f32 %v1699, %v1030
    %v1702 = vadd.f32 %v1700, %v1034
    %v1703 = vsel %vm872, %v1701, -inf
    %1704 = vmax.xlane.f32.xlu0 %v1703
    %v1705 = vpop.xlane.xlu0 %1704
    %v1706 = vsel %vm872, %v1702, -inf
    %1707 = vmax.xlane.f32.xlu0 %v1706
    %v1708 = vpop.xlane.xlu0 %1707
    %v1709 = vsub.f32 %v1701, %v1705
    %v1710 = vsub.f32 %v1702, %v1708
    %v1711 = vmul.f32 %v1709, 1.442695
    %v1712 = vpow.pop %v1711
    %v1713 = vmul.f32 %v1710, 1.442695
    %v1714 = vpow.pop %v1713
    %v1715 = vsel %vm872, %v1712, 0.0
    %1716 = vadd.xlane.f32.xlu0 %v1715
    %v1717 = vpop.xlane.xlu0 %1716
    %v1718 = vsel %vm872, %v1714, 0.0
    %1719 = vadd.xlane.f32.xlu0 %v1718
    %v1720 = vpop.xlane.xlu0 %1719
    %v1721 = vrcp.pop %v1717
    %v1722 = vrcp.pop %v1720
    %v1723 = vmul.f32 %v1712, %v1721
    %v1724 = vmul.f32 %v1714, %v1722
    %1725 = vrot.lane.b32.xlu0 %v864, 112
    %v1726 = vpop.permute.xlu0 %1725
    %v1729 = vsel %vm872, %v1723, 0
    %1731 = vmatprep.subr.mxu0 0.0
    %1732 = vmatpush1.msra.mxu0 0.0
    %1733 = vmatprep.subr.mxu0 0.0
    %1734 = vmatpush1.msra.mxu0 0.0
    %1735 = vmatprep.subr.mxu0 0.0
    %1736 = vmatpush1.msra.mxu0 0.0
    %1737 = vmatprep.subr.mxu0 0.0
    %1738 = vmatpush1.msra.mxu0 0.0
    %1739 = vmatprep.subr.mxu0 0.0
    %1740 = vmatpush1.msra.mxu0 0.0
    %1741 = vmatprep.subr.mxu0 0.0
    %1742 = vmatpush1.msra.mxu0 0.0
    %1743 = vmatprep.subr.mxu0 0.0
    %1744 = vmatpush1.msra.mxu0 0.0
    %1745 = vmatprep.subr.mxu0 0.0
    %1746 = vmatpush1.msra.mxu0 0.0
    %1747 = vmatprep.subr.mxu0 0.0
    %1748 = vmatpush1.msra.mxu0 0.0
    %1749 = vmatprep.subr.mxu0 0.0
    %1750 = vmatpush1.msra.mxu0 0.0
    %1751 = vmatprep.subr.mxu0 0.0
    %1752 = vmatpush1.msra.mxu0 0.0
    %1753 = vmatprep.subr.mxu0 0.0
    %1754 = vmatpush1.msra.mxu0 0.0
    %1755 = vmatprep.subr.mxu0 0.0
    %1756 = vmatpush1.msra.mxu0 0.0
    %1757 = vmatprep.subr.mxu0 0.0
    %1758 = vmatpush1.msra.mxu0 0.0
    %1759 = vmatprep.subr.mxu0 0.0
    %1760 = vmatpush1.msra.mxu0 0.0
    %1761 = vmatprep.subr.mxu0 0.0
    %1762 = vmatpush1.msra.mxu0 %v1726
    %1763 = vmatprep.subr.mxu0 0.0
    %1764 = vmatpush2.msra.mxu0 0.0
    %1765 = vmatprep.subr.mxu0 0.0
    %1766 = vmatpush2.msra.mxu0 0.0
    %1767 = vmatprep.subr.mxu0 0.0
    %1768 = vmatpush2.msra.mxu0 0.0
    %1769 = vmatprep.subr.mxu0 0.0
    %1770 = vmatpush2.msra.mxu0 0.0
    %1771 = vmatprep.subr.mxu0 0.0
    %1772 = vmatpush2.msra.mxu0 0.0
    %1773 = vmatprep.subr.mxu0 0.0
    %1774 = vmatpush2.msra.mxu0 0.0
    %1775 = vmatprep.subr.mxu0 0.0
    %1776 = vmatpush2.msra.mxu0 0.0
    %1777 = vmatprep.subr.mxu0 0.0
    %1778 = vmatpush2.msra.mxu0 0.0
    %1779 = vmatprep.subr.mxu0 0.0
    %1780 = vmatpush2.msra.mxu0 0.0
    %1781 = vmatprep.subr.mxu0 0.0
    %1782 = vmatpush2.msra.mxu0 0.0
    %1783 = vmatprep.subr.mxu0 0.0
    %1784 = vmatpush2.msra.mxu0 0.0
    %1785 = vmatprep.subr.mxu0 0.0
    %1786 = vmatpush2.msra.mxu0 0.0
    %1787 = vmatprep.subr.mxu0 0.0
    %1788 = vmatpush2.msra.mxu0 0.0
    %1789 = vmatprep.subr.mxu0 0.0
    %1790 = vmatpush2.msra.mxu0 0.0
    %1791 = vmatprep.subr.mxu0 0.0
    %1792 = vmatpush2.msra.mxu0 0.0
    %1793 = vmatprep.subr.mxu0 0.0
    %1794 = vmatpush2.msra.mxu0 0.0
    %1795 = vmatprep.mubr.f32.mxu0 0.0
    %1796 = vmatmul.mubr.f32.gmra.mxu0 %v1729
    %v1797 = vpop.f32.mrf.mxu0
    %v1798 = vadd.f32 0.0, %v1797
    %v1799 = vpop.f32.mrf.mxu0
    %1800 = vdwg.mxu0
    %1801 = vrot.lane.b32.xlu0 %v869, 112
    %v1802 = vpop.permute.xlu0 %1801
    %v1805 = vsel %vm872, %v1724, 0
    %1807 = vmatprep.subr.mxu0 0.0
    %1808 = vmatpush1.msra.mxu0 0.0
    %1809 = vmatprep.subr.mxu0 0.0
    %1810 = vmatpush1.msra.mxu0 0.0
    %1811 = vmatprep.subr.mxu0 0.0
    %1812 = vmatpush1.msra.mxu0 0.0
    %1813 = vmatprep.subr.mxu0 0.0
    %1814 = vmatpush1.msra.mxu0 0.0
    %1815 = vmatprep.subr.mxu0 0.0
    %1816 = vmatpush1.msra.mxu0 0.0
    %1817 = vmatprep.subr.mxu0 0.0
    %1818 = vmatpush1.msra.mxu0 0.0
    %1819 = vmatprep.subr.mxu0 0.0
    %1820 = vmatpush1.msra.mxu0 0.0
    %1821 = vmatprep.subr.mxu0 0.0
    %1822 = vmatpush1.msra.mxu0 0.0
    %1823 = vmatprep.subr.mxu0 0.0
    %1824 = vmatpush1.msra.mxu0 0.0
    %1825 = vmatprep.subr.mxu0 0.0
    %1826 = vmatpush1.msra.mxu0 0.0
    %1827 = vmatprep.subr.mxu0 0.0
    %1828 = vmatpush1.msra.mxu0 0.0
    %1829 = vmatprep.subr.mxu0 0.0
    %1830 = vmatpush1.msra.mxu0 0.0
    %1831 = vmatprep.subr.mxu0 0.0
    %1832 = vmatpush1.msra.mxu0 0.0
    %1833 = vmatprep.subr.mxu0 0.0
    %1834 = vmatpush1.msra.mxu0 0.0
    %1835 = vmatprep.subr.mxu0 0.0
    %1836 = vmatpush1.msra.mxu0 0.0
    %1837 = vmatprep.subr.mxu0 0.0
    %1838 = vmatpush1.msra.mxu0 %v1802
    %1839 = vmatprep.subr.mxu0 0.0
    %1840 = vmatpush2.msra.mxu0 0.0
    %1841 = vmatprep.subr.mxu0 0.0
    %1842 = vmatpush2.msra.mxu0 0.0
    %1843 = vmatprep.subr.mxu0 0.0
    %1844 = vmatpush2.msra.mxu0 0.0
    %1845 = vmatprep.subr.mxu0 0.0
    %1846 = vmatpush2.msra.mxu0 0.0
    %1847 = vmatprep.subr.mxu0 0.0
    %1848 = vmatpush2.msra.mxu0 0.0
    %1849 = vmatprep.subr.mxu0 0.0
    %1850 = vmatpush2.msra.mxu0 0.0
    %1851 = vmatprep.subr.mxu0 0.0
    %1852 = vmatpush2.msra.mxu0 0.0
    %1853 = vmatprep.subr.mxu0 0.0
    %1854 = vmatpush2.msra.mxu0 0.0
    %1855 = vmatprep.subr.mxu0 0.0
    %1856 = vmatpush2.msra.mxu0 0.0
    %1857 = vmatprep.subr.mxu0 0.0
    %1858 = vmatpush2.msra.mxu0 0.0
    %1859 = vmatprep.subr.mxu0 0.0
    %1860 = vmatpush2.msra.mxu0 0.0
    %1861 = vmatprep.subr.mxu0 0.0
    %1862 = vmatpush2.msra.mxu0 0.0
    %1863 = vmatprep.subr.mxu0 0.0
    %1864 = vmatpush2.msra.mxu0 0.0
    %1865 = vmatprep.subr.mxu0 0.0
    %1866 = vmatpush2.msra.mxu0 0.0
    %1867 = vmatprep.subr.mxu0 0.0
    %1868 = vmatpush2.msra.mxu0 0.0
    %1869 = vmatprep.subr.mxu0 0.0
    %1870 = vmatpush2.msra.mxu0 0.0
    %1871 = vmatprep.mubr.f32.mxu0 0.0
    %1872 = vmatmul.mubr.f32.gmra.mxu0 %v1805
    %v1873 = vpop.f32.mrf.mxu0
    %v1874 = vadd.f32 0.0, %v1873
    %v1875 = vpop.f32.mrf.mxu0
    %1876 = vdwg.mxu0
    %1877 = vrot.lane.b32.xlu0 %v702, 104
    %v1878 = vpop.permute.xlu0 %1877
    %1879 = vrot.lane.b32.xlu0 %v783, 104
    %v1880 = vpop.permute.xlu0 %1879
    %v1881 = vsel %vm872, %v1878, 0
    %v1883 = vsel %vm872, %v1880, 0
    %1885 = vmatprep.subr.mxu0 0.0
    %1886 = vmatpush1.xpose.msra.mxu0 0.0
    %1887 = vmatprep.subr.mxu0 0.0
    %1888 = vmatpush1.xpose.msra.mxu0 0.0
    %1889 = vmatprep.subr.mxu0 0.0
    %1890 = vmatpush1.xpose.msra.mxu0 0.0
    %1891 = vmatprep.subr.mxu0 0.0
    %1892 = vmatpush1.xpose.msra.mxu0 0.0
    %1893 = vmatprep.subr.mxu0 0.0
    %1894 = vmatpush1.xpose.msra.mxu0 0.0
    %1895 = vmatprep.subr.mxu0 0.0
    %1896 = vmatpush1.xpose.msra.mxu0 0.0
    %1897 = vmatprep.subr.mxu0 0.0
    %1898 = vmatpush1.xpose.msra.mxu0 0.0
    %1899 = vmatprep.subr.mxu0 0.0
    %1900 = vmatpush1.xpose.msra.mxu0 0.0
    %1901 = vmatprep.subr.mxu0 0.0
    %1902 = vmatpush1.xpose.msra.mxu0 0.0
    %1903 = vmatprep.subr.mxu0 0.0
    %1904 = vmatpush1.xpose.msra.mxu0 0.0
    %1905 = vmatprep.subr.mxu0 0.0
    %1906 = vmatpush1.xpose.msra.mxu0 0.0
    %1907 = vmatprep.subr.mxu0 0.0
    %1908 = vmatpush1.xpose.msra.mxu0 0.0
    %1909 = vmatprep.subr.mxu0 0.0
    %1910 = vmatpush1.xpose.msra.mxu0 0.0
    %1911 = vmatprep.subr.mxu0 0.0
    %1912 = vmatpush1.xpose.msra.mxu0 0.0
    %1913 = vmatprep.subr.mxu0 0.0
    %1914 = vmatpush1.xpose.msra.mxu0 0.0
    %1915 = vmatprep.subr.mxu0 0.0
    %1916 = vmatpush1.xpose.msra.mxu0 %v1883
    %1917 = vmatprep.subr.mxu0 0.0
    %1918 = vmatpush2.xpose.msra.mxu0 0.0
    %1919 = vmatprep.subr.mxu0 0.0
    %1920 = vmatpush2.xpose.msra.mxu0 0.0
    %1921 = vmatprep.subr.mxu0 0.0
    %1922 = vmatpush2.xpose.msra.mxu0 0.0
    %1923 = vmatprep.subr.mxu0 0.0
    %1924 = vmatpush2.xpose.msra.mxu0 0.0
    %1925 = vmatprep.subr.mxu0 0.0
    %1926 = vmatpush2.xpose.msra.mxu0 0.0
    %1927 = vmatprep.subr.mxu0 0.0
    %1928 = vmatpush2.xpose.msra.mxu0 0.0
    %1929 = vmatprep.subr.mxu0 0.0
    %1930 = vmatpush2.xpose.msra.mxu0 0.0
    %1931 = vmatprep.subr.mxu0 0.0
    %1932 = vmatpush2.xpose.msra.mxu0 0.0
    %1933 = vmatprep.subr.mxu0 0.0
    %1934 = vmatpush2.xpose.msra.mxu0 0.0
    %1935 = vmatprep.subr.mxu0 0.0
    %1936 = vmatpush2.xpose.msra.mxu0 0.0
    %1937 = vmatprep.subr.mxu0 0.0
    %1938 = vmatpush2.xpose.msra.mxu0 0.0
    %1939 = vmatprep.subr.mxu0 0.0
    %1940 = vmatpush2.xpose.msra.mxu0 0.0
    %1941 = vmatprep.subr.mxu0 0.0
    %1942 = vmatpush2.xpose.msra.mxu0 0.0
    %1943 = vmatprep.subr.mxu0 0.0
    %1944 = vmatpush2.xpose.msra.mxu0 0.0
    %1945 = vmatprep.subr.mxu0 0.0
    %1946 = vmatpush2.xpose.msra.mxu0 0.0
    %1947 = vmatprep.subr.mxu0 0.0
    %1948 = vmatpush2.xpose.msra.mxu0 0.0
    %1949 = vmatprep.mubr.f32.mxu0 0.0
    %1950 = vmatmul.mubr.f32.gmra.mxu0 %v1881
    %v1951 = vpop.f32.mrf.mxu0
    %v1952 = vadd.f32 0.0, %v1951
    %v1953 = vpop.f32.mrf.mxu0
    %1954 = vdwg.mxu0
    %1955 = vrot.lane.b32.xlu0 %v707, 104
    %v1956 = vpop.permute.xlu0 %1955
    %1957 = vrot.lane.b32.xlu0 %v788, 104
    %v1958 = vpop.permute.xlu0 %1957
    %v1959 = vsel %vm872, %v1956, 0
    %v1961 = vsel %vm872, %v1958, 0
    %1963 = vmatprep.subr.mxu0 0.0
    %1964 = vmatpush1.xpose.msra.mxu0 0.0
    %1965 = vmatprep.subr.mxu0 0.0
    %1966 = vmatpush1.xpose.msra.mxu0 0.0
    %1967 = vmatprep.subr.mxu0 0.0
    %1968 = vmatpush1.xpose.msra.mxu0 0.0
    %1969 = vmatprep.subr.mxu0 0.0
    %1970 = vmatpush1.xpose.msra.mxu0 0.0
    %1971 = vmatprep.subr.mxu0 0.0
    %1972 = vmatpush1.xpose.msra.mxu0 0.0
    %1973 = vmatprep.subr.mxu0 0.0
    %1974 = vmatpush1.xpose.msra.mxu0 0.0
    %1975 = vmatprep.subr.mxu0 0.0
    %1976 = vmatpush1.xpose.msra.mxu0 0.0
    %1977 = vmatprep.subr.mxu0 0.0
    %1978 = vmatpush1.xpose.msra.mxu0 0.0
    %1979 = vmatprep.subr.mxu0 0.0
    %1980 = vmatpush1.xpose.msra.mxu0 0.0
    %1981 = vmatprep.subr.mxu0 0.0
    %1982 = vmatpush1.xpose.msra.mxu0 0.0
    %1983 = vmatprep.subr.mxu0 0.0
    %1984 = vmatpush1.xpose.msra.mxu0 0.0
    %1985 = vmatprep.subr.mxu0 0.0
    %1986 = vmatpush1.xpose.msra.mxu0 0.0
    %1987 = vmatprep.subr.mxu0 0.0
    %1988 = vmatpush1.xpose.msra.mxu0 0.0
    %1989 = vmatprep.subr.mxu0 0.0
    %1990 = vmatpush1.xpose.msra.mxu0 0.0
    %1991 = vmatprep.subr.mxu0 0.0
    %1992 = vmatpush1.xpose.msra.mxu0 0.0
    %1993 = vmatprep.subr.mxu0 0.0
    %1994 = vmatpush1.xpose.msra.mxu0 %v1961
    %1995 = vmatprep.subr.mxu0 0.0
    %1996 = vmatpush2.xpose.msra.mxu0 0.0
    %1997 = vmatprep.subr.mxu0 0.0
    %1998 = vmatpush2.xpose.msra.mxu0 0.0
    %1999 = vmatprep.subr.mxu0 0.0
    %2000 = vmatpush2.xpose.msra.mxu0 0.0
    %2001 = vmatprep.subr.mxu0 0.0
    %2002 = vmatpush2.xpose.msra.mxu0 0.0
    %2003 = vmatprep.subr.mxu0 0.0
    %2004 = vmatpush2.xpose.msra.mxu0 0.0
    %2005 = vmatprep.subr.mxu0 0.0
    %2006 = vmatpush2.xpose.msra.mxu0 0.0
    %2007 = vmatprep.subr.mxu0 0.0
    %2008 = vmatpush2.xpose.msra.mxu0 0.0
    %2009 = vmatprep.subr.mxu0 0.0
    %2010 = vmatpush2.xpose.msra.mxu0 0.0
    %2011 = vmatprep.subr.mxu0 0.0
    %2012 = vmatpush2.xpose.msra.mxu0 0.0
    %2013 = vmatprep.subr.mxu0 0.0
    %2014 = vmatpush2.xpose.msra.mxu0 0.0
    %2015 = vmatprep.subr.mxu0 0.0
    %2016 = vmatpush2.xpose.msra.mxu0 0.0
    %2017 = vmatprep.subr.mxu0 0.0
    %2018 = vmatpush2.xpose.msra.mxu0 0.0
    %2019 = vmatprep.subr.mxu0 0.0
    %2020 = vmatpush2.xpose.msra.mxu0 0.0
    %2021 = vmatprep.subr.mxu0 0.0
    %2022 = vmatpush2.xpose.msra.mxu0 0.0
    %2023 = vmatprep.subr.mxu0 0.0
    %2024 = vmatpush2.xpose.msra.mxu0 0.0
    %2025 = vmatprep.subr.mxu0 0.0
    %2026 = vmatpush2.xpose.msra.mxu0 0.0
    %2027 = vmatprep.mubr.f32.mxu0 0.0
    %2028 = vmatmul.mubr.f32.gmra.mxu0 %v1959
    %v2029 = vpop.f32.mrf.mxu0
    %v2030 = vadd.f32 0.0, %v2029
    %v2031 = vpop.f32.mrf.mxu0
    %2032 = vdwg.mxu0
    %v2033 = vmul.f32 %v1952, 0.35355338
    %v2034 = vmul.f32 %v2030, 0.35355338
    %v2035 = vadd.f32 %v2033, %v1030
    %v2036 = vadd.f32 %v2034, %v1034
    %v2037 = vsel %vm872, %v2035, -inf
    %2038 = vmax.xlane.f32.xlu0 %v2037
    %v2039 = vpop.xlane.xlu0 %2038
    %v2040 = vsel %vm872, %v2036, -inf
    %2041 = vmax.xlane.f32.xlu0 %v2040
    %v2042 = vpop.xlane.xlu0 %2041
    %v2043 = vsub.f32 %v2035, %v2039
    %v2044 = vsub.f32 %v2036, %v2042
    %v2045 = vmul.f32 %v2043, 1.442695
    %v2046 = vpow.pop %v2045
    %v2047 = vmul.f32 %v2044, 1.442695
    %v2048 = vpow.pop %v2047
    %v2049 = vsel %vm872, %v2046, 0.0
    %2050 = vadd.xlane.f32.xlu0 %v2049
    %v2051 = vpop.xlane.xlu0 %2050
    %v2052 = vsel %vm872, %v2048, 0.0
    %2053 = vadd.xlane.f32.xlu0 %v2052
    %v2054 = vpop.xlane.xlu0 %2053
    %v2055 = vrcp.pop %v2051
    %v2056 = vrcp.pop %v2054
    %v2057 = vmul.f32 %v2046, %v2055
    %v2058 = vmul.f32 %v2048, %v2056
    %2059 = vrot.lane.b32.xlu0 %v864, 104
    %v2060 = vpop.permute.xlu0 %2059
    %v2063 = vsel %vm872, %v2057, 0
    %2065 = vmatprep.subr.mxu0 0.0
    %2066 = vmatpush1.msra.mxu0 0.0
    %2067 = vmatprep.subr.mxu0 0.0
    %2068 = vmatpush1.msra.mxu0 0.0
    %2069 = vmatprep.subr.mxu0 0.0
    %2070 = vmatpush1.msra.mxu0 0.0
    %2071 = vmatprep.subr.mxu0 0.0
    %2072 = vmatpush1.msra.mxu0 0.0
    %2073 = vmatprep.subr.mxu0 0.0
    %2074 = vmatpush1.msra.mxu0 0.0
    %2075 = vmatprep.subr.mxu0 0.0
    %2076 = vmatpush1.msra.mxu0 0.0
    %2077 = vmatprep.subr.mxu0 0.0
    %2078 = vmatpush1.msra.mxu0 0.0
    %2079 = vmatprep.subr.mxu0 0.0
    %2080 = vmatpush1.msra.mxu0 0.0
    %2081 = vmatprep.subr.mxu0 0.0
    %2082 = vmatpush1.msra.mxu0 0.0
    %2083 = vmatprep.subr.mxu0 0.0
    %2084 = vmatpush1.msra.mxu0 0.0
    %2085 = vmatprep.subr.mxu0 0.0
    %2086 = vmatpush1.msra.mxu0 0.0
    %2087 = vmatprep.subr.mxu0 0.0
    %2088 = vmatpush1.msra.mxu0 0.0
    %2089 = vmatprep.subr.mxu0 0.0
    %2090 = vmatpush1.msra.mxu0 0.0
    %2091 = vmatprep.subr.mxu0 0.0
    %2092 = vmatpush1.msra.mxu0 0.0
    %2093 = vmatprep.subr.mxu0 0.0
    %2094 = vmatpush1.msra.mxu0 0.0
    %2095 = vmatprep.subr.mxu0 0.0
    %2096 = vmatpush1.msra.mxu0 %v2060
    %2097 = vmatprep.subr.mxu0 0.0
    %2098 = vmatpush2.msra.mxu0 0.0
    %2099 = vmatprep.subr.mxu0 0.0
    %2100 = vmatpush2.msra.mxu0 0.0
    %2101 = vmatprep.subr.mxu0 0.0
    %2102 = vmatpush2.msra.mxu0 0.0
    %2103 = vmatprep.subr.mxu0 0.0
    %2104 = vmatpush2.msra.mxu0 0.0
    %2105 = vmatprep.subr.mxu0 0.0
    %2106 = vmatpush2.msra.mxu0 0.0
    %2107 = vmatprep.subr.mxu0 0.0
    %2108 = vmatpush2.msra.mxu0 0.0
    %2109 = vmatprep.subr.mxu0 0.0
    %2110 = vmatpush2.msra.mxu0 0.0
    %2111 = vmatprep.subr.mxu0 0.0
    %2112 = vmatpush2.msra.mxu0 0.0
    %2113 = vmatprep.subr.mxu0 0.0
    %2114 = vmatpush2.msra.mxu0 0.0
    %2115 = vmatprep.subr.mxu0 0.0
    %2116 = vmatpush2.msra.mxu0 0.0
    %2117 = vmatprep.subr.mxu0 0.0
    %2118 = vmatpush2.msra.mxu0 0.0
    %2119 = vmatprep.subr.mxu0 0.0
    %2120 = vmatpush2.msra.mxu0 0.0
    %2121 = vmatprep.subr.mxu0 0.0
    %2122 = vmatpush2.msra.mxu0 0.0
    %2123 = vmatprep.subr.mxu0 0.0
    %2124 = vmatpush2.msra.mxu0 0.0
    %2125 = vmatprep.subr.mxu0 0.0
    %2126 = vmatpush2.msra.mxu0 0.0
    %2127 = vmatprep.subr.mxu0 0.0
    %2128 = vmatpush2.msra.mxu0 0.0
    %2129 = vmatprep.mubr.f32.mxu0 0.0
    %2130 = vmatmul.mubr.f32.gmra.mxu0 %v2063
    %v2131 = vpop.f32.mrf.mxu0
    %v2132 = vadd.f32 0.0, %v2131
    %v2133 = vpop.f32.mrf.mxu0
    %2134 = vdwg.mxu0
    %2135 = vrot.lane.b32.xlu0 %v869, 104
    %v2136 = vpop.permute.xlu0 %2135
    %v2139 = vsel %vm872, %v2058, 0
    %2141 = vmatprep.subr.mxu0 0.0
    %2142 = vmatpush1.msra.mxu0 0.0
    %2143 = vmatprep.subr.mxu0 0.0
    %2144 = vmatpush1.msra.mxu0 0.0
    %2145 = vmatprep.subr.mxu0 0.0
    %2146 = vmatpush1.msra.mxu0 0.0
    %2147 = vmatprep.subr.mxu0 0.0
    %2148 = vmatpush1.msra.mxu0 0.0
    %2149 = vmatprep.subr.mxu0 0.0
    %2150 = vmatpush1.msra.mxu0 0.0
    %2151 = vmatprep.subr.mxu0 0.0
    %2152 = vmatpush1.msra.mxu0 0.0
    %2153 = vmatprep.subr.mxu0 0.0
    %2154 = vmatpush1.msra.mxu0 0.0
    %2155 = vmatprep.subr.mxu0 0.0
    %2156 = vmatpush1.msra.mxu0 0.0
    %2157 = vmatprep.subr.mxu0 0.0
    %2158 = vmatpush1.msra.mxu0 0.0
    %2159 = vmatprep.subr.mxu0 0.0
    %2160 = vmatpush1.msra.mxu0 0.0
    %2161 = vmatprep.subr.mxu0 0.0
    %2162 = vmatpush1.msra.mxu0 0.0
    %2163 = vmatprep.subr.mxu0 0.0
    %2164 = vmatpush1.msra.mxu0 0.0
    %2165 = vmatprep.subr.mxu0 0.0
    %2166 = vmatpush1.msra.mxu0 0.0
    %2167 = vmatprep.subr.mxu0 0.0
    %2168 = vmatpush1.msra.mxu0 0.0
    %2169 = vmatprep.subr.mxu0 0.0
    %2170 = vmatpush1.msra.mxu0 0.0
    %2171 = vmatprep.subr.mxu0 0.0
    %2172 = vmatpush1.msra.mxu0 %v2136
    %2173 = vmatprep.subr.mxu0 0.0
    %2174 = vmatpush2.msra.mxu0 0.0
    %2175 = vmatprep.subr.mxu0 0.0
    %2176 = vmatpush2.msra.mxu0 0.0
    %2177 = vmatprep.subr.mxu0 0.0
    %2178 = vmatpush2.msra.mxu0 0.0
    %2179 = vmatprep.subr.mxu0 0.0
    %2180 = vmatpush2.msra.mxu0 0.0
    %2181 = vmatprep.subr.mxu0 0.0
    %2182 = vmatpush2.msra.mxu0 0.0
    %2183 = vmatprep.subr.mxu0 0.0
    %2184 = vmatpush2.msra.mxu0 0.0
    %2185 = vmatprep.subr.mxu0 0.0
    %2186 = vmatpush2.msra.mxu0 0.0
    %2187 = vmatprep.subr.mxu0 0.0
    %2188 = vmatpush2.msra.mxu0 0.0
    %2189 = vmatprep.subr.mxu0 0.0
    %2190 = vmatpush2.msra.mxu0 0.0
    %2191 = vmatprep.subr.mxu0 0.0
    %2192 = vmatpush2.msra.mxu0 0.0
    %2193 = vmatprep.subr.mxu0 0.0
    %2194 = vmatpush2.msra.mxu0 0.0
    %2195 = vmatprep.subr.mxu0 0.0
    %2196 = vmatpush2.msra.mxu0 0.0
    %2197 = vmatprep.subr.mxu0 0.0
    %2198 = vmatpush2.msra.mxu0 0.0
    %2199 = vmatprep.subr.mxu0 0.0
    %2200 = vmatpush2.msra.mxu0 0.0
    %2201 = vmatprep.subr.mxu0 0.0
    %2202 = vmatpush2.msra.mxu0 0.0
    %2203 = vmatprep.subr.mxu0 0.0
    %2204 = vmatpush2.msra.mxu0 0.0
    %2205 = vmatprep.mubr.f32.mxu0 0.0
    %2206 = vmatmul.mubr.f32.gmra.mxu0 %v2139
    %v2207 = vpop.f32.mrf.mxu0
    %v2208 = vadd.f32 0.0, %v2207
    %v2209 = vpop.f32.mrf.mxu0
    %2210 = vdwg.mxu0
    %2213 = vrot.lane.b32.xlu0 %v1463, 8
    %v2214 = vpop.permute.xlu0 %2213
    %2215 = vrot.lane.b32.xlu0 %v1540, 8
    %v2216 = vpop.permute.xlu0 %2215
    %2221 = vrot.lane.b32.xlu0 %v1798, 16
    %v2222 = vpop.permute.xlu0 %2221
    %2223 = vrot.lane.b32.xlu0 %v1874, 16
    %v2224 = vpop.permute.xlu0 %2223
    %2229 = vrot.lane.b32.xlu0 %v2132, 24
    %v2230 = vpop.permute.xlu0 %2229
    %2231 = vrot.lane.b32.xlu0 %v2208, 24
    %v2232 = vpop.permute.xlu0 %2231
    %v2235 = vsel %vm872, %v1131, %v2214
    %v2236 = vsel %vm872, %v1204, %v2216
    %v2237 = vsel %vm471, %v2235, %v2222
    %v2238 = vsel %vm471, %v2236, %v2224
    %vm2239 = vcmask 195584
    %v2240 = vsel %vm2239, %v2237, %v2230
    %v2241 = vsel %vm2239, %v2238, %v2232
    %v2243 = vlaneseq
    %v2244 = vshrl.u32 %v2243, 7
    %v2245 = vsub.s32 0, %v2244
    %v2246 = vrot.slane %v603, %v2245
    %v2249 = vsel %vm628, %v2240, 0
    %v2252 = vsel %vm628, %v2241, 0
    %2254 = vmatprep.subr.mxu0 0.0
    %2255 = vmatpush1.msra.mxu0 0.0
    %2256 = vmatprep.subr.mxu0 0.0
    %2257 = vmatpush1.msra.mxu0 0.0
    %2258 = vmatprep.subr.mxu0 0.0
    %2259 = vmatpush1.msra.mxu0 0.0
    %2260 = vmatprep.subr.mxu0 0.0
    %2261 = vmatpush1.msra.mxu0 0.0
    %2262 = vmatprep.subr.mxu0 0.0
    %2263 = vmatpush1.msra.mxu0 0.0
    %2264 = vmatprep.subr.mxu0 0.0
    %2265 = vmatpush1.msra.mxu0 0.0
    %2266 = vmatprep.subr.mxu0 0.0
    %2267 = vmatpush1.msra.mxu0 0.0
    %2268 = vmatprep.subr.mxu0 0.0
    %2269 = vmatpush1.msra.mxu0 0.0
    %2270 = vmatprep.subr.mxu0 0.0
    %2271 = vmatpush1.msra.mxu0 0.0
    %2272 = vmatprep.subr.mxu0 0.0
    %2273 = vmatpush1.msra.mxu0 0.0
    %2274 = vmatprep.subr.mxu0 0.0
    %2275 = vmatpush1.msra.mxu0 0.0
    %2276 = vmatprep.subr.mxu0 0.0
    %2277 = vmatpush1.msra.mxu0 0.0
    %2278 = vmatprep.subr.mxu0 0.0
    %2279 = vmatpush1.msra.mxu0 %v602
    %2280 = vmatprep.subr.mxu0 0.0
    %2281 = vmatpush1.msra.mxu0 %v601
    %2282 = vmatprep.subr.mxu0 0.0
    %2283 = vmatpush1.msra.mxu0 %v600
    %2284 = vmatprep.subr.mxu0 0.0
    %2285 = vmatpush1.msra.mxu0 %v599
    %2286 = vmatprep.subr.mxu0 0.0
    %2287 = vmatpush2.msra.mxu0 0.0
    %2288 = vmatprep.subr.mxu0 0.0
    %2289 = vmatpush2.msra.mxu0 0.0
    %2290 = vmatprep.subr.mxu0 0.0
    %2291 = vmatpush2.msra.mxu0 0.0
    %2292 = vmatprep.subr.mxu0 0.0
    %2293 = vmatpush2.msra.mxu0 0.0
    %2294 = vmatprep.subr.mxu0 0.0
    %2295 = vmatpush2.msra.mxu0 0.0
    %2296 = vmatprep.subr.mxu0 0.0
    %2297 = vmatpush2.msra.mxu0 0.0
    %2298 = vmatprep.subr.mxu0 0.0
    %2299 = vmatpush2.msra.mxu0 0.0
    %2300 = vmatprep.subr.mxu0 0.0
    %2301 = vmatpush2.msra.mxu0 0.0
    %2302 = vmatprep.subr.mxu0 0.0
    %2303 = vmatpush2.msra.mxu0 0.0
    %2304 = vmatprep.subr.mxu0 0.0
    %2305 = vmatpush2.msra.mxu0 0.0
    %2306 = vmatprep.subr.mxu0 0.0
    %2307 = vmatpush2.msra.mxu0 0.0
    %2308 = vmatprep.subr.mxu0 0.0
    %2309 = vmatpush2.msra.mxu0 0.0
    %2310 = vmatprep.subr.mxu0 0.0
    %2311 = vmatpush2.msra.mxu0 0.0
    %2312 = vmatprep.subr.mxu0 0.0
    %2313 = vmatpush2.msra.mxu0 0.0
    %2314 = vmatprep.subr.mxu0 0.0
    %2315 = vmatpush2.msra.mxu0 0.0
    %2316 = vmatprep.subr.mxu0 0.0
    %2317 = vmatpush2.msra.mxu0 0.0
    %2318 = vmatprep.mubr.f32.mxu0 0.0
    %2319 = vmatmul.mubr.f32.gmra.mxu0 %v2249
    %v2320 = vpop.f32.mrf.mxu0
    %v2321 = vadd.f32 %v2246, %v2320
    %v2322 = vpop.f32.mrf.mxu0
    %2323 = vmatprep.mubr.f32.mxu0 0.0
    %2324 = vmatmul.mubr.f32.gmra.mxu0 %v2252
    %v2325 = vpop.f32.mrf.mxu0
    %v2326 = vadd.f32 %v2246, %v2325
    %v2327 = vpop.f32.mrf.mxu0
    %2328 = vdwg.mxu0
    %v2329 = vadd.f32 %v556, %v2321
    %v2330 = vadd.f32 %v557, %v2326
    %v2331 = vsel %vm628, %v2329, 0.0
    %2332 = vadd.xlane.f32.xlu0 %v2331
    %v2333 = vpop.xlane.xlu0 %2332
    %v2334 = vsel %vm628, %v2330, 0.0
    %2335 = vadd.xlane.f32.xlu0 %v2334
    %v2336 = vpop.xlane.xlu0 %2335
    %v2337 = vrcp.pop 32.0
    %v2338 = vmul.f32 %v2333, %v2337
    %v2339 = vmul.f32 %v2336, %v2337
    %v2340 = vsub.f32 %v2329, %v2338
    %v2341 = vsub.f32 %v2330, %v2339
    %v2342 = vmul.f32 %v2340, %v2340
    %v2343 = vmul.f32 %v2341, %v2341
    %v2344 = vsel %vm628, %v2342, 0.0
    %2345 = vadd.xlane.f32.xlu0 %v2344
    %v2346 = vpop.xlane.xlu0 %2345
    %v2347 = vsel %vm628, %v2343, 0.0
    %2348 = vadd.xlane.f32.xlu0 %v2347
    %v2349 = vpop.xlane.xlu0 %2348
    %v2350 = vmul.f32 %v2346, %v2337
    %v2351 = vmul.f32 %v2349, %v2337
    %v2352 = vadd.f32 %v2350, 1e-06
    %v2353 = vadd.f32 %v2351, 1e-06
    %v2354 = vrsqrt.pop %v2352
    %v2355 = vrsqrt.pop %v2353
    %v2356 = vmul.f32 %v2340, %v2354
    %v2357 = vmul.f32 %v2341, %v2355
    %v2359 = vlaneseq
    %v2360 = vshrl.u32 %v2359, 7
    %v2361 = vsub.s32 0, %v2360
    %v2362 = vrot.slane %v618, %v2361
    %v2364 = vmul.f32 %v2356, %v2362
    %v2365 = vmul.f32 %v2357, %v2362
    %v2367 = vlaneseq
    %v2368 = vshrl.u32 %v2367, 7
    %v2369 = vsub.s32 0, %v2368
    %v2370 = vrot.slane %v619, %v2369
    %v2372 = vadd.f32 %v2364, %v2370
    %v2373 = vadd.f32 %v2365, %v2370
    %v2375 = vlaneseq
    %v2376 = vshrl.u32 %v2375, 7
    %v2377 = vsub.s32 0, %v2376
    %v2378 = vrot.slane %v608, %v2377
    %v2381 = vsel %vm628, %v2372, 0
    %v2384 = vsel %vm628, %v2373, 0
    %2386 = vmatprep.subr.mxu0 0.0
    %2387 = vmatpush1.msra.mxu0 0.0
    %2388 = vmatprep.subr.mxu0 0.0
    %2389 = vmatpush1.msra.mxu0 0.0
    %2390 = vmatprep.subr.mxu0 0.0
    %2391 = vmatpush1.msra.mxu0 0.0
    %2392 = vmatprep.subr.mxu0 0.0
    %2393 = vmatpush1.msra.mxu0 0.0
    %2394 = vmatprep.subr.mxu0 0.0
    %2395 = vmatpush1.msra.mxu0 0.0
    %2396 = vmatprep.subr.mxu0 0.0
    %2397 = vmatpush1.msra.mxu0 0.0
    %2398 = vmatprep.subr.mxu0 0.0
    %2399 = vmatpush1.msra.mxu0 0.0
    %2400 = vmatprep.subr.mxu0 0.0
    %2401 = vmatpush1.msra.mxu0 0.0
    %2402 = vmatprep.subr.mxu0 0.0
    %2403 = vmatpush1.msra.mxu0 0.0
    %2404 = vmatprep.subr.mxu0 0.0
    %2405 = vmatpush1.msra.mxu0 0.0
    %2406 = vmatprep.subr.mxu0 0.0
    %2407 = vmatpush1.msra.mxu0 0.0
    %2408 = vmatprep.subr.mxu0 0.0
    %2409 = vmatpush1.msra.mxu0 0.0
    %2410 = vmatprep.subr.mxu0 0.0
    %2411 = vmatpush1.msra.mxu0 %v607
    %2412 = vmatprep.subr.mxu0 0.0
    %2413 = vmatpush1.msra.mxu0 %v606
    %2414 = vmatprep.subr.mxu0 0.0
    %2415 = vmatpush1.msra.mxu0 %v605
    %2416 = vmatprep.subr.mxu0 0.0
    %2417 = vmatpush1.msra.mxu0 %v604
    %2418 = vmatprep.subr.mxu0 0.0
    %2419 = vmatpush2.msra.mxu0 0.0
    %2420 = vmatprep.subr.mxu0 0.0
    %2421 = vmatpush2.msra.mxu0 0.0
    %2422 = vmatprep.subr.mxu0 0.0
    %2423 = vmatpush2.msra.mxu0 0.0
    %2424 = vmatprep.subr.mxu0 0.0
    %2425 = vmatpush2.msra.mxu0 0.0
    %2426 = vmatprep.subr.mxu0 0.0
    %2427 = vmatpush2.msra.mxu0 0.0
    %2428 = vmatprep.subr.mxu0 0.0
    %2429 = vmatpush2.msra.mxu0 0.0
    %2430 = vmatprep.subr.mxu0 0.0
    %2431 = vmatpush2.msra.mxu0 0.0
    %2432 = vmatprep.subr.mxu0 0.0
    %2433 = vmatpush2.msra.mxu0 0.0
    %2434 = vmatprep.subr.mxu0 0.0
    %2435 = vmatpush2.msra.mxu0 0.0
    %2436 = vmatprep.subr.mxu0 0.0
    %2437 = vmatpush2.msra.mxu0 0.0
    %2438 = vmatprep.subr.mxu0 0.0
    %2439 = vmatpush2.msra.mxu0 0.0
    %2440 = vmatprep.subr.mxu0 0.0
    %2441 = vmatpush2.msra.mxu0 0.0
    %2442 = vmatprep.subr.mxu0 0.0
    %2443 = vmatpush2.msra.mxu0 0.0
    %2444 = vmatprep.subr.mxu0 0.0
    %2445 = vmatpush2.msra.mxu0 0.0
    %2446 = vmatprep.subr.mxu0 0.0
    %2447 = vmatpush2.msra.mxu0 0.0
    %2448 = vmatprep.subr.mxu0 0.0
    %2449 = vmatpush2.msra.mxu0 0.0
    %2450 = vmatprep.mubr.f32.mxu0 0.0
    %2451 = vmatmul.mubr.f32.gmra.mxu0 %v2381
    %v2452 = vpop.f32.mrf.mxu0
    %v2453 = vadd.f32 %v2378, %v2452
    %v2454 = vpop.f32.mrf.mxu0
    %2455 = vmatprep.mubr.f32.mxu0 0.0
    %2456 = vmatmul.mubr.f32.gmra.mxu0 %v2384
    %v2457 = vpop.f32.mrf.mxu0
    %v2458 = vadd.f32 %v2378, %v2457
    %v2459 = vpop.f32.mrf.mxu0
    %2460 = vdwg.mxu0
    %v2461 = vmax.f32 %v2453, 0.0
    %v2462 = vmax.f32 %v2458, 0.0
    %v2464 = vlaneseq
    %v2465 = vshrl.u32 %v2464, 7
    %v2466 = vsub.s32 0, %v2465
    %v2467 = vrot.slane %v617, %v2466
    %vm2469 = vcmask 523264
    %v2471 = vsel %vm2469, %v2461, 0
    %v2474 = vsel %vm2469, %v2462, 0
    %2476 = vmatprep.subr.mxu0 0.0
    %2477 = vmatpush1.msra.mxu0 0.0
    %2478 = vmatprep.subr.mxu0 0.0
    %2479 = vmatpush1.msra.mxu0 0.0
    %2480 = vmatprep.subr.mxu0 0.0
    %2481 = vmatpush1.msra.mxu0 0.0
    %2482 = vmatprep.subr.mxu0 0.0
    %2483 = vmatpush1.msra.mxu0 0.0
    %2484 = vmatprep.subr.mxu0 0.0
    %2485 = vmatpush1.msra.mxu0 0.0
    %2486 = vmatprep.subr.mxu0 0.0
    %2487 = vmatpush1.msra.mxu0 0.0
    %2488 = vmatprep.subr.mxu0 0.0
    %2489 = vmatpush1.msra.mxu0 0.0
    %2490 = vmatprep.subr.mxu0 0.0
    %2491 = vmatpush1.msra.mxu0 0.0
    %2492 = vmatprep.subr.mxu0 0.0
    %2493 = vmatpush1.msra.mxu0 %v616
    %2494 = vmatprep.subr.mxu0 0.0
    %2495 = vmatpush1.msra.mxu0 %v615
    %2496 = vmatprep.subr.mxu0 0.0
    %2497 = vmatpush1.msra.mxu0 %v614
    %2498 = vmatprep.subr.mxu0 0.0
    %2499 = vmatpush1.msra.mxu0 %v613
    %2500 = vmatprep.subr.mxu0 0.0
    %2501 = vmatpush1.msra.mxu0 %v612
    %2502 = vmatprep.subr.mxu0 0.0
    %2503 = vmatpush1.msra.mxu0 %v611
    %2504 = vmatprep.subr.mxu0 0.0
    %2505 = vmatpush1.msra.mxu0 %v610
    %2506 = vmatprep.subr.mxu0 0.0
    %2507 = vmatpush1.msra.mxu0 %v609
    %2508 = vmatprep.subr.mxu0 0.0
    %2509 = vmatpush2.msra.mxu0 0.0
    %2510 = vmatprep.subr.mxu0 0.0
    %2511 = vmatpush2.msra.mxu0 0.0
    %2512 = vmatprep.subr.mxu0 0.0
    %2513 = vmatpush2.msra.mxu0 0.0
    %2514 = vmatprep.subr.mxu0 0.0
    %2515 = vmatpush2.msra.mxu0 0.0
    %2516 = vmatprep.subr.mxu0 0.0
    %2517 = vmatpush2.msra.mxu0 0.0
    %2518 = vmatprep.subr.mxu0 0.0
    %2519 = vmatpush2.msra.mxu0 0.0
    %2520 = vmatprep.subr.mxu0 0.0
    %2521 = vmatpush2.msra.mxu0 0.0
    %2522 = vmatprep.subr.mxu0 0.0
    %2523 = vmatpush2.msra.mxu0 0.0
    %2524 = vmatprep.subr.mxu0 0.0
    %2525 = vmatpush2.msra.mxu0 0.0
    %2526 = vmatprep.subr.mxu0 0.0
    %2527 = vmatpush2.msra.mxu0 0.0
    %2528 = vmatprep.subr.mxu0 0.0
    %2529 = vmatpush2.msra.mxu0 0.0
    %2530 = vmatprep.subr.mxu0 0.0
    %2531 = vmatpush2.msra.mxu0 0.0
    %2532 = vmatprep.subr.mxu0 0.0
    %2533 = vmatpush2.msra.mxu0 0.0
    %2534 = vmatprep.subr.mxu0 0.0
    %2535 = vmatpush2.msra.mxu0 0.0
    %2536 = vmatprep.subr.mxu0 0.0
    %2537 = vmatpush2.msra.mxu0 0.0
    %2538 = vmatprep.subr.mxu0 0.0
    %2539 = vmatpush2.msra.mxu0 0.0
    %2540 = vmatprep.mubr.f32.mxu0 0.0
    %2541 = vmatmul.mubr.f32.gmra.mxu0 %v2471
    %v2542 = vpop.f32.mrf.mxu0
    %v2543 = vadd.f32 %v2467, %v2542
    %v2544 = vpop.f32.mrf.mxu0
    %2545 = vmatprep.mubr.f32.mxu0 0.0
    %2546 = vmatmul.mubr.f32.gmra.mxu0 %v2474
    %v2547 = vpop.f32.mrf.mxu0
    %v2548 = vadd.f32 %v2467, %v2547
    %v2549 = vpop.f32.mrf.mxu0
    %2550 = vdwg.mxu0
    %v2551 = vadd.f32 %v2372, %v2543
    %v2552 = vadd.f32 %v2373, %v2548
    %v2553 = vsel %vm628, %v2551, 0.0
    %2554 = vadd.xlane.f32.xlu0 %v2553
    %v2555 = vpop.xlane.xlu0 %2554
    %v2556 = vsel %vm628, %v2552, 0.0
    %2557 = vadd.xlane.f32.xlu0 %v2556
    %v2558 = vpop.xlane.xlu0 %2557
    %v2559 = vmul.f32 %v2555, %v2337
    %v2560 = vmul.f32 %v2558, %v2337
    %v2561 = vsub.f32 %v2551, %v2559
    %v2562 = vsub.f32 %v2552, %v2560
    %v2563 = vmul.f32 %v2561, %v2561
    %v2564 = vmul.f32 %v2562, %v2562
    %v2565 = vsel %vm628, %v2563, 0.0
    %2566 = vadd.xlane.f32.xlu0 %v2565
    %v2567 = vpop.xlane.xlu0 %2566
    %v2568 = vsel %vm628, %v2564, 0.0
    %2569 = vadd.xlane.f32.xlu0 %v2568
    %v2570 = vpop.xlane.xlu0 %2569
    %v2571 = vmul.f32 %v2567, %v2337
    %v2572 = vmul.f32 %v2570, %v2337
    %v2573 = vadd.f32 %v2571, 1e-06
    %v2574 = vadd.f32 %v2572, 1e-06
    %v2575 = vrsqrt.pop %v2573
    %v2576 = vrsqrt.pop %v2574
    %v2577 = vmul.f32 %v2561, %v2575
    %v2578 = vmul.f32 %v2562, %v2576
    %v2580 = vlaneseq
    %v2581 = vshrl.u32 %v2580, 7
    %v2582 = vsub.s32 0, %v2581
    %v2583 = vrot.slane %v620, %v2582
    %v2585 = vmul.f32 %v2577, %v2583
    %v2586 = vmul.f32 %v2578, %v2583
    %v2588 = vlaneseq
    %v2589 = vshrl.u32 %v2588, 7
    %v2590 = vsub.s32 0, %v2589
    %v2591 = vrot.slane %v621, %v2590
    %v2593 = vadd.f32 %v2585, %v2591
    %v2594 = vadd.f32 %v2586, %v2591
    %v2595 = vld [vmem:[%s41] sm:$0xff]
    %v2596 = vld [vmem:[%s41 + $0x8] sm:$0xff]
    %v2597 = vld [vmem:[%s41 + $0x10] sm:$0xff]
    %v2598 = vld [vmem:[%s41 + $0x18] sm:$0xff]
    %v2599 = vld [vmem:[#allocation22] sm:$0x1]
    %v2600 = vld [vmem:[%s45] sm:$0xff]
    %v2601 = vld [vmem:[%s45 + $0x8] sm:$0xff]
    %v2602 = vld [vmem:[%s45 + $0x10] sm:$0xff]
    %v2603 = vld [vmem:[%s45 + $0x18] sm:$0xff]
    %v2604 = vld [vmem:[#allocation23] sm:$0x1]
    %v2605 = vld [vmem:[%s49] sm:$0xff]
    %v2606 = vld [vmem:[%s49 + $0x8] sm:$0xff]
    %v2607 = vld [vmem:[%s49 + $0x10] sm:$0xff]
    %v2608 = vld [vmem:[%s49 + $0x18] sm:$0xff]
    %v2609 = vld [vmem:[#allocation25] sm:$0x1]
    %v2610 = vld [vmem:[#allocation26] sm:$0xff]
    %v2611 = vld [vmem:[#allocation26 + $0x8] sm:$0xff]
    %v2612 = vld [vmem:[#allocation26 + $0x10] sm:$0xff]
    %v2613 = vld [vmem:[#allocation26 + $0x18] sm:$0xff]
    %v2614 = vld [vmem:[#allocation28] sm:$0x1]
    %v2615 = vld [vmem:[#allocation29] sm:$0xff]
    %v2616 = vld [vmem:[#allocation29 + $0x8] sm:$0xff]
    %v2617 = vld [vmem:[#allocation29 + $0x10] sm:$0xff]
    %v2618 = vld [vmem:[#allocation29 + $0x18] sm:$0xff]
    %v2619 = vld [vmem:[#allocation31] sm:$0x1]
    %v2620 = vld [vmem:[%s61] sm:$0xff]
    %v2621 = vld [vmem:[%s61 + $0x8] sm:$0xff]
    %v2622 = vld [vmem:[%s61 + $0x10] sm:$0xff]
    %v2623 = vld [vmem:[%s61 + $0x18] sm:$0xff]
    %v2624 = vld [vmem:[%s61 + $0x20] sm:$0xff]
    %v2625 = vld [vmem:[%s61 + $0x28] sm:$0xff]
    %v2626 = vld [vmem:[%s61 + $0x30] sm:$0xff]
    %v2627 = vld [vmem:[%s61 + $0x38] sm:$0xff]
    %v2628 = vld [vmem:[#allocation32] sm:$0x1]
    %v2629 = vld [vmem:[#allocation34] sm:$0x1]
    %v2630 = vld [vmem:[#allocation35] sm:$0x1]
    %v2631 = vld [vmem:[#allocation37] sm:$0x1]
    %v2632 = vld [vmem:[#allocation38] sm:$0x1]
    %v2634 = vlaneseq
    %v2635 = vshrl.u32 %v2634, 7
    %v2636 = vsub.s32 0, %v2635
    %v2637 = vrot.slane %v2599, %v2636
    %v2640 = vsel %vm628, %v2593, 0
    %v2643 = vsel %vm628, %v2594, 0
    %2645 = vmatprep.subr.mxu0 0.0
    %2646 = vmatpush1.msra.mxu0 0.0
    %2647 = vmatprep.subr.mxu0 0.0
    %2648 = vmatpush1.msra.mxu0 0.0
    %2649 = vmatprep.subr.mxu0 0.0
    %2650 = vmatpush1.msra.mxu0 0.0
    %2651 = vmatprep.subr.mxu0 0.0
    %2652 = vmatpush1.msra.mxu0 0.0
    %2653 = vmatprep.subr.mxu0 0.0
    %2654 = vmatpush1.msra.mxu0 0.0
    %2655 = vmatprep.subr.mxu0 0.0
    %2656 = vmatpush1.msra.mxu0 0.0
    %2657 = vmatprep.subr.mxu0 0.0
    %2658 = vmatpush1.msra.mxu0 0.0
    %2659 = vmatprep.subr.mxu0 0.0
    %2660 = vmatpush1.msra.mxu0 0.0
    %2661 = vmatprep.subr.mxu0 0.0
    %2662 = vmatpush1.msra.mxu0 0.0
    %2663 = vmatprep.subr.mxu0 0.0
    %2664 = vmatpush1.msra.mxu0 0.0
    %2665 = vmatprep.subr.mxu0 0.0
    %2666 = vmatpush1.msra.mxu0 0.0
    %2667 = vmatprep.subr.mxu0 0.0
    %2668 = vmatpush1.msra.mxu0 0.0
    %2669 = vmatprep.subr.mxu0 0.0
    %2670 = vmatpush1.msra.mxu0 %v2598
    %2671 = vmatprep.subr.mxu0 0.0
    %2672 = vmatpush1.msra.mxu0 %v2597
    %2673 = vmatprep.subr.mxu0 0.0
    %2674 = vmatpush1.msra.mxu0 %v2596
    %2675 = vmatprep.subr.mxu0 0.0
    %2676 = vmatpush1.msra.mxu0 %v2595
    %2677 = vmatprep.subr.mxu0 0.0
    %2678 = vmatpush2.msra.mxu0 0.0
    %2679 = vmatprep.subr.mxu0 0.0
    %2680 = vmatpush2.msra.mxu0 0.0
    %2681 = vmatprep.subr.mxu0 0.0
    %2682 = vmatpush2.msra.mxu0 0.0
    %2683 = vmatprep.subr.mxu0 0.0
    %2684 = vmatpush2.msra.mxu0 0.0
    %2685 = vmatprep.subr.mxu0 0.0
    %2686 = vmatpush2.msra.mxu0 0.0
    %2687 = vmatprep.subr.mxu0 0.0
    %2688 = vmatpush2.msra.mxu0 0.0
    %2689 = vmatprep.subr.mxu0 0.0
    %2690 = vmatpush2.msra.mxu0 0.0
    %2691 = vmatprep.subr.mxu0 0.0
    %2692 = vmatpush2.msra.mxu0 0.0
    %2693 = vmatprep.subr.mxu0 0.0
    %2694 = vmatpush2.msra.mxu0 0.0
    %2695 = vmatprep.subr.mxu0 0.0
    %2696 = vmatpush2.msra.mxu0 0.0
    %2697 = vmatprep.subr.mxu0 0.0
    %2698 = vmatpush2.msra.mxu0 0.0
    %2699 = vmatprep.subr.mxu0 0.0
    %2700 = vmatpush2.msra.mxu0 0.0
    %2701 = vmatprep.subr.mxu0 0.0
    %2702 = vmatpush2.msra.mxu0 0.0
    %2703 = vmatprep.subr.mxu0 0.0
    %2704 = vmatpush2.msra.mxu0 0.0
    %2705 = vmatprep.subr.mxu0 0.0
    %2706 = vmatpush2.msra.mxu0 0.0
    %2707 = vmatprep.subr.mxu0 0.0
    %2708 = vmatpush2.msra.mxu0 0.0
    %2709 = vmatprep.mubr.f32.mxu0 0.0
    %2710 = vmatmul.mubr.f32.gmra.mxu0 %v2640
    %v2711 = vpop.f32.mrf.mxu0
    %v2712 = vadd.f32 %v2637, %v2711
    %v2713 = vpop.f32.mrf.mxu0
    %2714 = vmatprep.mubr.f32.mxu0 0.0
    %2715 = vmatmul.mubr.f32.gmra.mxu0 %v2643
    %v2716 = vpop.f32.mrf.mxu0
    %v2717 = vadd.f32 %v2637, %v2716
    %v2718 = vpop.f32.mrf.mxu0
    %2719 = vdwg.mxu0
    %v2721 = vlaneseq
    %v2722 = vshrl.u32 %v2721, 7
    %v2723 = vsub.s32 0, %v2722
    %v2724 = vrot.slane %v2604, %v2723
    %2726 = vmatprep.subr.mxu0 0.0
    %2727 = vmatpush1.msra.mxu0 0.0
    %2728 = vmatprep.subr.mxu0 0.0
    %2729 = vmatpush1.msra.mxu0 0.0
    %2730 = vmatprep.subr.mxu0 0.0
    %2731 = vmatpush1.msra.mxu0 0.0
    %2732 = vmatprep.subr.mxu0 0.0
    %2733 = vmatpush1.msra.mxu0 0.0
    %2734 = vmatprep.subr.mxu0 0.0
    %2735 = vmatpush1.msra.mxu0 0.0
    %2736 = vmatprep.subr.mxu0 0.0
    %2737 = vmatpush1.msra.mxu0 0.0
    %2738 = vmatprep.subr.mxu0 0.0
    %2739 = vmatpush1.msra.mxu0 0.0
    %2740 = vmatprep.subr.mxu0 0.0
    %2741 = vmatpush1.msra.mxu0 0.0
    %2742 = vmatprep.subr.mxu0 0.0
    %2743 = vmatpush1.msra.mxu0 0.0
    %2744 = vmatprep.subr.mxu0 0.0
    %2745 = vmatpush1.msra.mxu0 0.0
    %2746 = vmatprep.subr.mxu0 0.0
    %2747 = vmatpush1.msra.mxu0 0.0
    %2748 = vmatprep.subr.mxu0 0.0
    %2749 = vmatpush1.msra.mxu0 0.0
    %2750 = vmatprep.subr.mxu0 0.0
    %2751 = vmatpush1.msra.mxu0 %v2603
    %2752 = vmatprep.subr.mxu0 0.0
    %2753 = vmatpush1.msra.mxu0 %v2602
    %2754 = vmatprep.subr.mxu0 0.0
    %2755 = vmatpush1.msra.mxu0 %v2601
    %2756 = vmatprep.subr.mxu0 0.0
    %2757 = vmatpush1.msra.mxu0 %v2600
    %2758 = vmatprep.subr.mxu0 0.0
    %2759 = vmatpush2.msra.mxu0 0.0
    %2760 = vmatprep.subr.mxu0 0.0
    %2761 = vmatpush2.msra.mxu0 0.0
    %2762 = vmatprep.subr.mxu0 0.0
    %2763 = vmatpush2.msra.mxu0 0.0
    %2764 = vmatprep.subr.mxu0 0.0
    %2765 = vmatpush2.msra.mxu0 0.0
    %2766 = vmatprep.subr.mxu0 0.0
    %2767 = vmatpush2.msra.mxu0 0.0
    %2768 = vmatprep.subr.mxu0 0.0
    %2769 = vmatpush2.msra.mxu0 0.0
    %2770 = vmatprep.subr.mxu0 0.0
    %2771 = vmatpush2.msra.mxu0 0.0
    %2772 = vmatprep.subr.mxu0 0.0
    %2773 = vmatpush2.msra.mxu0 0.0
    %2774 = vmatprep.subr.mxu0 0.0
    %2775 = vmatpush2.msra.mxu0 0.0
    %2776 = vmatprep.subr.mxu0 0.0
    %2777 = vmatpush2.msra.mxu0 0.0
    %2778 = vmatprep.subr.mxu0 0.0
    %2779 = vmatpush2.msra.mxu0 0.0
    %2780 = vmatprep.subr.mxu0 0.0
    %2781 = vmatpush2.msra.mxu0 0.0
    %2782 = vmatprep.subr.mxu0 0.0
    %2783 = vmatpush2.msra.mxu0 0.0
    %2784 = vmatprep.subr.mxu0 0.0
    %2785 = vmatpush2.msra.mxu0 0.0
    %2786 = vmatprep.subr.mxu0 0.0
    %2787 = vmatpush2.msra.mxu0 0.0
    %2788 = vmatprep.subr.mxu0 0.0
    %2789 = vmatpush2.msra.mxu0 0.0
    %2790 = vmatprep.mubr.f32.mxu0 0.0
    %2791 = vmatmul.mubr.f32.gmra.mxu0 %v2640
    %v2792 = vpop.f32.mrf.mxu0
    %v2793 = vadd.f32 %v2724, %v2792
    %v2794 = vpop.f32.mrf.mxu0
    %2795 = vmatprep.mubr.f32.mxu0 0.0
    %2796 = vmatmul.mubr.f32.gmra.mxu0 %v2643
    %v2797 = vpop.f32.mrf.mxu0
    %v2798 = vadd.f32 %v2724, %v2797
    %v2799 = vpop.f32.mrf.mxu0
    %2800 = vdwg.mxu0
    %v2802 = vlaneseq
    %v2803 = vshrl.u32 %v2802, 7
    %v2804 = vsub.s32 0, %v2803
    %v2805 = vrot.slane %v2609, %v2804
    %2807 = vmatprep.subr.mxu0 0.0
    %2808 = vmatpush1.msra.mxu0 0.0
    %2809 = vmatprep.subr.mxu0 0.0
    %2810 = vmatpush1.msra.mxu0 0.0
    %2811 = vmatprep.subr.mxu0 0.0
    %2812 = vmatpush1.msra.mxu0 0.0
    %2813 = vmatprep.subr.mxu0 0.0
    %2814 = vmatpush1.msra.mxu0 0.0
    %2815 = vmatprep.subr.mxu0 0.0
    %2816 = vmatpush1.msra.mxu0 0.0
    %2817 = vmatprep.subr.mxu0 0.0
    %2818 = vmatpush1.msra.mxu0 0.0
    %2819 = vmatprep.subr.mxu0 0.0
    %2820 = vmatpush1.msra.mxu0 0.0
    %2821 = vmatprep.subr.mxu0 0.0
    %2822 = vmatpush1.msra.mxu0 0.0
    %2823 = vmatprep.subr.mxu0 0.0
    %2824 = vmatpush1.msra.mxu0 0.0
    %2825 = vmatprep.subr.mxu0 0.0
    %2826 = vmatpush1.msra.mxu0 0.0
    %2827 = vmatprep.subr.mxu0 0.0
    %2828 = vmatpush1.msra.mxu0 0.0
    %2829 = vmatprep.subr.mxu0 0.0
    %2830 = vmatpush1.msra.mxu0 0.0
    %2831 = vmatprep.subr.mxu0 0.0
    %2832 = vmatpush1.msra.mxu0 %v2608
    %2833 = vmatprep.subr.mxu0 0.0
    %2834 = vmatpush1.msra.mxu0 %v2607
    %2835 = vmatprep.subr.mxu0 0.0
    %2836 = vmatpush1.msra.mxu0 %v2606
    %2837 = vmatprep.subr.mxu0 0.0
    %2838 = vmatpush1.msra.mxu0 %v2605
    %2839 = vmatprep.subr.mxu0 0.0
    %2840 = vmatpush2.msra.mxu0 0.0
    %2841 = vmatprep.subr.mxu0 0.0
    %2842 = vmatpush2.msra.mxu0 0.0
    %2843 = vmatprep.subr.mxu0 0.0
    %2844 = vmatpush2.msra.mxu0 0.0
    %2845 = vmatprep.subr.mxu0 0.0
    %2846 = vmatpush2.msra.mxu0 0.0
    %2847 = vmatprep.subr.mxu0 0.0
    %2848 = vmatpush2.msra.mxu0 0.0
    %2849 = vmatprep.subr.mxu0 0.0
    %2850 = vmatpush2.msra.mxu0 0.0
    %2851 = vmatprep.subr.mxu0 0.0
    %2852 = vmatpush2.msra.mxu0 0.0
    %2853 = vmatprep.subr.mxu0 0.0
    %2854 = vmatpush2.msra.mxu0 0.0
    %2855 = vmatprep.subr.mxu0 0.0
    %2856 = vmatpush2.msra.mxu0 0.0
    %2857 = vmatprep.subr.mxu0 0.0
    %2858 = vmatpush2.msra.mxu0 0.0
    %2859 = vmatprep.subr.mxu0 0.0
    %2860 = vmatpush2.msra.mxu0 0.0
    %2861 = vmatprep.subr.mxu0 0.0
    %2862 = vmatpush2.msra.mxu0 0.0
    %2863 = vmatprep.subr.mxu0 0.0
    %2864 = vmatpush2.msra.mxu0 0.0
    %2865 = vmatprep.subr.mxu0 0.0
    %2866 = vmatpush2.msra.mxu0 0.0
    %2867 = vmatprep.subr.mxu0 0.0
    %2868 = vmatpush2.msra.mxu0 0.0
    %2869 = vmatprep.subr.mxu0 0.0
    %2870 = vmatpush2.msra.mxu0 0.0
    %2871 = vmatprep.mubr.f32.mxu0 0.0
    %2872 = vmatmul.mubr.f32.gmra.mxu0 %v2640
    %v2873 = vpop.f32.mrf.mxu0
    %v2874 = vadd.f32 %v2805, %v2873
    %v2875 = vpop.f32.mrf.mxu0
    %2876 = vmatprep.mubr.f32.mxu0 0.0
    %2877 = vmatmul.mubr.f32.gmra.mxu0 %v2643
    %v2878 = vpop.f32.mrf.mxu0
    %v2879 = vadd.f32 %v2805, %v2878
    %v2880 = vpop.f32.mrf.mxu0
    %2881 = vdwg.mxu0
    %v2883 = vsel %vm872, %v2712, 0
    %v2886 = vsel %vm872, %v2793, 0
    %2888 = vmatprep.subr.mxu0 0.0
    %2889 = vmatpush1.xpose.msra.mxu0 0.0
    %2890 = vmatprep.subr.mxu0 0.0
    %2891 = vmatpush1.xpose.msra.mxu0 0.0
    %2892 = vmatprep.subr.mxu0 0.0
    %2893 = vmatpush1.xpose.msra.mxu0 0.0
    %2894 = vmatprep.subr.mxu0 0.0
    %2895 = vmatpush1.xpose.msra.mxu0 0.0
    %2896 = vmatprep.subr.mxu0 0.0
    %2897 = vmatpush1.xpose.msra.mxu0 0.0
    %2898 = vmatprep.subr.mxu0 0.0
    %2899 = vmatpush1.xpose.msra.mxu0 0.0
    %2900 = vmatprep.subr.mxu0 0.0
    %2901 = vmatpush1.xpose.msra.mxu0 0.0
    %2902 = vmatprep.subr.mxu0 0.0
    %2903 = vmatpush1.xpose.msra.mxu0 0.0
    %2904 = vmatprep.subr.mxu0 0.0
    %2905 = vmatpush1.xpose.msra.mxu0 0.0
    %2906 = vmatprep.subr.mxu0 0.0
    %2907 = vmatpush1.xpose.msra.mxu0 0.0
    %2908 = vmatprep.subr.mxu0 0.0
    %2909 = vmatpush1.xpose.msra.mxu0 0.0
    %2910 = vmatprep.subr.mxu0 0.0
    %2911 = vmatpush1.xpose.msra.mxu0 0.0
    %2912 = vmatprep.subr.mxu0 0.0
    %2913 = vmatpush1.xpose.msra.mxu0 0.0
    %2914 = vmatprep.subr.mxu0 0.0
    %2915 = vmatpush1.xpose.msra.mxu0 0.0
    %2916 = vmatprep.subr.mxu0 0.0
    %2917 = vmatpush1.xpose.msra.mxu0 0.0
    %2918 = vmatprep.subr.mxu0 0.0
    %2919 = vmatpush1.xpose.msra.mxu0 %v2886
    %2920 = vmatprep.subr.mxu0 0.0
    %2921 = vmatpush2.xpose.msra.mxu0 0.0
    %2922 = vmatprep.subr.mxu0 0.0
    %2923 = vmatpush2.xpose.msra.mxu0 0.0
    %2924 = vmatprep.subr.mxu0 0.0
    %2925 = vmatpush2.xpose.msra.mxu0 0.0
    %2926 = vmatprep.subr.mxu0 0.0
    %2927 = vmatpush2.xpose.msra.mxu0 0.0
    %2928 = vmatprep.subr.mxu0 0.0
    %2929 = vmatpush2.xpose.msra.mxu0 0.0
    %2930 = vmatprep.subr.mxu0 0.0
    %2931 = vmatpush2.xpose.msra.mxu0 0.0
    %2932 = vmatprep.subr.mxu0 0.0
    %2933 = vmatpush2.xpose.msra.mxu0 0.0
    %2934 = vmatprep.subr.mxu0 0.0
    %2935 = vmatpush2.xpose.msra.mxu0 0.0
    %2936 = vmatprep.subr.mxu0 0.0
    %2937 = vmatpush2.xpose.msra.mxu0 0.0
    %2938 = vmatprep.subr.mxu0 0.0
    %2939 = vmatpush2.xpose.msra.mxu0 0.0
    %2940 = vmatprep.subr.mxu0 0.0
    %2941 = vmatpush2.xpose.msra.mxu0 0.0
    %2942 = vmatprep.subr.mxu0 0.0
    %2943 = vmatpush2.xpose.msra.mxu0 0.0
    %2944 = vmatprep.subr.mxu0 0.0
    %2945 = vmatpush2.xpose.msra.mxu0 0.0
    %2946 = vmatprep.subr.mxu0 0.0
    %2947 = vmatpush2.xpose.msra.mxu0 0.0
    %2948 = vmatprep.subr.mxu0 0.0
    %2949 = vmatpush2.xpose.msra.mxu0 0.0
    %2950 = vmatprep.subr.mxu0 0.0
    %2951 = vmatpush2.xpose.msra.mxu0 0.0
    %2952 = vmatprep.mubr.f32.mxu0 0.0
    %2953 = vmatmul.mubr.f32.gmra.mxu0 %v2883
    %v2954 = vpop.f32.mrf.mxu0
    %v2955 = vadd.f32 0.0, %v2954
    %v2956 = vpop.f32.mrf.mxu0
    %2957 = vdwg.mxu0
    %v2959 = vsel %vm872, %v2717, 0
    %v2962 = vsel %vm872, %v2798, 0
    %2964 = vmatprep.subr.mxu0 0.0
    %2965 = vmatpush1.xpose.msra.mxu0 0.0
    %2966 = vmatprep.subr.mxu0 0.0
    %2967 = vmatpush1.xpose.msra.mxu0 0.0
    %2968 = vmatprep.subr.mxu0 0.0
    %2969 = vmatpush1.xpose.msra.mxu0 0.0
    %2970 = vmatprep.subr.mxu0 0.0
    %2971 = vmatpush1.xpose.msra.mxu0 0.0
    %2972 = vmatprep.subr.mxu0 0.0
    %2973 = vmatpush1.xpose.msra.mxu0 0.0
    %2974 = vmatprep.subr.mxu0 0.0
    %2975 = vmatpush1.xpose.msra.mxu0 0.0
    %2976 = vmatprep.subr.mxu0 0.0
    %2977 = vmatpush1.xpose.msra.mxu0 0.0
    %2978 = vmatprep.subr.mxu0 0.0
    %2979 = vmatpush1.xpose.msra.mxu0 0.0
    %2980 = vmatprep.subr.mxu0 0.0
    %2981 = vmatpush1.xpose.msra.mxu0 0.0
    %2982 = vmatprep.subr.mxu0 0.0
    %2983 = vmatpush1.xpose.msra.mxu0 0.0
    %2984 = vmatprep.subr.mxu0 0.0
    %2985 = vmatpush1.xpose.msra.mxu0 0.0
    %2986 = vmatprep.subr.mxu0 0.0
    %2987 = vmatpush1.xpose.msra.mxu0 0.0
    %2988 = vmatprep.subr.mxu0 0.0
    %2989 = vmatpush1.xpose.msra.mxu0 0.0
    %2990 = vmatprep.subr.mxu0 0.0
    %2991 = vmatpush1.xpose.msra.mxu0 0.0
    %2992 = vmatprep.subr.mxu0 0.0
    %2993 = vmatpush1.xpose.msra.mxu0 0.0
    %2994 = vmatprep.subr.mxu0 0.0
    %2995 = vmatpush1.xpose.msra.mxu0 %v2962
    %2996 = vmatprep.subr.mxu0 0.0
    %2997 = vmatpush2.xpose.msra.mxu0 0.0
    %2998 = vmatprep.subr.mxu0 0.0
    %2999 = vmatpush2.xpose.msra.mxu0 0.0
    %3000 = vmatprep.subr.mxu0 0.0
    %3001 = vmatpush2.xpose.msra.mxu0 0.0
    %3002 = vmatprep.subr.mxu0 0.0
    %3003 = vmatpush2.xpose.msra.mxu0 0.0
    %3004 = vmatprep.subr.mxu0 0.0
    %3005 = vmatpush2.xpose.msra.mxu0 0.0
    %3006 = vmatprep.subr.mxu0 0.0
    %3007 = vmatpush2.xpose.msra.mxu0 0.0
    %3008 = vmatprep.subr.mxu0 0.0
    %3009 = vmatpush2.xpose.msra.mxu0 0.0
    %3010 = vmatprep.subr.mxu0 0.0
    %3011 = vmatpush2.xpose.msra.mxu0 0.0
    %3012 = vmatprep.subr.mxu0 0.0
    %3013 = vmatpush2.xpose.msra.mxu0 0.0
    %3014 = vmatprep.subr.mxu0 0.0
    %3015 = vmatpush2.xpose.msra.mxu0 0.0
    %3016 = vmatprep.subr.mxu0 0.0
    %3017 = vmatpush2.xpose.msra.mxu0 0.0
    %3018 = vmatprep.subr.mxu0 0.0
    %3019 = vmatpush2.xpose.msra.mxu0 0.0
    %3020 = vmatprep.subr.mxu0 0.0
    %3021 = vmatpush2.xpose.msra.mxu0 0.0
    %3022 = vmatprep.subr.mxu0 0.0
    %3023 = vmatpush2.xpose.msra.mxu0 0.0
    %3024 = vmatprep.subr.mxu0 0.0
    %3025 = vmatpush2.xpose.msra.mxu0 0.0
    %3026 = vmatprep.subr.mxu0 0.0
    %3027 = vmatpush2.xpose.msra.mxu0 0.0
    %3028 = vmatprep.mubr.f32.mxu0 0.0
    %3029 = vmatmul.mubr.f32.gmra.mxu0 %v2959
    %v3030 = vpop.f32.mrf.mxu0
    %v3031 = vadd.f32 0.0, %v3030
    %v3032 = vpop.f32.mrf.mxu0
    %3033 = vdwg.mxu0
    %v3034 = vmul.f32 %v2955, 0.35355338
    %v3035 = vmul.f32 %v3031, 0.35355338
    %v3036 = vadd.f32 %v3034, %v1030
    %v3037 = vadd.f32 %v3035, %v1034
    %v3038 = vsel %vm872, %v3036, -inf
    %3039 = vmax.xlane.f32.xlu0 %v3038
    %v3040 = vpop.xlane.xlu0 %3039
    %v3041 = vsel %vm872, %v3037, -inf
    %3042 = vmax.xlane.f32.xlu0 %v3041
    %v3043 = vpop.xlane.xlu0 %3042
    %v3044 = vsub.f32 %v3036, %v3040
    %v3045 = vsub.f32 %v3037, %v3043
    %v3046 = vmul.f32 %v3044, 1.442695
    %v3047 = vpow.pop %v3046
    %v3048 = vmul.f32 %v3045, 1.442695
    %v3049 = vpow.pop %v3048
    %v3050 = vsel %vm872, %v3047, 0.0
    %3051 = vadd.xlane.f32.xlu0 %v3050
    %v3052 = vpop.xlane.xlu0 %3051
    %v3053 = vsel %vm872, %v3049, 0.0
    %3054 = vadd.xlane.f32.xlu0 %v3053
    %v3055 = vpop.xlane.xlu0 %3054
    %v3056 = vrcp.pop %v3052
    %v3057 = vrcp.pop %v3055
    %v3058 = vmul.f32 %v3047, %v3056
    %v3059 = vmul.f32 %v3049, %v3057
    %v3061 = vsel %vm872, %v3058, 0
    %3063 = vmatprep.subr.mxu0 0.0
    %3064 = vmatpush1.msra.mxu0 0.0
    %3065 = vmatprep.subr.mxu0 0.0
    %3066 = vmatpush1.msra.mxu0 0.0
    %3067 = vmatprep.subr.mxu0 0.0
    %3068 = vmatpush1.msra.mxu0 0.0
    %3069 = vmatprep.subr.mxu0 0.0
    %3070 = vmatpush1.msra.mxu0 0.0
    %3071 = vmatprep.subr.mxu0 0.0
    %3072 = vmatpush1.msra.mxu0 0.0
    %3073 = vmatprep.subr.mxu0 0.0
    %3074 = vmatpush1.msra.mxu0 0.0
    %3075 = vmatprep.subr.mxu0 0.0
    %3076 = vmatpush1.msra.mxu0 0.0
    %3077 = vmatprep.subr.mxu0 0.0
    %3078 = vmatpush1.msra.mxu0 0.0
    %3079 = vmatprep.subr.mxu0 0.0
    %3080 = vmatpush1.msra.mxu0 0.0
    %3081 = vmatprep.subr.mxu0 0.0
    %3082 = vmatpush1.msra.mxu0 0.0
    %3083 = vmatprep.subr.mxu0 0.0
    %3084 = vmatpush1.msra.mxu0 0.0
    %3085 = vmatprep.subr.mxu0 0.0
    %3086 = vmatpush1.msra.mxu0 0.0
    %3087 = vmatprep.subr.mxu0 0.0
    %3088 = vmatpush1.msra.mxu0 0.0
    %3089 = vmatprep.subr.mxu0 0.0
    %3090 = vmatpush1.msra.mxu0 0.0
    %3091 = vmatprep.subr.mxu0 0.0
    %3092 = vmatpush1.msra.mxu0 0.0
    %3093 = vmatprep.subr.mxu0 0.0
    %3094 = vmatpush1.msra.mxu0 %v2874
    %3095 = vmatprep.subr.mxu0 0.0
    %3096 = vmatpush2.msra.mxu0 0.0
    %3097 = vmatprep.subr.mxu0 0.0
    %3098 = vmatpush2.msra.mxu0 0.0
    %3099 = vmatprep.subr.mxu0 0.0
    %3100 = vmatpush2.msra.mxu0 0.0
    %3101 = vmatprep.subr.mxu0 0.0
    %3102 = vmatpush2.msra.mxu0 0.0
    %3103 = vmatprep.subr.mxu0 0.0
    %3104 = vmatpush2.msra.mxu0 0.0
    %3105 = vmatprep.subr.mxu0 0.0
    %3106 = vmatpush2.msra.mxu0 0.0
    %3107 = vmatprep.subr.mxu0 0.0
    %3108 = vmatpush2.msra.mxu0 0.0
    %3109 = vmatprep.subr.mxu0 0.0
    %3110 = vmatpush2.msra.mxu0 0.0
    %3111 = vmatprep.subr.mxu0 0.0
    %3112 = vmatpush2.msra.mxu0 0.0
    %3113 = vmatprep.subr.mxu0 0.0
    %3114 = vmatpush2.msra.mxu0 0.0
    %3115 = vmatprep.subr.mxu0 0.0
    %3116 = vmatpush2.msra.mxu0 0.0
    %3117 = vmatprep.subr.mxu0 0.0
    %3118 = vmatpush2.msra.mxu0 0.0
    %3119 = vmatprep.subr.mxu0 0.0
    %3120 = vmatpush2.msra.mxu0 0.0
    %3121 = vmatprep.subr.mxu0 0.0
    %3122 = vmatpush2.msra.mxu0 0.0
    %3123 = vmatprep.subr.mxu0 0.0
    %3124 = vmatpush2.msra.mxu0 0.0
    %3125 = vmatprep.subr.mxu0 0.0
    %3126 = vmatpush2.msra.mxu0 0.0
    %3127 = vmatprep.mubr.f32.mxu0 0.0
    %3128 = vmatmul.mubr.f32.gmra.mxu0 %v3061
    %v3129 = vpop.f32.mrf.mxu0
    %v3130 = vadd.f32 0.0, %v3129
    %v3131 = vpop.f32.mrf.mxu0
    %3132 = vdwg.mxu0
    %v3134 = vsel %vm872, %v3059, 0
    %3136 = vmatprep.subr.mxu0 0.0
    %3137 = vmatpush1.msra.mxu0 0.0
    %3138 = vmatprep.subr.mxu0 0.0
    %3139 = vmatpush1.msra.mxu0 0.0
    %3140 = vmatprep.subr.mxu0 0.0
    %3141 = vmatpush1.msra.mxu0 0.0
    %3142 = vmatprep.subr.mxu0 0.0
    %3143 = vmatpush1.msra.mxu0 0.0
    %3144 = vmatprep.subr.mxu0 0.0
    %3145 = vmatpush1.msra.mxu0 0.0
    %3146 = vmatprep.subr.mxu0 0.0
    %3147 = vmatpush1.msra.mxu0 0.0
    %3148 = vmatprep.subr.mxu0 0.0
    %3149 = vmatpush1.msra.mxu0 0.0
    %3150 = vmatprep.subr.mxu0 0.0
    %3151 = vmatpush1.msra.mxu0 0.0
    %3152 = vmatprep.subr.mxu0 0.0
    %3153 = vmatpush1.msra.mxu0 0.0
    %3154 = vmatprep.subr.mxu0 0.0
    %3155 = vmatpush1.msra.mxu0 0.0
    %3156 = vmatprep.subr.mxu0 0.0
    %3157 = vmatpush1.msra.mxu0 0.0
    %3158 = vmatprep.subr.mxu0 0.0
    %3159 = vmatpush1.msra.mxu0 0.0
    %3160 = vmatprep.subr.mxu0 0.0
    %3161 = vmatpush1.msra.mxu0 0.0
    %3162 = vmatprep.subr.mxu0 0.0
    %3163 = vmatpush1.msra.mxu0 0.0
    %3164 = vmatprep.subr.mxu0 0.0
    %3165 = vmatpush1.msra.mxu0 0.0
    %3166 = vmatprep.subr.mxu0 0.0
    %3167 = vmatpush1.msra.mxu0 %v2879
    %3168 = vmatprep.subr.mxu0 0.0
    %3169 = vmatpush2.msra.mxu0 0.0
    %3170 = vmatprep.subr.mxu0 0.0
    %3171 = vmatpush2.msra.mxu0 0.0
    %3172 = vmatprep.subr.mxu0 0.0
    %3173 = vmatpush2.msra.mxu0 0.0
    %3174 = vmatprep.subr.mxu0 0.0
    %3175 = vmatpush2.msra.mxu0 0.0
    %3176 = vmatprep.subr.mxu0 0.0
    %3177 = vmatpush2.msra.mxu0 0.0
    %3178 = vmatprep.subr.mxu0 0.0
    %3179 = vmatpush2.msra.mxu0 0.0
    %3180 = vmatprep.subr.mxu0 0.0
    %3181 = vmatpush2.msra.mxu0 0.0
    %3182 = vmatprep.subr.mxu0 0.0
    %3183 = vmatpush2.msra.mxu0 0.0
    %3184 = vmatprep.subr.mxu0 0.0
    %3185 = vmatpush2.msra.mxu0 0.0
    %3186 = vmatprep.subr.mxu0 0.0
    %3187 = vmatpush2.msra.mxu0 0.0
    %3188 = vmatprep.subr.mxu0 0.0
    %3189 = vmatpush2.msra.mxu0 0.0
    %3190 = vmatprep.subr.mxu0 0.0
    %3191 = vmatpush2.msra.mxu0 0.0
    %3192 = vmatprep.subr.mxu0 0.0
    %3193 = vmatpush2.msra.mxu0 0.0
    %3194 = vmatprep.subr.mxu0 0.0
    %3195 = vmatpush2.msra.mxu0 0.0
    %3196 = vmatprep.subr.mxu0 0.0
    %3197 = vmatpush2.msra.mxu0 0.0
    %3198 = vmatprep.subr.mxu0 0.0
    %3199 = vmatpush2.msra.mxu0 0.0
    %3200 = vmatprep.mubr.f32.mxu0 0.0
    %3201 = vmatmul.mubr.f32.gmra.mxu0 %v3134
    %v3202 = vpop.f32.mrf.mxu0
    %v3203 = vadd.f32 0.0, %v3202
    %v3204 = vpop.f32.mrf.mxu0
    %3205 = vdwg.mxu0
    %3206 = vrot.lane.b32.xlu0 %v2712, 120
    %v3207 = vpop.permute.xlu0 %3206
    %3208 = vrot.lane.b32.xlu0 %v2793, 120
    %v3209 = vpop.permute.xlu0 %3208
    %v3210 = vsel %vm872, %v3207, 0
    %v3212 = vsel %vm872, %v3209, 0
    %3214 = vmatprep.subr.mxu0 0.0
    %3215 = vmatpush1.xpose.msra.mxu0 0.0
    %3216 = vmatprep.subr.mxu0 0.0
    %3217 = vmatpush1.xpose.msra.mxu0 0.0
    %3218 = vmatprep.subr.mxu0 0.0
    %3219 = vmatpush1.xpose.msra.mxu0 0.0
    %3220 = vmatprep.subr.mxu0 0.0
    %3221 = vmatpush1.xpose.msra.mxu0 0.0
    %3222 = vmatprep.subr.mxu0 0.0
    %3223 = vmatpush1.xpose.msra.mxu0 0.0
    %3224 = vmatprep.subr.mxu0 0.0
    %3225 = vmatpush1.xpose.msra.mxu0 0.0
    %3226 = vmatprep.subr.mxu0 0.0
    %3227 = vmatpush1.xpose.msra.mxu0 0.0
    %3228 = vmatprep.subr.mxu0 0.0
    %3229 = vmatpush1.xpose.msra.mxu0 0.0
    %3230 = vmatprep.subr.mxu0 0.0
    %3231 = vmatpush1.xpose.msra.mxu0 0.0
    %3232 = vmatprep.subr.mxu0 0.0
    %3233 = vmatpush1.xpose.msra.mxu0 0.0
    %3234 = vmatprep.subr.mxu0 0.0
    %3235 = vmatpush1.xpose.msra.mxu0 0.0
    %3236 = vmatprep.subr.mxu0 0.0
    %3237 = vmatpush1.xpose.msra.mxu0 0.0
    %3238 = vmatprep.subr.mxu0 0.0
    %3239 = vmatpush1.xpose.msra.mxu0 0.0
    %3240 = vmatprep.subr.mxu0 0.0
    %3241 = vmatpush1.xpose.msra.mxu0 0.0
    %3242 = vmatprep.subr.mxu0 0.0
    %3243 = vmatpush1.xpose.msra.mxu0 0.0
    %3244 = vmatprep.subr.mxu0 0.0
    %3245 = vmatpush1.xpose.msra.mxu0 %v3212
    %3246 = vmatprep.subr.mxu0 0.0
    %3247 = vmatpush2.xpose.msra.mxu0 0.0
    %3248 = vmatprep.subr.mxu0 0.0
    %3249 = vmatpush2.xpose.msra.mxu0 0.0
    %3250 = vmatprep.subr.mxu0 0.0
    %3251 = vmatpush2.xpose.msra.mxu0 0.0
    %3252 = vmatprep.subr.mxu0 0.0
    %3253 = vmatpush2.xpose.msra.mxu0 0.0
    %3254 = vmatprep.subr.mxu0 0.0
    %3255 = vmatpush2.xpose.msra.mxu0 0.0
    %3256 = vmatprep.subr.mxu0 0.0
    %3257 = vmatpush2.xpose.msra.mxu0 0.0
    %3258 = vmatprep.subr.mxu0 0.0
    %3259 = vmatpush2.xpose.msra.mxu0 0.0
    %3260 = vmatprep.subr.mxu0 0.0
    %3261 = vmatpush2.xpose.msra.mxu0 0.0
    %3262 = vmatprep.subr.mxu0 0.0
    %3263 = vmatpush2.xpose.msra.mxu0 0.0
    %3264 = vmatprep.subr.mxu0 0.0
    %3265 = vmatpush2.xpose.msra.mxu0 0.0
    %3266 = vmatprep.subr.mxu0 0.0
    %3267 = vmatpush2.xpose.msra.mxu0 0.0
    %3268 = vmatprep.subr.mxu0 0.0
    %3269 = vmatpush2.xpose.msra.mxu0 0.0
    %3270 = vmatprep.subr.mxu0 0.0
    %3271 = vmatpush2.xpose.msra.mxu0 0.0
    %3272 = vmatprep.subr.mxu0 0.0
    %3273 = vmatpush2.xpose.msra.mxu0 0.0
    %3274 = vmatprep.subr.mxu0 0.0
    %3275 = vmatpush2.xpose.msra.mxu0 0.0
    %3276 = vmatprep.subr.mxu0 0.0
    %3277 = vmatpush2.xpose.msra.mxu0 0.0
    %3278 = vmatprep.mubr.f32.mxu0 0.0
    %3279 = vmatmul.mubr.f32.gmra.mxu0 %v3210
    %v3280 = vpop.f32.mrf.mxu0
    %v3281 = vadd.f32 0.0, %v3280
    %v3282 = vpop.f32.mrf.mxu0
    %3283 = vdwg.mxu0
    %3284 = vrot.lane.b32.xlu0 %v2717, 120
    %v3285 = vpop.permute.xlu0 %3284
    %3286 = vrot.lane.b32.xlu0 %v2798, 120
    %v3287 = vpop.permute.xlu0 %3286
    %v3288 = vsel %vm872, %v3285, 0
    %v3290 = vsel %vm872, %v3287, 0
    %3292 = vmatprep.subr.mxu0 0.0
    %3293 = vmatpush1.xpose.msra.mxu0 0.0
    %3294 = vmatprep.subr.mxu0 0.0
    %3295 = vmatpush1.xpose.msra.mxu0 0.0
    %3296 = vmatprep.subr.mxu0 0.0
    %3297 = vmatpush1.xpose.msra.mxu0 0.0
    %3298 = vmatprep.subr.mxu0 0.0
    %3299 = vmatpush1.xpose.msra.mxu0 0.0
    %3300 = vmatprep.subr.mxu0 0.0
    %3301 = vmatpush1.xpose.msra.mxu0 0.0
    %3302 = vmatprep.subr.mxu0 0.0
    %3303 = vmatpush1.xpose.msra.mxu0 0.0
    %3304 = vmatprep.subr.mxu0 0.0
    %3305 = vmatpush1.xpose.msra.mxu0 0.0
    %3306 = vmatprep.subr.mxu0 0.0
    %3307 = vmatpush1.xpose.msra.mxu0 0.0
    %3308 = vmatprep.subr.mxu0 0.0
    %3309 = vmatpush1.xpose.msra.mxu0 0.0
    %3310 = vmatprep.subr.mxu0 0.0
    %3311 = vmatpush1.xpose.msra.mxu0 0.0
    %3312 = vmatprep.subr.mxu0 0.0
    %3313 = vmatpush1.xpose.msra.mxu0 0.0
    %3314 = vmatprep.subr.mxu0 0.0
    %3315 = vmatpush1.xpose.msra.mxu0 0.0
    %3316 = vmatprep.subr.mxu0 0.0
    %3317 = vmatpush1.xpose.msra.mxu0 0.0
    %3318 = vmatprep.subr.mxu0 0.0
    %3319 = vmatpush1.xpose.msra.mxu0 0.0
    %3320 = vmatprep.subr.mxu0 0.0
    %3321 = vmatpush1.xpose.msra.mxu0 0.0
    %3322 = vmatprep.subr.mxu0 0.0
    %3323 = vmatpush1.xpose.msra.mxu0 %v3290
    %3324 = vmatprep.subr.mxu0 0.0
    %3325 = vmatpush2.xpose.msra.mxu0 0.0
    %3326 = vmatprep.subr.mxu0 0.0
    %3327 = vmatpush2.xpose.msra.mxu0 0.0
    %3328 = vmatprep.subr.mxu0 0.0
    %3329 = vmatpush2.xpose.msra.mxu0 0.0
    %3330 = vmatprep.subr.mxu0 0.0
    %3331 = vmatpush2.xpose.msra.mxu0 0.0
    %3332 = vmatprep.subr.mxu0 0.0
    %3333 = vmatpush2.xpose.msra.mxu0 0.0
    %3334 = vmatprep.subr.mxu0 0.0
    %3335 = vmatpush2.xpose.msra.mxu0 0.0
    %3336 = vmatprep.subr.mxu0 0.0
    %3337 = vmatpush2.xpose.msra.mxu0 0.0
    %3338 = vmatprep.subr.mxu0 0.0
    %3339 = vmatpush2.xpose.msra.mxu0 0.0
    %3340 = vmatprep.subr.mxu0 0.0
    %3341 = vmatpush2.xpose.msra.mxu0 0.0
    %3342 = vmatprep.subr.mxu0 0.0
    %3343 = vmatpush2.xpose.msra.mxu0 0.0
    %3344 = vmatprep.subr.mxu0 0.0
    %3345 = vmatpush2.xpose.msra.mxu0 0.0
    %3346 = vmatprep.subr.mxu0 0.0
    %3347 = vmatpush2.xpose.msra.mxu0 0.0
    %3348 = vmatprep.subr.mxu0 0.0
    %3349 = vmatpush2.xpose.msra.mxu0 0.0
    %3350 = vmatprep.subr.mxu0 0.0
    %3351 = vmatpush2.xpose.msra.mxu0 0.0
    %3352 = vmatprep.subr.mxu0 0.0
    %3353 = vmatpush2.xpose.msra.mxu0 0.0
    %3354 = vmatprep.subr.mxu0 0.0
    %3355 = vmatpush2.xpose.msra.mxu0 0.0
    %3356 = vmatprep.mubr.f32.mxu0 0.0
    %3357 = vmatmul.mubr.f32.gmra.mxu0 %v3288
    %v3358 = vpop.f32.mrf.mxu0
    %v3359 = vadd.f32 0.0, %v3358
    %v3360 = vpop.f32.mrf.mxu0
    %3361 = vdwg.mxu0
    %v3362 = vmul.f32 %v3281, 0.35355338
    %v3363 = vmul.f32 %v3359, 0.35355338
    %v3364 = vadd.f32 %v3362, %v1030
    %v3365 = vadd.f32 %v3363, %v1034
    %v3366 = vsel %vm872, %v3364, -inf
    %3367 = vmax.xlane.f32.xlu0 %v3366
    %v3368 = vpop.xlane.xlu0 %3367
    %v3369 = vsel %vm872, %v3365, -inf
    %3370 = vmax.xlane.f32.xlu0 %v3369
    %v3371 = vpop.xlane.xlu0 %3370
    %v3372 = vsub.f32 %v3364, %v3368
    %v3373 = vsub.f32 %v3365, %v3371
    %v3374 = vmul.f32 %v3372, 1.442695
    %v3375 = vpow.pop %v3374
    %v3376 = vmul.f32 %v3373, 1.442695
    %v3377 = vpow.pop %v3376
    %v3378 = vsel %vm872, %v3375, 0.0
    %3379 = vadd.xlane.f32.xlu0 %v3378
    %v3380 = vpop.xlane.xlu0 %3379
    %v3381 = vsel %vm872, %v3377, 0.0
    %3382 = vadd.xlane.f32.xlu0 %v3381
    %v3383 = vpop.xlane.xlu0 %3382
    %v3384 = vrcp.pop %v3380
    %v3385 = vrcp.pop %v3383
    %v3386 = vmul.f32 %v3375, %v3384
    %v3387 = vmul.f32 %v3377, %v3385
    %3389 = vrot.lane.b32.xlu0 %v2874, 120
    %v3390 = vpop.permute.xlu0 %3389
    %v3393 = vsel %vm872, %v3386, 0
    %3395 = vmatprep.subr.mxu0 0.0
    %3396 = vmatpush1.msra.mxu0 0.0
    %3397 = vmatprep.subr.mxu0 0.0
    %3398 = vmatpush1.msra.mxu0 0.0
    %3399 = vmatprep.subr.mxu0 0.0
    %3400 = vmatpush1.msra.mxu0 0.0
    %3401 = vmatprep.subr.mxu0 0.0
    %3402 = vmatpush1.msra.mxu0 0.0
    %3403 = vmatprep.subr.mxu0 0.0
    %3404 = vmatpush1.msra.mxu0 0.0
    %3405 = vmatprep.subr.mxu0 0.0
    %3406 = vmatpush1.msra.mxu0 0.0
    %3407 = vmatprep.subr.mxu0 0.0
    %3408 = vmatpush1.msra.mxu0 0.0
    %3409 = vmatprep.subr.mxu0 0.0
    %3410 = vmatpush1.msra.mxu0 0.0
    %3411 = vmatprep.subr.mxu0 0.0
    %3412 = vmatpush1.msra.mxu0 0.0
    %3413 = vmatprep.subr.mxu0 0.0
    %3414 = vmatpush1.msra.mxu0 0.0
    %3415 = vmatprep.subr.mxu0 0.0
    %3416 = vmatpush1.msra.mxu0 0.0
    %3417 = vmatprep.subr.mxu0 0.0
    %3418 = vmatpush1.msra.mxu0 0.0
    %3419 = vmatprep.subr.mxu0 0.0
    %3420 = vmatpush1.msra.mxu0 0.0
    %3421 = vmatprep.subr.mxu0 0.0
    %3422 = vmatpush1.msra.mxu0 0.0
    %3423 = vmatprep.subr.mxu0 0.0
    %3424 = vmatpush1.msra.mxu0 0.0
    %3425 = vmatprep.subr.mxu0 0.0
    %3426 = vmatpush1.msra.mxu0 %v3390
    %3427 = vmatprep.subr.mxu0 0.0
    %3428 = vmatpush2.msra.mxu0 0.0
    %3429 = vmatprep.subr.mxu0 0.0
    %3430 = vmatpush2.msra.mxu0 0.0
    %3431 = vmatprep.subr.mxu0 0.0
    %3432 = vmatpush2.msra.mxu0 0.0
    %3433 = vmatprep.subr.mxu0 0.0
    %3434 = vmatpush2.msra.mxu0 0.0
    %3435 = vmatprep.subr.mxu0 0.0
    %3436 = vmatpush2.msra.mxu0 0.0
    %3437 = vmatprep.subr.mxu0 0.0
    %3438 = vmatpush2.msra.mxu0 0.0
    %3439 = vmatprep.subr.mxu0 0.0
    %3440 = vmatpush2.msra.mxu0 0.0
    %3441 = vmatprep.subr.mxu0 0.0
    %3442 = vmatpush2.msra.mxu0 0.0
    %3443 = vmatprep.subr.mxu0 0.0
    %3444 = vmatpush2.msra.mxu0 0.0
    %3445 = vmatprep.subr.mxu0 0.0
    %3446 = vmatpush2.msra.mxu0 0.0
    %3447 = vmatprep.subr.mxu0 0.0
    %3448 = vmatpush2.msra.mxu0 0.0
    %3449 = vmatprep.subr.mxu0 0.0
    %3450 = vmatpush2.msra.mxu0 0.0
    %3451 = vmatprep.subr.mxu0 0.0
    %3452 = vmatpush2.msra.mxu0 0.0
    %3453 = vmatprep.subr.mxu0 0.0
    %3454 = vmatpush2.msra.mxu0 0.0
    %3455 = vmatprep.subr.mxu0 0.0
    %3456 = vmatpush2.msra.mxu0 0.0
    %3457 = vmatprep.subr.mxu0 0.0
    %3458 = vmatpush2.msra.mxu0 0.0
    %3459 = vmatprep.mubr.f32.mxu0 0.0
    %3460 = vmatmul.mubr.f32.gmra.mxu0 %v3393
    %v3461 = vpop.f32.mrf.mxu0
    %v3462 = vadd.f32 0.0, %v3461
    %v3463 = vpop.f32.mrf.mxu0
    %3464 = vdwg.mxu0
    %3466 = vrot.lane.b32.xlu0 %v2879, 120
    %v3467 = vpop.permute.xlu0 %3466
    %v3470 = vsel %vm872, %v3387, 0
    %3472 = vmatprep.subr.mxu0 0.0
    %3473 = vmatpush1.msra.mxu0 0.0
    %3474 = vmatprep.subr.mxu0 0.0
    %3475 = vmatpush1.msra.mxu0 0.0
    %3476 = vmatprep.subr.mxu0 0.0
    %3477 = vmatpush1.msra.mxu0 0.0
    %3478 = vmatprep.subr.mxu0 0.0
    %3479 = vmatpush1.msra.mxu0 0.0
    %3480 = vmatprep.subr.mxu0 0.0
    %3481 = vmatpush1.msra.mxu0 0.0
    %3482 = vmatprep.subr.mxu0 0.0
    %3483 = vmatpush1.msra.mxu0 0.0
    %3484 = vmatprep.subr.mxu0 0.0
    %3485 = vmatpush1.msra.mxu0 0.0
    %3486 = vmatprep.subr.mxu0 0.0
    %3487 = vmatpush1.msra.mxu0 0.0
    %3488 = vmatprep.subr.mxu0 0.0
    %3489 = vmatpush1.msra.mxu0 0.0
    %3490 = vmatprep.subr.mxu0 0.0
    %3491 = vmatpush1.msra.mxu0 0.0
    %3492 = vmatprep.subr.mxu0 0.0
    %3493 = vmatpush1.msra.mxu0 0.0
    %3494 = vmatprep.subr.mxu0 0.0
    %3495 = vmatpush1.msra.mxu0 0.0
    %3496 = vmatprep.subr.mxu0 0.0
    %3497 = vmatpush1.msra.mxu0 0.0
    %3498 = vmatprep.subr.mxu0 0.0
    %3499 = vmatpush1.msra.mxu0 0.0
    %3500 = vmatprep.subr.mxu0 0.0
    %3501 = vmatpush1.msra.mxu0 0.0
    %3502 = vmatprep.subr.mxu0 0.0
    %3503 = vmatpush1.msra.mxu0 %v3467
    %3504 = vmatprep.subr.mxu0 0.0
    %3505 = vmatpush2.msra.mxu0 0.0
    %3506 = vmatprep.subr.mxu0 0.0
    %3507 = vmatpush2.msra.mxu0 0.0
    %3508 = vmatprep.subr.mxu0 0.0
    %3509 = vmatpush2.msra.mxu0 0.0
    %3510 = vmatprep.subr.mxu0 0.0
    %3511 = vmatpush2.msra.mxu0 0.0
    %3512 = vmatprep.subr.mxu0 0.0
    %3513 = vmatpush2.msra.mxu0 0.0
    %3514 = vmatprep.subr.mxu0 0.0
    %3515 = vmatpush2.msra.mxu0 0.0
    %3516 = vmatprep.subr.mxu0 0.0
    %3517 = vmatpush2.msra.mxu0 0.0
    %3518 = vmatprep.subr.mxu0 0.0
    %3519 = vmatpush2.msra.mxu0 0.0
    %3520 = vmatprep.subr.mxu0 0.0
    %3521 = vmatpush2.msra.mxu0 0.0
    %3522 = vmatprep.subr.mxu0 0.0
    %3523 = vmatpush2.msra.mxu0 0.0
    %3524 = vmatprep.subr.mxu0 0.0
    %3525 = vmatpush2.msra.mxu0 0.0
    %3526 = vmatprep.subr.mxu0 0.0
    %3527 = vmatpush2.msra.mxu0 0.0
    %3528 = vmatprep.subr.mxu0 0.0
    %3529 = vmatpush2.msra.mxu0 0.0
    %3530 = vmatprep.subr.mxu0 0.0
    %3531 = vmatpush2.msra.mxu0 0.0
    %3532 = vmatprep.subr.mxu0 0.0
    %3533 = vmatpush2.msra.mxu0 0.0
    %3534 = vmatprep.subr.mxu0 0.0
    %3535 = vmatpush2.msra.mxu0 0.0
    %3536 = vmatprep.mubr.f32.mxu0 0.0
    %3537 = vmatmul.mubr.f32.gmra.mxu0 %v3470
    %v3538 = vpop.f32.mrf.mxu0
    %v3539 = vadd.f32 0.0, %v3538
    %v3540 = vpop.f32.mrf.mxu0
    %3541 = vdwg.mxu0
    %3542 = vrot.lane.b32.xlu0 %v2712, 112
    %v3543 = vpop.permute.xlu0 %3542
    %3544 = vrot.lane.b32.xlu0 %v2793, 112
    %v3545 = vpop.permute.xlu0 %3544
    %v3546 = vsel %vm872, %v3543, 0
    %v3548 = vsel %vm872, %v3545, 0
    %3550 = vmatprep.subr.mxu0 0.0
    %3551 = vmatpush1.xpose.msra.mxu0 0.0
    %3552 = vmatprep.subr.mxu0 0.0
    %3553 = vmatpush1.xpose.msra.mxu0 0.0
    %3554 = vmatprep.subr.mxu0 0.0
    %3555 = vmatpush1.xpose.msra.mxu0 0.0
    %3556 = vmatprep.subr.mxu0 0.0
    %3557 = vmatpush1.xpose.msra.mxu0 0.0
    %3558 = vmatprep.subr.mxu0 0.0
    %3559 = vmatpush1.xpose.msra.mxu0 0.0
    %3560 = vmatprep.subr.mxu0 0.0
    %3561 = vmatpush1.xpose.msra.mxu0 0.0
    %3562 = vmatprep.subr.mxu0 0.0
    %3563 = vmatpush1.xpose.msra.mxu0 0.0
    %3564 = vmatprep.subr.mxu0 0.0
    %3565 = vmatpush1.xpose.msra.mxu0 0.0
    %3566 = vmatprep.subr.mxu0 0.0
    %3567 = vmatpush1.xpose.msra.mxu0 0.0
    %3568 = vmatprep.subr.mxu0 0.0
    %3569 = vmatpush1.xpose.msra.mxu0 0.0
    %3570 = vmatprep.subr.mxu0 0.0
    %3571 = vmatpush1.xpose.msra.mxu0 0.0
    %3572 = vmatprep.subr.mxu0 0.0
    %3573 = vmatpush1.xpose.msra.mxu0 0.0
    %3574 = vmatprep.subr.mxu0 0.0
    %3575 = vmatpush1.xpose.msra.mxu0 0.0
    %3576 = vmatprep.subr.mxu0 0.0
    %3577 = vmatpush1.xpose.msra.mxu0 0.0
    %3578 = vmatprep.subr.mxu0 0.0
    %3579 = vmatpush1.xpose.msra.mxu0 0.0
    %3580 = vmatprep.subr.mxu0 0.0
    %3581 = vmatpush1.xpose.msra.mxu0 %v3548
    %3582 = vmatprep.subr.mxu0 0.0
    %3583 = vmatpush2.xpose.msra.mxu0 0.0
    %3584 = vmatprep.subr.mxu0 0.0
    %3585 = vmatpush2.xpose.msra.mxu0 0.0
    %3586 = vmatprep.subr.mxu0 0.0
    %3587 = vmatpush2.xpose.msra.mxu0 0.0
    %3588 = vmatprep.subr.mxu0 0.0
    %3589 = vmatpush2.xpose.msra.mxu0 0.0
    %3590 = vmatprep.subr.mxu0 0.0
    %3591 = vmatpush2.xpose.msra.mxu0 0.0
    %3592 = vmatprep.subr.mxu0 0.0
    %3593 = vmatpush2.xpose.msra.mxu0 0.0
    %3594 = vmatprep.subr.mxu0 0.0
    %3595 = vmatpush2.xpose.msra.mxu0 0.0
    %3596 = vmatprep.subr.mxu0 0.0
    %3597 = vmatpush2.xpose.msra.mxu0 0.0
    %3598 = vmatprep.subr.mxu0 0.0
    %3599 = vmatpush2.xpose.msra.mxu0 0.0
    %3600 = vmatprep.subr.mxu0 0.0
    %3601 = vmatpush2.xpose.msra.mxu0 0.0
    %3602 = vmatprep.subr.mxu0 0.0
    %3603 = vmatpush2.xpose.msra.mxu0 0.0
    %3604 = vmatprep.subr.mxu0 0.0
    %3605 = vmatpush2.xpose.msra.mxu0 0.0
    %3606 = vmatprep.subr.mxu0 0.0
    %3607 = vmatpush2.xpose.msra.mxu0 0.0
    %3608 = vmatprep.subr.mxu0 0.0
    %3609 = vmatpush2.xpose.msra.mxu0 0.0
    %3610 = vmatprep.subr.mxu0 0.0
    %3611 = vmatpush2.xpose.msra.mxu0 0.0
    %3612 = vmatprep.subr.mxu0 0.0
    %3613 = vmatpush2.xpose.msra.mxu0 0.0
    %3614 = vmatprep.mubr.f32.mxu0 0.0
    %3615 = vmatmul.mubr.f32.gmra.mxu0 %v3546
    %v3616 = vpop.f32.mrf.mxu0
    %v3617 = vadd.f32 0.0, %v3616
    %v3618 = vpop.f32.mrf.mxu0
    %3619 = vdwg.mxu0
    %3620 = vrot.lane.b32.xlu0 %v2717, 112
    %v3621 = vpop.permute.xlu0 %3620
    %3622 = vrot.lane.b32.xlu0 %v2798, 112
    %v3623 = vpop.permute.xlu0 %3622
    %v3624 = vsel %vm872, %v3621, 0
    %v3626 = vsel %vm872, %v3623, 0
    %3628 = vmatprep.subr.mxu0 0.0
    %3629 = vmatpush1.xpose.msra.mxu0 0.0
    %3630 = vmatprep.subr.mxu0 0.0
    %3631 = vmatpush1.xpose.msra.mxu0 0.0
    %3632 = vmatprep.subr.mxu0 0.0
    %3633 = vmatpush1.xpose.msra.mxu0 0.0
    %3634 = vmatprep.subr.mxu0 0.0
    %3635 = vmatpush1.xpose.msra.mxu0 0.0
    %3636 = vmatprep.subr.mxu0 0.0
    %3637 = vmatpush1.xpose.msra.mxu0 0.0
    %3638 = vmatprep.subr.mxu0 0.0
    %3639 = vmatpush1.xpose.msra.mxu0 0.0
    %3640 = vmatprep.subr.mxu0 0.0
    %3641 = vmatpush1.xpose.msra.mxu0 0.0
    %3642 = vmatprep.subr.mxu0 0.0
    %3643 = vmatpush1.xpose.msra.mxu0 0.0
    %3644 = vmatprep.subr.mxu0 0.0
    %3645 = vmatpush1.xpose.msra.mxu0 0.0
    %3646 = vmatprep.subr.mxu0 0.0
    %3647 = vmatpush1.xpose.msra.mxu0 0.0
    %3648 = vmatprep.subr.mxu0 0.0
    %3649 = vmatpush1.xpose.msra.mxu0 0.0
    %3650 = vmatprep.subr.mxu0 0.0
    %3651 = vmatpush1.xpose.msra.mxu0 0.0
    %3652 = vmatprep.subr.mxu0 0.0
    %3653 = vmatpush1.xpose.msra.mxu0 0.0
    %3654 = vmatprep.subr.mxu0 0.0
    %3655 = vmatpush1.xpose.msra.mxu0 0.0
    %3656 = vmatprep.subr.mxu0 0.0
    %3657 = vmatpush1.xpose.msra.mxu0 0.0
    %3658 = vmatprep.subr.mxu0 0.0
    %3659 = vmatpush1.xpose.msra.mxu0 %v3626
    %3660 = vmatprep.subr.mxu0 0.0
    %3661 = vmatpush2.xpose.msra.mxu0 0.0
    %3662 = vmatprep.subr.mxu0 0.0
    %3663 = vmatpush2.xpose.msra.mxu0 0.0
    %3664 = vmatprep.subr.mxu0 0.0
    %3665 = vmatpush2.xpose.msra.mxu0 0.0
    %3666 = vmatprep.subr.mxu0 0.0
    %3667 = vmatpush2.xpose.msra.mxu0 0.0
    %3668 = vmatprep.subr.mxu0 0.0
    %3669 = vmatpush2.xpose.msra.mxu0 0.0
    %3670 = vmatprep.subr.mxu0 0.0
    %3671 = vmatpush2.xpose.msra.mxu0 0.0
    %3672 = vmatprep.subr.mxu0 0.0
    %3673 = vmatpush2.xpose.msra.mxu0 0.0
    %3674 = vmatprep.subr.mxu0 0.0
    %3675 = vmatpush2.xpose.msra.mxu0 0.0
    %3676 = vmatprep.subr.mxu0 0.0
    %3677 = vmatpush2.xpose.msra.mxu0 0.0
    %3678 = vmatprep.subr.mxu0 0.0
    %3679 = vmatpush2.xpose.msra.mxu0 0.0
    %3680 = vmatprep.subr.mxu0 0.0
    %3681 = vmatpush2.xpose.msra.mxu0 0.0
    %3682 = vmatprep.subr.mxu0 0.0
    %3683 = vmatpush2.xpose.msra.mxu0 0.0
    %3684 = vmatprep.subr.mxu0 0.0
    %3685 = vmatpush2.xpose.msra.mxu0 0.0
    %3686 = vmatprep.subr.mxu0 0.0
    %3687 = vmatpush2.xpose.msra.mxu0 0.0
    %3688 = vmatprep.subr.mxu0 0.0
    %3689 = vmatpush2.xpose.msra.mxu0 0.0
    %3690 = vmatprep.subr.mxu0 0.0
    %3691 = vmatpush2.xpose.msra.mxu0 0.0
    %3692 = vmatprep.mubr.f32.mxu0 0.0
    %3693 = vmatmul.mubr.f32.gmra.mxu0 %v3624
    %v3694 = vpop.f32.mrf.mxu0
    %v3695 = vadd.f32 0.0, %v3694
    %v3696 = vpop.f32.mrf.mxu0
    %3697 = vdwg.mxu0
    %v3698 = vmul.f32 %v3617, 0.35355338
    %v3699 = vmul.f32 %v3695, 0.35355338
    %v3700 = vadd.f32 %v3698, %v1030
    %v3701 = vadd.f32 %v3699, %v1034
    %v3702 = vsel %vm872, %v3700, -inf
    %3703 = vmax.xlane.f32.xlu0 %v3702
    %v3704 = vpop.xlane.xlu0 %3703
    %v3705 = vsel %vm872, %v3701, -inf
    %3706 = vmax.xlane.f32.xlu0 %v3705
    %v3707 = vpop.xlane.xlu0 %3706
    %v3708 = vsub.f32 %v3700, %v3704
    %v3709 = vsub.f32 %v3701, %v3707
    %v3710 = vmul.f32 %v3708, 1.442695
    %v3711 = vpow.pop %v3710
    %v3712 = vmul.f32 %v3709, 1.442695
    %v3713 = vpow.pop %v3712
    %v3714 = vsel %vm872, %v3711, 0.0
    %3715 = vadd.xlane.f32.xlu0 %v3714
    %v3716 = vpop.xlane.xlu0 %3715
    %v3717 = vsel %vm872, %v3713, 0.0
    %3718 = vadd.xlane.f32.xlu0 %v3717
    %v3719 = vpop.xlane.xlu0 %3718
    %v3720 = vrcp.pop %v3716
    %v3721 = vrcp.pop %v3719
    %v3722 = vmul.f32 %v3711, %v3720
    %v3723 = vmul.f32 %v3713, %v3721
    %3724 = vrot.lane.b32.xlu0 %v2874, 112
    %v3725 = vpop.permute.xlu0 %3724
    %v3728 = vsel %vm872, %v3722, 0
    %3730 = vmatprep.subr.mxu0 0.0
    %3731 = vmatpush1.msra.mxu0 0.0
    %3732 = vmatprep.subr.mxu0 0.0
    %3733 = vmatpush1.msra.mxu0 0.0
    %3734 = vmatprep.subr.mxu0 0.0
    %3735 = vmatpush1.msra.mxu0 0.0
    %3736 = vmatprep.subr.mxu0 0.0
    %3737 = vmatpush1.msra.mxu0 0.0
    %3738 = vmatprep.subr.mxu0 0.0
    %3739 = vmatpush1.msra.mxu0 0.0
    %3740 = vmatprep.subr.mxu0 0.0
    %3741 = vmatpush1.msra.mxu0 0.0
    %3742 = vmatprep.subr.mxu0 0.0
    %3743 = vmatpush1.msra.mxu0 0.0
    %3744 = vmatprep.subr.mxu0 0.0
    %3745 = vmatpush1.msra.mxu0 0.0
    %3746 = vmatprep.subr.mxu0 0.0
    %3747 = vmatpush1.msra.mxu0 0.0
    %3748 = vmatprep.subr.mxu0 0.0
    %3749 = vmatpush1.msra.mxu0 0.0
    %3750 = vmatprep.subr.mxu0 0.0
    %3751 = vmatpush1.msra.mxu0 0.0
    %3752 = vmatprep.subr.mxu0 0.0
    %3753 = vmatpush1.msra.mxu0 0.0
    %3754 = vmatprep.subr.mxu0 0.0
    %3755 = vmatpush1.msra.mxu0 0.0
    %3756 = vmatprep.subr.mxu0 0.0
    %3757 = vmatpush1.msra.mxu0 0.0
    %3758 = vmatprep.subr.mxu0 0.0
    %3759 = vmatpush1.msra.mxu0 0.0
    %3760 = vmatprep.subr.mxu0 0.0
    %3761 = vmatpush1.msra.mxu0 %v3725
    %3762 = vmatprep.subr.mxu0 0.0
    %3763 = vmatpush2.msra.mxu0 0.0
    %3764 = vmatprep.subr.mxu0 0.0
    %3765 = vmatpush2.msra.mxu0 0.0
    %3766 = vmatprep.subr.mxu0 0.0
    %3767 = vmatpush2.msra.mxu0 0.0
    %3768 = vmatprep.subr.mxu0 0.0
    %3769 = vmatpush2.msra.mxu0 0.0
    %3770 = vmatprep.subr.mxu0 0.0
    %3771 = vmatpush2.msra.mxu0 0.0
    %3772 = vmatprep.subr.mxu0 0.0
    %3773 = vmatpush2.msra.mxu0 0.0
    %3774 = vmatprep.subr.mxu0 0.0
    %3775 = vmatpush2.msra.mxu0 0.0
    %3776 = vmatprep.subr.mxu0 0.0
    %3777 = vmatpush2.msra.mxu0 0.0
    %3778 = vmatprep.subr.mxu0 0.0
    %3779 = vmatpush2.msra.mxu0 0.0
    %3780 = vmatprep.subr.mxu0 0.0
    %3781 = vmatpush2.msra.mxu0 0.0
    %3782 = vmatprep.subr.mxu0 0.0
    %3783 = vmatpush2.msra.mxu0 0.0
    %3784 = vmatprep.subr.mxu0 0.0
    %3785 = vmatpush2.msra.mxu0 0.0
    %3786 = vmatprep.subr.mxu0 0.0
    %3787 = vmatpush2.msra.mxu0 0.0
    %3788 = vmatprep.subr.mxu0 0.0
    %3789 = vmatpush2.msra.mxu0 0.0
    %3790 = vmatprep.subr.mxu0 0.0
    %3791 = vmatpush2.msra.mxu0 0.0
    %3792 = vmatprep.subr.mxu0 0.0
    %3793 = vmatpush2.msra.mxu0 0.0
    %3794 = vmatprep.mubr.f32.mxu0 0.0
    %3795 = vmatmul.mubr.f32.gmra.mxu0 %v3728
    %v3796 = vpop.f32.mrf.mxu0
    %v3797 = vadd.f32 0.0, %v3796
    %v3798 = vpop.f32.mrf.mxu0
    %3799 = vdwg.mxu0
    %3800 = vrot.lane.b32.xlu0 %v2879, 112
    %v3801 = vpop.permute.xlu0 %3800
    %v3804 = vsel %vm872, %v3723, 0
    %3806 = vmatprep.subr.mxu0 0.0
    %3807 = vmatpush1.msra.mxu0 0.0
    %3808 = vmatprep.subr.mxu0 0.0
    %3809 = vmatpush1.msra.mxu0 0.0
    %3810 = vmatprep.subr.mxu0 0.0
    %3811 = vmatpush1.msra.mxu0 0.0
    %3812 = vmatprep.subr.mxu0 0.0
    %3813 = vmatpush1.msra.mxu0 0.0
    %3814 = vmatprep.subr.mxu0 0.0
    %3815 = vmatpush1.msra.mxu0 0.0
    %3816 = vmatprep.subr.mxu0 0.0
    %3817 = vmatpush1.msra.mxu0 0.0
    %3818 = vmatprep.subr.mxu0 0.0
    %3819 = vmatpush1.msra.mxu0 0.0
    %3820 = vmatprep.subr.mxu0 0.0
    %3821 = vmatpush1.msra.mxu0 0.0
    %3822 = vmatprep.subr.mxu0 0.0
    %3823 = vmatpush1.msra.mxu0 0.0
    %3824 = vmatprep.subr.mxu0 0.0
    %3825 = vmatpush1.msra.mxu0 0.0
    %3826 = vmatprep.subr.mxu0 0.0
    %3827 = vmatpush1.msra.mxu0 0.0
    %3828 = vmatprep.subr.mxu0 0.0
    %3829 = vmatpush1.msra.mxu0 0.0
    %3830 = vmatprep.subr.mxu0 0.0
    %3831 = vmatpush1.msra.mxu0 0.0
    %3832 = vmatprep.subr.mxu0 0.0
    %3833 = vmatpush1.msra.mxu0 0.0
    %3834 = vmatprep.subr.mxu0 0.0
    %3835 = vmatpush1.msra.mxu0 0.0
    %3836 = vmatprep.subr.mxu0 0.0
    %3837 = vmatpush1.msra.mxu0 %v3801
    %3838 = vmatprep.subr.mxu0 0.0
    %3839 = vmatpush2.msra.mxu0 0.0
    %3840 = vmatprep.subr.mxu0 0.0
    %3841 = vmatpush2.msra.mxu0 0.0
    %3842 = vmatprep.subr.mxu0 0.0
    %3843 = vmatpush2.msra.mxu0 0.0
    %3844 = vmatprep.subr.mxu0 0.0
    %3845 = vmatpush2.msra.mxu0 0.0
    %3846 = vmatprep.subr.mxu0 0.0
    %3847 = vmatpush2.msra.mxu0 0.0
    %3848 = vmatprep.subr.mxu0 0.0
    %3849 = vmatpush2.msra.mxu0 0.0
    %3850 = vmatprep.subr.mxu0 0.0
    %3851 = vmatpush2.msra.mxu0 0.0
    %3852 = vmatprep.subr.mxu0 0.0
    %3853 = vmatpush2.msra.mxu0 0.0
    %3854 = vmatprep.subr.mxu0 0.0
    %3855 = vmatpush2.msra.mxu0 0.0
    %3856 = vmatprep.subr.mxu0 0.0
    %3857 = vmatpush2.msra.mxu0 0.0
    %3858 = vmatprep.subr.mxu0 0.0
    %3859 = vmatpush2.msra.mxu0 0.0
    %3860 = vmatprep.subr.mxu0 0.0
    %3861 = vmatpush2.msra.mxu0 0.0
    %3862 = vmatprep.subr.mxu0 0.0
    %3863 = vmatpush2.msra.mxu0 0.0
    %3864 = vmatprep.subr.mxu0 0.0
    %3865 = vmatpush2.msra.mxu0 0.0
    %3866 = vmatprep.subr.mxu0 0.0
    %3867 = vmatpush2.msra.mxu0 0.0
    %3868 = vmatprep.subr.mxu0 0.0
    %3869 = vmatpush2.msra.mxu0 0.0
    %3870 = vmatprep.mubr.f32.mxu0 0.0
    %3871 = vmatmul.mubr.f32.gmra.mxu0 %v3804
    %v3872 = vpop.f32.mrf.mxu0
    %v3873 = vadd.f32 0.0, %v3872
    %v3874 = vpop.f32.mrf.mxu0
    %3875 = vdwg.mxu0
    %3876 = vrot.lane.b32.xlu0 %v2712, 104
    %v3877 = vpop.permute.xlu0 %3876
    %3878 = vrot.lane.b32.xlu0 %v2793, 104
    %v3879 = vpop.permute.xlu0 %3878
    %v3880 = vsel %vm872, %v3877, 0
    %v3882 = vsel %vm872, %v3879, 0
    %3884 = vmatprep.subr.mxu0 0.0
    %3885 = vmatpush1.xpose.msra.mxu0 0.0
    %3886 = vmatprep.subr.mxu0 0.0
    %3887 = vmatpush1.xpose.msra.mxu0 0.0
    %3888 = vmatprep.subr.mxu0 0.0
    %3889 = vmatpush1.xpose.msra.mxu0 0.0
    %3890 = vmatprep.subr.mxu0 0.0
    %3891 = vmatpush1.xpose.msra.mxu0 0.0
    %3892 = vmatprep.subr.mxu0 0.0
    %3893 = vmatpush1.xpose.msra.mxu0 0.0
    %3894 = vmatprep.subr.mxu0 0.0
    %3895 = vmatpush1.xpose.msra.mxu0 0.0
    %3896 = vmatprep.subr.mxu0 0.0
    %3897 = vmatpush1.xpose.msra.mxu0 0.0
    %3898 = vmatprep.subr.mxu0 0.0
    %3899 = vmatpush1.xpose.msra.mxu0 0.0
    %3900 = vmatprep.subr.mxu0 0.0
    %3901 = vmatpush1.xpose.msra.mxu0 0.0
    %3902 = vmatprep.subr.mxu0 0.0
    %3903 = vmatpush1.xpose.msra.mxu0 0.0
    %3904 = vmatprep.subr.mxu0 0.0
    %3905 = vmatpush1.xpose.msra.mxu0 0.0
    %3906 = vmatprep.subr.mxu0 0.0
    %3907 = vmatpush1.xpose.msra.mxu0 0.0
    %3908 = vmatprep.subr.mxu0 0.0
    %3909 = vmatpush1.xpose.msra.mxu0 0.0
    %3910 = vmatprep.subr.mxu0 0.0
    %3911 = vmatpush1.xpose.msra.mxu0 0.0
    %3912 = vmatprep.subr.mxu0 0.0
    %3913 = vmatpush1.xpose.msra.mxu0 0.0
    %3914 = vmatprep.subr.mxu0 0.0
    %3915 = vmatpush1.xpose.msra.mxu0 %v3882
    %3916 = vmatprep.subr.mxu0 0.0
    %3917 = vmatpush2.xpose.msra.mxu0 0.0
    %3918 = vmatprep.subr.mxu0 0.0
    %3919 = vmatpush2.xpose.msra.mxu0 0.0
    %3920 = vmatprep.subr.mxu0 0.0
    %3921 = vmatpush2.xpose.msra.mxu0 0.0
    %3922 = vmatprep.subr.mxu0 0.0
    %3923 = vmatpush2.xpose.msra.mxu0 0.0
    %3924 = vmatprep.subr.mxu0 0.0
    %3925 = vmatpush2.xpose.msra.mxu0 0.0
    %3926 = vmatprep.subr.mxu0 0.0
    %3927 = vmatpush2.xpose.msra.mxu0 0.0
    %3928 = vmatprep.subr.mxu0 0.0
    %3929 = vmatpush2.xpose.msra.mxu0 0.0
    %3930 = vmatprep.subr.mxu0 0.0
    %3931 = vmatpush2.xpose.msra.mxu0 0.0
    %3932 = vmatprep.subr.mxu0 0.0
    %3933 = vmatpush2.xpose.msra.mxu0 0.0
    %3934 = vmatprep.subr.mxu0 0.0
    %3935 = vmatpush2.xpose.msra.mxu0 0.0
    %3936 = vmatprep.subr.mxu0 0.0
    %3937 = vmatpush2.xpose.msra.mxu0 0.0
    %3938 = vmatprep.subr.mxu0 0.0
    %3939 = vmatpush2.xpose.msra.mxu0 0.0
    %3940 = vmatprep.subr.mxu0 0.0
    %3941 = vmatpush2.xpose.msra.mxu0 0.0
    %3942 = vmatprep.subr.mxu0 0.0
    %3943 = vmatpush2.xpose.msra.mxu0 0.0
    %3944 = vmatprep.subr.mxu0 0.0
    %3945 = vmatpush2.xpose.msra.mxu0 0.0
    %3946 = vmatprep.subr.mxu0 0.0
    %3947 = vmatpush2.xpose.msra.mxu0 0.0
    %3948 = vmatprep.mubr.f32.mxu0 0.0
    %3949 = vmatmul.mubr.f32.gmra.mxu0 %v3880
    %v3950 = vpop.f32.mrf.mxu0
    %v3951 = vadd.f32 0.0, %v3950
    %v3952 = vpop.f32.mrf.mxu0
    %3953 = vdwg.mxu0
    %3954 = vrot.lane.b32.xlu0 %v2717, 104
    %v3955 = vpop.permute.xlu0 %3954
    %3956 = vrot.lane.b32.xlu0 %v2798, 104
    %v3957 = vpop.permute.xlu0 %3956
    %v3958 = vsel %vm872, %v3955, 0
    %v3960 = vsel %vm872, %v3957, 0
    %3962 = vmatprep.subr.mxu0 0.0
    %3963 = vmatpush1.xpose.msra.mxu0 0.0
    %3964 = vmatprep.subr.mxu0 0.0
    %3965 = vmatpush1.xpose.msra.mxu0 0.0
    %3966 = vmatprep.subr.mxu0 0.0
    %3967 = vmatpush1.xpose.msra.mxu0 0.0
    %3968 = vmatprep.subr.mxu0 0.0
    %3969 = vmatpush1.xpose.msra.mxu0 0.0
    %3970 = vmatprep.subr.mxu0 0.0
    %3971 = vmatpush1.xpose.msra.mxu0 0.0
    %3972 = vmatprep.subr.mxu0 0.0
    %3973 = vmatpush1.xpose.msra.mxu0 0.0
    %3974 = vmatprep.subr.mxu0 0.0
    %3975 = vmatpush1.xpose.msra.mxu0 0.0
    %3976 = vmatprep.subr.mxu0 0.0
    %3977 = vmatpush1.xpose.msra.mxu0 0.0
    %3978 = vmatprep.subr.mxu0 0.0
    %3979 = vmatpush1.xpose.msra.mxu0 0.0
    %3980 = vmatprep.subr.mxu0 0.0
    %3981 = vmatpush1.xpose.msra.mxu0 0.0
    %3982 = vmatprep.subr.mxu0 0.0
    %3983 = vmatpush1.xpose.msra.mxu0 0.0
    %3984 = vmatprep.subr.mxu0 0.0
    %3985 = vmatpush1.xpose.msra.mxu0 0.0
    %3986 = vmatprep.subr.mxu0 0.0
    %3987 = vmatpush1.xpose.msra.mxu0 0.0
    %3988 = vmatprep.subr.mxu0 0.0
    %3989 = vmatpush1.xpose.msra.mxu0 0.0
    %3990 = vmatprep.subr.mxu0 0.0
    %3991 = vmatpush1.xpose.msra.mxu0 0.0
    %3992 = vmatprep.subr.mxu0 0.0
    %3993 = vmatpush1.xpose.msra.mxu0 %v3960
    %3994 = vmatprep.subr.mxu0 0.0
    %3995 = vmatpush2.xpose.msra.mxu0 0.0
    %3996 = vmatprep.subr.mxu0 0.0
    %3997 = vmatpush2.xpose.msra.mxu0 0.0
    %3998 = vmatprep.subr.mxu0 0.0
    %3999 = vmatpush2.xpose.msra.mxu0 0.0
    %4000 = vmatprep.subr.mxu0 0.0
    %4001 = vmatpush2.xpose.msra.mxu0 0.0
    %4002 = vmatprep.subr.mxu0 0.0
    %4003 = vmatpush2.xpose.msra.mxu0 0.0
    %4004 = vmatprep.subr.mxu0 0.0
    %4005 = vmatpush2.xpose.msra.mxu0 0.0
    %4006 = vmatprep.subr.mxu0 0.0
    %4007 = vmatpush2.xpose.msra.mxu0 0.0
    %4008 = vmatprep.subr.mxu0 0.0
    %4009 = vmatpush2.xpose.msra.mxu0 0.0
    %4010 = vmatprep.subr.mxu0 0.0
    %4011 = vmatpush2.xpose.msra.mxu0 0.0
    %4012 = vmatprep.subr.mxu0 0.0
    %4013 = vmatpush2.xpose.msra.mxu0 0.0
    %4014 = vmatprep.subr.mxu0 0.0
    %4015 = vmatpush2.xpose.msra.mxu0 0.0
    %4016 = vmatprep.subr.mxu0 0.0
    %4017 = vmatpush2.xpose.msra.mxu0 0.0
    %4018 = vmatprep.subr.mxu0 0.0
    %4019 = vmatpush2.xpose.msra.mxu0 0.0
    %4020 = vmatprep.subr.mxu0 0.0
    %4021 = vmatpush2.xpose.msra.mxu0 0.0
    %4022 = vmatprep.subr.mxu0 0.0
    %4023 = vmatpush2.xpose.msra.mxu0 0.0
    %4024 = vmatprep.subr.mxu0 0.0
    %4025 = vmatpush2.xpose.msra.mxu0 0.0
    %4026 = vmatprep.mubr.f32.mxu0 0.0
    %4027 = vmatmul.mubr.f32.gmra.mxu0 %v3958
    %v4028 = vpop.f32.mrf.mxu0
    %v4029 = vadd.f32 0.0, %v4028
    %v4030 = vpop.f32.mrf.mxu0
    %4031 = vdwg.mxu0
    %v4032 = vmul.f32 %v3951, 0.35355338
    %v4033 = vmul.f32 %v4029, 0.35355338
    %v4034 = vadd.f32 %v4032, %v1030
    %v4035 = vadd.f32 %v4033, %v1034
    %v4036 = vsel %vm872, %v4034, -inf
    %4037 = vmax.xlane.f32.xlu0 %v4036
    %v4038 = vpop.xlane.xlu0 %4037
    %v4039 = vsel %vm872, %v4035, -inf
    %4040 = vmax.xlane.f32.xlu0 %v4039
    %v4041 = vpop.xlane.xlu0 %4040
    %v4042 = vsub.f32 %v4034, %v4038
    %v4043 = vsub.f32 %v4035, %v4041
    %v4044 = vmul.f32 %v4042, 1.442695
    %v4045 = vpow.pop %v4044
    %v4046 = vmul.f32 %v4043, 1.442695
    %v4047 = vpow.pop %v4046
    %v4048 = vsel %vm872, %v4045, 0.0
    %4049 = vadd.xlane.f32.xlu0 %v4048
    %v4050 = vpop.xlane.xlu0 %4049
    %v4051 = vsel %vm872, %v4047, 0.0
    %4052 = vadd.xlane.f32.xlu0 %v4051
    %v4053 = vpop.xlane.xlu0 %4052
    %v4054 = vrcp.pop %v4050
    %v4055 = vrcp.pop %v4053
    %v4056 = vmul.f32 %v4045, %v4054
    %v4057 = vmul.f32 %v4047, %v4055
    %4058 = vrot.lane.b32.xlu0 %v2874, 104
    %v4059 = vpop.permute.xlu0 %4058
    %v4062 = vsel %vm872, %v4056, 0
    %4064 = vmatprep.subr.mxu0 0.0
    %4065 = vmatpush1.msra.mxu0 0.0
    %4066 = vmatprep.subr.mxu0 0.0
    %4067 = vmatpush1.msra.mxu0 0.0
    %4068 = vmatprep.subr.mxu0 0.0
    %4069 = vmatpush1.msra.mxu0 0.0
    %4070 = vmatprep.subr.mxu0 0.0
    %4071 = vmatpush1.msra.mxu0 0.0
    %4072 = vmatprep.subr.mxu0 0.0
    %4073 = vmatpush1.msra.mxu0 0.0
    %4074 = vmatprep.subr.mxu0 0.0
    %4075 = vmatpush1.msra.mxu0 0.0
    %4076 = vmatprep.subr.mxu0 0.0
    %4077 = vmatpush1.msra.mxu0 0.0
    %4078 = vmatprep.subr.mxu0 0.0
    %4079 = vmatpush1.msra.mxu0 0.0
    %4080 = vmatprep.subr.mxu0 0.0
    %4081 = vmatpush1.msra.mxu0 0.0
    %4082 = vmatprep.subr.mxu0 0.0
    %4083 = vmatpush1.msra.mxu0 0.0
    %4084 = vmatprep.subr.mxu0 0.0
    %4085 = vmatpush1.msra.mxu0 0.0
    %4086 = vmatprep.subr.mxu0 0.0
    %4087 = vmatpush1.msra.mxu0 0.0
    %4088 = vmatprep.subr.mxu0 0.0
    %4089 = vmatpush1.msra.mxu0 0.0
    %4090 = vmatprep.subr.mxu0 0.0
    %4091 = vmatpush1.msra.mxu0 0.0
    %4092 = vmatprep.subr.mxu0 0.0
    %4093 = vmatpush1.msra.mxu0 0.0
    %4094 = vmatprep.subr.mxu0 0.0
    %4095 = vmatpush1.msra.mxu0 %v4059
    %4096 = vmatprep.subr.mxu0 0.0
    %4097 = vmatpush2.msra.mxu0 0.0
    %4098 = vmatprep.subr.mxu0 0.0
    %4099 = vmatpush2.msra.mxu0 0.0
    %4100 = vmatprep.subr.mxu0 0.0
    %4101 = vmatpush2.msra.mxu0 0.0
    %4102 = vmatprep.subr.mxu0 0.0
    %4103 = vmatpush2.msra.mxu0 0.0
    %4104 = vmatprep.subr.mxu0 0.0
    %4105 = vmatpush2.msra.mxu0 0.0
    %4106 = vmatprep.subr.mxu0 0.0
    %4107 = vmatpush2.msra.mxu0 0.0
    %4108 = vmatprep.subr.mxu0 0.0
    %4109 = vmatpush2.msra.mxu0 0.0
    %4110 = vmatprep.subr.mxu0 0.0
    %4111 = vmatpush2.msra.mxu0 0.0
    %4112 = vmatprep.subr.mxu0 0.0
    %4113 = vmatpush2.msra.mxu0 0.0
    %4114 = vmatprep.subr.mxu0 0.0
    %4115 = vmatpush2.msra.mxu0 0.0
    %4116 = vmatprep.subr.mxu0 0.0
    %4117 = vmatpush2.msra.mxu0 0.0
    %4118 = vmatprep.subr.mxu0 0.0
    %4119 = vmatpush2.msra.mxu0 0.0
    %4120 = vmatprep.subr.mxu0 0.0
    %4121 = vmatpush2.msra.mxu0 0.0
    %4122 = vmatprep.subr.mxu0 0.0
    %4123 = vmatpush2.msra.mxu0 0.0
    %4124 = vmatprep.subr.mxu0 0.0
    %4125 = vmatpush2.msra.mxu0 0.0
    %4126 = vmatprep.subr.mxu0 0.0
    %4127 = vmatpush2.msra.mxu0 0.0
    %4128 = vmatprep.mubr.f32.mxu0 0.0
    %4129 = vmatmul.mubr.f32.gmra.mxu0 %v4062
    %v4130 = vpop.f32.mrf.mxu0
    %v4131 = vadd.f32 0.0, %v4130
    %v4132 = vpop.f32.mrf.mxu0
    %4133 = vdwg.mxu0
    %4134 = vrot.lane.b32.xlu0 %v2879, 104
    %v4135 = vpop.permute.xlu0 %4134
    %v4138 = vsel %vm872, %v4057, 0
    %4140 = vmatprep.subr.mxu0 0.0
    %4141 = vmatpush1.msra.mxu0 0.0
    %4142 = vmatprep.subr.mxu0 0.0
    %4143 = vmatpush1.msra.mxu0 0.0
    %4144 = vmatprep.subr.mxu0 0.0
    %4145 = vmatpush1.msra.mxu0 0.0
    %4146 = vmatprep.subr.mxu0 0.0
    %4147 = vmatpush1.msra.mxu0 0.0
    %4148 = vmatprep.subr.mxu0 0.0
    %4149 = vmatpush1.msra.mxu0 0.0
    %4150 = vmatprep.subr.mxu0 0.0
    %4151 = vmatpush1.msra.mxu0 0.0
    %4152 = vmatprep.subr.mxu0 0.0
    %4153 = vmatpush1.msra.mxu0 0.0
    %4154 = vmatprep.subr.mxu0 0.0
    %4155 = vmatpush1.msra.mxu0 0.0
    %4156 = vmatprep.subr.mxu0 0.0
    %4157 = vmatpush1.msra.mxu0 0.0
    %4158 = vmatprep.subr.mxu0 0.0
    %4159 = vmatpush1.msra.mxu0 0.0
    %4160 = vmatprep.subr.mxu0 0.0
    %4161 = vmatpush1.msra.mxu0 0.0
    %4162 = vmatprep.subr.mxu0 0.0
    %4163 = vmatpush1.msra.mxu0 0.0
    %4164 = vmatprep.subr.mxu0 0.0
    %4165 = vmatpush1.msra.mxu0 0.0
    %4166 = vmatprep.subr.mxu0 0.0
    %4167 = vmatpush1.msra.mxu0 0.0
    %4168 = vmatprep.subr.mxu0 0.0
    %4169 = vmatpush1.msra.mxu0 0.0
    %4170 = vmatprep.subr.mxu0 0.0
    %4171 = vmatpush1.msra.mxu0 %v4135
    %4172 = vmatprep.subr.mxu0 0.0
    %4173 = vmatpush2.msra.mxu0 0.0
    %4174 = vmatprep.subr.mxu0 0.0
    %4175 = vmatpush2.msra.mxu0 0.0
    %4176 = vmatprep.subr.mxu0 0.0
    %4177 = vmatpush2.msra.mxu0 0.0
    %4178 = vmatprep.subr.mxu0 0.0
    %4179 = vmatpush2.msra.mxu0 0.0
    %4180 = vmatprep.subr.mxu0 0.0
    %4181 = vmatpush2.msra.mxu0 0.0
    %4182 = vmatprep.subr.mxu0 0.0
    %4183 = vmatpush2.msra.mxu0 0.0
    %4184 = vmatprep.subr.mxu0 0.0
    %4185 = vmatpush2.msra.mxu0 0.0
    %4186 = vmatprep.subr.mxu0 0.0
    %4187 = vmatpush2.msra.mxu0 0.0
    %4188 = vmatprep.subr.mxu0 0.0
    %4189 = vmatpush2.msra.mxu0 0.0
    %4190 = vmatprep.subr.mxu0 0.0
    %4191 = vmatpush2.msra.mxu0 0.0
    %4192 = vmatprep.subr.mxu0 0.0
    %4193 = vmatpush2.msra.mxu0 0.0
    %4194 = vmatprep.subr.mxu0 0.0
    %4195 = vmatpush2.msra.mxu0 0.0
    %4196 = vmatprep.subr.mxu0 0.0
    %4197 = vmatpush2.msra.mxu0 0.0
    %4198 = vmatprep.subr.mxu0 0.0
    %4199 = vmatpush2.msra.mxu0 0.0
    %4200 = vmatprep.subr.mxu0 0.0
    %4201 = vmatpush2.msra.mxu0 0.0
    %4202 = vmatprep.subr.mxu0 0.0
    %4203 = vmatpush2.msra.mxu0 0.0
    %4204 = vmatprep.mubr.f32.mxu0 0.0
    %4205 = vmatmul.mubr.f32.gmra.mxu0 %v4138
    %v4206 = vpop.f32.mrf.mxu0
    %v4207 = vadd.f32 0.0, %v4206
    %v4208 = vpop.f32.mrf.mxu0
    %4209 = vdwg.mxu0
    %4212 = vrot.lane.b32.xlu0 %v3462, 8
    %v4213 = vpop.permute.xlu0 %4212
    %4214 = vrot.lane.b32.xlu0 %v3539, 8
    %v4215 = vpop.permute.xlu0 %4214
    %4220 = vrot.lane.b32.xlu0 %v3797, 16
    %v4221 = vpop.permute.xlu0 %4220
    %4222 = vrot.lane.b32.xlu0 %v3873, 16
    %v4223 = vpop.permute.xlu0 %4222
    %4228 = vrot.lane.b32.xlu0 %v4131, 24
    %v4229 = vpop.permute.xlu0 %4228
    %4230 = vrot.lane.b32.xlu0 %v4207, 24
    %v4231 = vpop.permute.xlu0 %4230
    %v4234 = vsel %vm872, %v3130, %v4213
    %v4235 = vsel %vm872, %v3203, %v4215
    %v4236 = vsel %vm471, %v4234, %v4221
    %v4237 = vsel %vm471, %v4235, %v4223
    %v4238 = vsel %vm2239, %v4236, %v4229
    %v4239 = vsel %vm2239, %v4237, %v4231
    %v4241 = vlaneseq
    %v4242 = vshrl.u32 %v4241, 7
    %v4243 = vsub.s32 0, %v4242
    %v4244 = vrot.slane %v2614, %v4243
    %v4247 = vsel %vm628, %v4238, 0
    %v4250 = vsel %vm628, %v4239, 0
    %4252 = vmatprep.subr.mxu0 0.0
    %4253 = vmatpush1.msra.mxu0 0.0
    %4254 = vmatprep.subr.mxu0 0.0
    %4255 = vmatpush1.msra.mxu0 0.0
    %4256 = vmatprep.subr.mxu0 0.0
    %4257 = vmatpush1.msra.mxu0 0.0
    %4258 = vmatprep.subr.mxu0 0.0
    %4259 = vmatpush1.msra.mxu0 0.0
    %4260 = vmatprep.subr.mxu0 0.0
    %4261 = vmatpush1.msra.mxu0 0.0
    %4262 = vmatprep.subr.mxu0 0.0
    %4263 = vmatpush1.msra.mxu0 0.0
    %4264 = vmatprep.subr.mxu0 0.0
    %4265 = vmatpush1.msra.mxu0 0.0
    %4266 = vmatprep.subr.mxu0 0.0
    %4267 = vmatpush1.msra.mxu0 0.0
    %4268 = vmatprep.subr.mxu0 0.0
    %4269 = vmatpush1.msra.mxu0 0.0
    %4270 = vmatprep.subr.mxu0 0.0
    %4271 = vmatpush1.msra.mxu0 0.0
    %4272 = vmatprep.subr.mxu0 0.0
    %4273 = vmatpush1.msra.mxu0 0.0
    %4274 = vmatprep.subr.mxu0 0.0
    %4275 = vmatpush1.msra.mxu0 0.0
    %4276 = vmatprep.subr.mxu0 0.0
    %4277 = vmatpush1.msra.mxu0 %v2613
    %4278 = vmatprep.subr.mxu0 0.0
    %4279 = vmatpush1.msra.mxu0 %v2612
    %4280 = vmatprep.subr.mxu0 0.0
    %4281 = vmatpush1.msra.mxu0 %v2611
    %4282 = vmatprep.subr.mxu0 0.0
    %4283 = vmatpush1.msra.mxu0 %v2610
    %4284 = vmatprep.subr.mxu0 0.0
    %4285 = vmatpush2.msra.mxu0 0.0
    %4286 = vmatprep.subr.mxu0 0.0
    %4287 = vmatpush2.msra.mxu0 0.0
    %4288 = vmatprep.subr.mxu0 0.0
    %4289 = vmatpush2.msra.mxu0 0.0
    %4290 = vmatprep.subr.mxu0 0.0
    %4291 = vmatpush2.msra.mxu0 0.0
    %4292 = vmatprep.subr.mxu0 0.0
    %4293 = vmatpush2.msra.mxu0 0.0
    %4294 = vmatprep.subr.mxu0 0.0
    %4295 = vmatpush2.msra.mxu0 0.0
    %4296 = vmatprep.subr.mxu0 0.0
    %4297 = vmatpush2.msra.mxu0 0.0
    %4298 = vmatprep.subr.mxu0 0.0
    %4299 = vmatpush2.msra.mxu0 0.0
    %4300 = vmatprep.subr.mxu0 0.0
    %4301 = vmatpush2.msra.mxu0 0.0
    %4302 = vmatprep.subr.mxu0 0.0
    %4303 = vmatpush2.msra.mxu0 0.0
    %4304 = vmatprep.subr.mxu0 0.0
    %4305 = vmatpush2.msra.mxu0 0.0
    %4306 = vmatprep.subr.mxu0 0.0
    %4307 = vmatpush2.msra.mxu0 0.0
    %4308 = vmatprep.subr.mxu0 0.0
    %4309 = vmatpush2.msra.mxu0 0.0
    %4310 = vmatprep.subr.mxu0 0.0
    %4311 = vmatpush2.msra.mxu0 0.0
    %4312 = vmatprep.subr.mxu0 0.0
    %4313 = vmatpush2.msra.mxu0 0.0
    %4314 = vmatprep.subr.mxu0 0.0
    %4315 = vmatpush2.msra.mxu0 0.0
    %4316 = vmatprep.mubr.f32.mxu0 0.0
    %4317 = vmatmul.mubr.f32.gmra.mxu0 %v4247
    %v4318 = vpop.f32.mrf.mxu0
    %v4319 = vadd.f32 %v4244, %v4318
    %v4320 = vpop.f32.mrf.mxu0
    %4321 = vmatprep.mubr.f32.mxu0 0.0
    %4322 = vmatmul.mubr.f32.gmra.mxu0 %v4250
    %v4323 = vpop.f32.mrf.mxu0
    %v4324 = vadd.f32 %v4244, %v4323
    %v4325 = vpop.f32.mrf.mxu0
    %4326 = vdwg.mxu0
    %v4327 = vadd.f32 %v2593, %v4319
    %v4328 = vadd.f32 %v2594, %v4324
    %v4329 = vsel %vm628, %v4327, 0.0
    %4330 = vadd.xlane.f32.xlu0 %v4329
    %v4331 = vpop.xlane.xlu0 %4330
    %v4332 = vsel %vm628, %v4328, 0.0
    %4333 = vadd.xlane.f32.xlu0 %v4332
    %v4334 = vpop.xlane.xlu0 %4333
    %v4335 = vmul.f32 %v4331, %v2337
    %v4336 = vmul.f32 %v4334, %v2337
    %v4337 = vsub.f32 %v4327, %v4335
    %v4338 = vsub.f32 %v4328, %v4336
    %v4339 = vmul.f32 %v4337, %v4337
    %v4340 = vmul.f32 %v4338, %v4338
    %v4341 = vsel %vm628, %v4339, 0.0
    %4342 = vadd.xlane.f32.xlu0 %v4341
    %v4343 = vpop.xlane.xlu0 %4342
    %v4344 = vsel %vm628, %v4340, 0.0
    %4345 = vadd.xlane.f32.xlu0 %v4344
    %v4346 = vpop.xlane.xlu0 %4345
    %v4347 = vmul.f32 %v4343, %v2337
    %v4348 = vmul.f32 %v4346, %v2337
    %v4349 = vadd.f32 %v4347, 1e-06
    %v4350 = vadd.f32 %v4348, 1e-06
    %v4351 = vrsqrt.pop %v4349
    %v4352 = vrsqrt.pop %v4350
    %v4353 = vmul.f32 %v4337, %v4351
    %v4354 = vmul.f32 %v4338, %v4352
    %v4356 = vlaneseq
    %v4357 = vshrl.u32 %v4356, 7
    %v4358 = vsub.s32 0, %v4357
    %v4359 = vrot.slane %v2629, %v4358
    %v4361 = vmul.f32 %v4353, %v4359
    %v4362 = vmul.f32 %v4354, %v4359
    %v4364 = vlaneseq
    %v4365 = vshrl.u32 %v4364, 7
    %v4366 = vsub.s32 0, %v4365
    %v4367 = vrot.slane %v2630, %v4366
    %v4369 = vadd.f32 %v4361, %v4367
    %v4370 = vadd.f32 %v4362, %v4367
    %v4372 = vlaneseq
    %v4373 = vshrl.u32 %v4372, 7
    %v4374 = vsub.s32 0, %v4373
    %v4375 = vrot.slane %v2619, %v4374
    %v4378 = vsel %vm628, %v4369, 0
    %v4381 = vsel %vm628, %v4370, 0
    %4383 = vmatprep.subr.mxu0 0.0
    %4384 = vmatpush1.msra.mxu0 0.0
    %4385 = vmatprep.subr.mxu0 0.0
    %4386 = vmatpush1.msra.mxu0 0.0
    %4387 = vmatprep.subr.mxu0 0.0
    %4388 = vmatpush1.msra.mxu0 0.0
    %4389 = vmatprep.subr.mxu0 0.0
    %4390 = vmatpush1.msra.mxu0 0.0
    %4391 = vmatprep.subr.mxu0 0.0
    %4392 = vmatpush1.msra.mxu0 0.0
    %4393 = vmatprep.subr.mxu0 0.0
    %4394 = vmatpush1.msra.mxu0 0.0
    %4395 = vmatprep.subr.mxu0 0.0
    %4396 = vmatpush1.msra.mxu0 0.0
    %4397 = vmatprep.subr.mxu0 0.0
    %4398 = vmatpush1.msra.mxu0 0.0
    %4399 = vmatprep.subr.mxu0 0.0
    %4400 = vmatpush1.msra.mxu0 0.0
    %4401 = vmatprep.subr.mxu0 0.0
    %4402 = vmatpush1.msra.mxu0 0.0
    %4403 = vmatprep.subr.mxu0 0.0
    %4404 = vmatpush1.msra.mxu0 0.0
    %4405 = vmatprep.subr.mxu0 0.0
    %4406 = vmatpush1.msra.mxu0 0.0
    %4407 = vmatprep.subr.mxu0 0.0
    %4408 = vmatpush1.msra.mxu0 %v2618
    %4409 = vmatprep.subr.mxu0 0.0
    %4410 = vmatpush1.msra.mxu0 %v2617
    %4411 = vmatprep.subr.mxu0 0.0
    %4412 = vmatpush1.msra.mxu0 %v2616
    %4413 = vmatprep.subr.mxu0 0.0
    %4414 = vmatpush1.msra.mxu0 %v2615
    %4415 = vmatprep.subr.mxu0 0.0
    %4416 = vmatpush2.msra.mxu0 0.0
    %4417 = vmatprep.subr.mxu0 0.0
    %4418 = vmatpush2.msra.mxu0 0.0
    %4419 = vmatprep.subr.mxu0 0.0
    %4420 = vmatpush2.msra.mxu0 0.0
    %4421 = vmatprep.subr.mxu0 0.0
    %4422 = vmatpush2.msra.mxu0 0.0
    %4423 = vmatprep.subr.mxu0 0.0
    %4424 = vmatpush2.msra.mxu0 0.0
    %4425 = vmatprep.subr.mxu0 0.0
    %4426 = vmatpush2.msra.mxu0 0.0
    %4427 = vmatprep.subr.mxu0 0.0
    %4428 = vmatpush2.msra.mxu0 0.0
    %4429 = vmatprep.subr.mxu0 0.0
    %4430 = vmatpush2.msra.mxu0 0.0
    %4431 = vmatprep.subr.mxu0 0.0
    %4432 = vmatpush2.msra.mxu0 0.0
    %4433 = vmatprep.subr.mxu0 0.0
    %4434 = vmatpush2.msra.mxu0 0.0
    %4435 = vmatprep.subr.mxu0 0.0
    %4436 = vmatpush2.msra.mxu0 0.0
    %4437 = vmatprep.subr.mxu0 0.0
    %4438 = vmatpush2.msra.mxu0 0.0
    %4439 = vmatprep.subr.mxu0 0.0
    %4440 = vmatpush2.msra.mxu0 0.0
    %4441 = vmatprep.subr.mxu0 0.0
    %4442 = vmatpush2.msra.mxu0 0.0
    %4443 = vmatprep.subr.mxu0 0.0
    %4444 = vmatpush2.msra.mxu0 0.0
    %4445 = vmatprep.subr.mxu0 0.0
    %4446 = vmatpush2.msra.mxu0 0.0
    %4447 = vmatprep.mubr.f32.mxu0 0.0
    %4448 = vmatmul.mubr.f32.gmra.mxu0 %v4378
    %v4449 = vpop.f32.mrf.mxu0
    %v4450 = vadd.f32 %v4375, %v4449
    %v4451 = vpop.f32.mrf.mxu0
    %4452 = vmatprep.mubr.f32.mxu0 0.0
    %4453 = vmatmul.mubr.f32.gmra.mxu0 %v4381
    %v4454 = vpop.f32.mrf.mxu0
    %v4455 = vadd.f32 %v4375, %v4454
    %v4456 = vpop.f32.mrf.mxu0
    %4457 = vdwg.mxu0
    %v4458 = vmax.f32 %v4450, 0.0
    %v4459 = vmax.f32 %v4455, 0.0
    %v4461 = vlaneseq
    %v4462 = vshrl.u32 %v4461, 7
    %v4463 = vsub.s32 0, %v4462
    %v4464 = vrot.slane %v2628, %v4463
    %v4467 = vsel %vm2469, %v4458, 0
    %v4470 = vsel %vm2469, %v4459, 0
    %4472 = vmatprep.subr.mxu0 0.0
    %4473 = vmatpush1.msra.mxu0 0.0
    %4474 = vmatprep.subr.mxu0 0.0
    %4475 = vmatpush1.msra.mxu0 0.0
    %4476 = vmatprep.subr.mxu0 0.0
    %4477 = vmatpush1.msra.mxu0 0.0
    %4478 = vmatprep.subr.mxu0 0.0
    %4479 = vmatpush1.msra.mxu0 0.0
    %4480 = vmatprep.subr.mxu0 0.0
    %4481 = vmatpush1.msra.mxu0 0.0
    %4482 = vmatprep.subr.mxu0 0.0
    %4483 = vmatpush1.msra.mxu0 0.0
    %4484 = vmatprep.subr.mxu0 0.0
    %4485 = vmatpush1.msra.mxu0 0.0
    %4486 = vmatprep.subr.mxu0 0.0
    %4487 = vmatpush1.msra.mxu0 0.0
    %4488 = vmatprep.subr.mxu0 0.0
    %4489 = vmatpush1.msra.mxu0 %v2627
    %4490 = vmatprep.subr.mxu0 0.0
    %4491 = vmatpush1.msra.mxu0 %v2626
    %4492 = vmatprep.subr.mxu0 0.0
    %4493 = vmatpush1.msra.mxu0 %v2625
    %4494 = vmatprep.subr.mxu0 0.0
    %4495 = vmatpush1.msra.mxu0 %v2624
    %4496 = vmatprep.subr.mxu0 0.0
    %4497 = vmatpush1.msra.mxu0 %v2623
    %4498 = vmatprep.subr.mxu0 0.0
    %4499 = vmatpush1.msra.mxu0 %v2622
    %4500 = vmatprep.subr.mxu0 0.0
    %4501 = vmatpush1.msra.mxu0 %v2621
    %4502 = vmatprep.subr.mxu0 0.0
    %4503 = vmatpush1.msra.mxu0 %v2620
    %4504 = vmatprep.subr.mxu0 0.0
    %4505 = vmatpush2.msra.mxu0 0.0
    %4506 = vmatprep.subr.mxu0 0.0
    %4507 = vmatpush2.msra.mxu0 0.0
    %4508 = vmatprep.subr.mxu0 0.0
    %4509 = vmatpush2.msra.mxu0 0.0
    %4510 = vmatprep.subr.mxu0 0.0
    %4511 = vmatpush2.msra.mxu0 0.0
    %4512 = vmatprep.subr.mxu0 0.0
    %4513 = vmatpush2.msra.mxu0 0.0
    %4514 = vmatprep.subr.mxu0 0.0
    %4515 = vmatpush2.msra.mxu0 0.0
    %4516 = vmatprep.subr.mxu0 0.0
    %4517 = vmatpush2.msra.mxu0 0.0
    %4518 = vmatprep.subr.mxu0 0.0
    %4519 = vmatpush2.msra.mxu0 0.0
    %4520 = vmatprep.subr.mxu0 0.0
    %4521 = vmatpush2.msra.mxu0 0.0
    %4522 = vmatprep.subr.mxu0 0.0
    %4523 = vmatpush2.msra.mxu0 0.0
    %4524 = vmatprep.subr.mxu0 0.0
    %4525 = vmatpush2.msra.mxu0 0.0
    %4526 = vmatprep.subr.mxu0 0.0
    %4527 = vmatpush2.msra.mxu0 0.0
    %4528 = vmatprep.subr.mxu0 0.0
    %4529 = vmatpush2.msra.mxu0 0.0
    %4530 = vmatprep.subr.mxu0 0.0
    %4531 = vmatpush2.msra.mxu0 0.0
    %4532 = vmatprep.subr.mxu0 0.0
    %4533 = vmatpush2.msra.mxu0 0.0
    %4534 = vmatprep.subr.mxu0 0.0
    %4535 = vmatpush2.msra.mxu0 0.0
    %4536 = vmatprep.mubr.f32.mxu0 0.0
    %4537 = vmatmul.mubr.f32.gmra.mxu0 %v4467
    %v4538 = vpop.f32.mrf.mxu0
    %v4539 = vadd.f32 %v4464, %v4538
    %v4540 = vpop.f32.mrf.mxu0
    %4541 = vmatprep.mubr.f32.mxu0 0.0
    %4542 = vmatmul.mubr.f32.gmra.mxu0 %v4470
    %v4543 = vpop.f32.mrf.mxu0
    %v4544 = vadd.f32 %v4464, %v4543
    %v4545 = vpop.f32.mrf.mxu0
    %4546 = vdwg.mxu0
    %v4547 = vadd.f32 %v4369, %v4539
    %v4548 = vadd.f32 %v4370, %v4544
    %v4549 = vsel %vm628, %v4547, 0.0
    %4550 = vadd.xlane.f32.xlu0 %v4549
    %v4551 = vpop.xlane.xlu0 %4550
    %v4552 = vsel %vm628, %v4548, 0.0
    %4553 = vadd.xlane.f32.xlu0 %v4552
    %v4554 = vpop.xlane.xlu0 %4553
    %v4555 = vmul.f32 %v4551, %v2337
    %v4556 = vmul.f32 %v4554, %v2337
    %v4557 = vsub.f32 %v4547, %v4555
    %v4558 = vsub.f32 %v4548, %v4556
    %v4559 = vmul.f32 %v4557, %v4557
    %v4560 = vmul.f32 %v4558, %v4558
    %v4561 = vsel %vm628, %v4559, 0.0
    %4562 = vadd.xlane.f32.xlu0 %v4561
    %v4563 = vpop.xlane.xlu0 %4562
    %v4564 = vsel %vm628, %v4560, 0.0
    %4565 = vadd.xlane.f32.xlu0 %v4564
    %v4566 = vpop.xlane.xlu0 %4565
    %v4567 = vmul.f32 %v4563, %v2337
    %v4568 = vmul.f32 %v4566, %v2337
    %v4569 = vadd.f32 %v4567, 1e-06
    %v4570 = vadd.f32 %v4568, 1e-06
    %v4571 = vrsqrt.pop %v4569
    %v4572 = vrsqrt.pop %v4570
    %v4573 = vmul.f32 %v4557, %v4571
    %v4574 = vmul.f32 %v4558, %v4572
    %v4576 = vlaneseq
    %v4577 = vshrl.u32 %v4576, 7
    %v4578 = vsub.s32 0, %v4577
    %v4579 = vrot.slane %v2631, %v4578
    %v4581 = vmul.f32 %v4573, %v4579
    %v4582 = vmul.f32 %v4574, %v4579
    %v4584 = vlaneseq
    %v4585 = vshrl.u32 %v4584, 7
    %v4586 = vsub.s32 0, %v4585
    %v4587 = vrot.slane %v2632, %v4586
    %v4589 = vadd.f32 %v4581, %v4587
    %v4590 = vadd.f32 %v4582, %v4587
    %v4591 = vld [vmem:[%s73] sm:$0xff]
    %v4592 = vld [vmem:[%s73 + $0x8] sm:$0xff]
    %v4593 = vld [vmem:[%s73 + $0x10] sm:$0xff]
    %v4594 = vld [vmem:[%s73 + $0x18] sm:$0xff]
    %v4595 = vld [vmem:[#allocation40] sm:$0x1]
    %v4597 = vlaneseq
    %v4598 = vshrl.u32 %v4597, 7
    %v4599 = vsub.s32 0, %v4598
    %v4600 = vrot.slane %v4595, %v4599
    %v4603 = vsel %vm628, %v4589, 0
    %v4606 = vsel %vm628, %v4590, 0
    %4608 = vmatprep.subr.mxu0 0.0
    %4609 = vmatpush1.msra.mxu0 0.0
    %4610 = vmatprep.subr.mxu0 0.0
    %4611 = vmatpush1.msra.mxu0 0.0
    %4612 = vmatprep.subr.mxu0 0.0
    %4613 = vmatpush1.msra.mxu0 0.0
    %4614 = vmatprep.subr.mxu0 0.0
    %4615 = vmatpush1.msra.mxu0 0.0
    %4616 = vmatprep.subr.mxu0 0.0
    %4617 = vmatpush1.msra.mxu0 0.0
    %4618 = vmatprep.subr.mxu0 0.0
    %4619 = vmatpush1.msra.mxu0 0.0
    %4620 = vmatprep.subr.mxu0 0.0
    %4621 = vmatpush1.msra.mxu0 0.0
    %4622 = vmatprep.subr.mxu0 0.0
    %4623 = vmatpush1.msra.mxu0 0.0
    %4624 = vmatprep.subr.mxu0 0.0
    %4625 = vmatpush1.msra.mxu0 0.0
    %4626 = vmatprep.subr.mxu0 0.0
    %4627 = vmatpush1.msra.mxu0 0.0
    %4628 = vmatprep.subr.mxu0 0.0
    %4629 = vmatpush1.msra.mxu0 0.0
    %4630 = vmatprep.subr.mxu0 0.0
    %4631 = vmatpush1.msra.mxu0 0.0
    %4632 = vmatprep.subr.mxu0 0.0
    %4633 = vmatpush1.msra.mxu0 %v4594
    %4634 = vmatprep.subr.mxu0 0.0
    %4635 = vmatpush1.msra.mxu0 %v4593
    %4636 = vmatprep.subr.mxu0 0.0
    %4637 = vmatpush1.msra.mxu0 %v4592
    %4638 = vmatprep.subr.mxu0 0.0
    %4639 = vmatpush1.msra.mxu0 %v4591
    %4640 = vmatprep.subr.mxu0 0.0
    %4641 = vmatpush2.msra.mxu0 0.0
    %4642 = vmatprep.subr.mxu0 0.0
    %4643 = vmatpush2.msra.mxu0 0.0
    %4644 = vmatprep.subr.mxu0 0.0
    %4645 = vmatpush2.msra.mxu0 0.0
    %4646 = vmatprep.subr.mxu0 0.0
    %4647 = vmatpush2.msra.mxu0 0.0
    %4648 = vmatprep.subr.mxu0 0.0
    %4649 = vmatpush2.msra.mxu0 0.0
    %4650 = vmatprep.subr.mxu0 0.0
    %4651 = vmatpush2.msra.mxu0 0.0
    %4652 = vmatprep.subr.mxu0 0.0
    %4653 = vmatpush2.msra.mxu0 0.0
    %4654 = vmatprep.subr.mxu0 0.0
    %4655 = vmatpush2.msra.mxu0 0.0
    %4656 = vmatprep.subr.mxu0 0.0
    %4657 = vmatpush2.msra.mxu0 0.0
    %4658 = vmatprep.subr.mxu0 0.0
    %4659 = vmatpush2.msra.mxu0 0.0
    %4660 = vmatprep.subr.mxu0 0.0
    %4661 = vmatpush2.msra.mxu0 0.0
    %4662 = vmatprep.subr.mxu0 0.0
    %4663 = vmatpush2.msra.mxu0 0.0
    %4664 = vmatprep.subr.mxu0 0.0
    %4665 = vmatpush2.msra.mxu0 0.0
    %4666 = vmatprep.subr.mxu0 0.0
    %4667 = vmatpush2.msra.mxu0 0.0
    %4668 = vmatprep.subr.mxu0 0.0
    %4669 = vmatpush2.msra.mxu0 0.0
    %4670 = vmatprep.subr.mxu0 0.0
    %4671 = vmatpush2.msra.mxu0 0.0
    %4672 = vmatprep.mubr.f32.mxu0 0.0
    %4673 = vmatmul.mubr.f32.gmra.mxu0 %v4603
    %v4674 = vpop.f32.mrf.mxu0
    %v4675 = vadd.f32 %v4600, %v4674
    %v4676 = vpop.f32.mrf.mxu0
    %4677 = vmatprep.mubr.f32.mxu0 0.0
    %4678 = vmatmul.mubr.f32.gmra.mxu0 %v4606
    %v4679 = vpop.f32.mrf.mxu0
    %v4680 = vadd.f32 %v4600, %v4679
    %v4681 = vpop.f32.mrf.mxu0
    %4682 = vdwg.mxu0
    %v4683 = vsel %vm471, %v4675, -inf
    %4684 = vmax.xlane.f32.xlu0 %v4683
    %v4685 = vpop.xlane.xlu0 %4684
    %v4686 = vsel %vm471, %v4680, -inf
    %4687 = vmax.xlane.f32.xlu0 %v4686
    %v4688 = vpop.xlane.xlu0 %4687
    %v4689 = vsub.f32 %v4675, %v4685
    %v4690 = vsub.f32 %v4680, %v4688
    %v4691 = vmul.f32 %v4689, 1.442695
    %v4692 = vpow.pop %v4691
    %v4693 = vmul.f32 %v4690, 1.442695
    %v4694 = vpow.pop %v4693
    %v4695 = vsel %vm471, %v4692, 0.0
    %4696 = vadd.xlane.f32.xlu0 %v4695
    %v4697 = vpop.xlane.xlu0 %4696
    %v4698 = vsel %vm471, %v4694, 0.0
    %4699 = vadd.xlane.f32.xlu0 %v4698
    %v4700 = vpop.xlane.xlu0 %4699
    %v4701 = vlog2.pop %v4697
    %v4702 = vmul.f32 %v4701, 0.6931472
    %v4703 = vlog2.pop %v4700
    %v4704 = vmul.f32 %v4703, 0.6931472
    %v4705 = vsub.f32 %v4689, %v4702
    %v4706 = vsub.f32 %v4690, %v4704
    %4707 = vst.msk [vmem:[#allocation41] sm:$0xff] %vm471, %v4705
    %4708 = vst.msk [vmem:[#allocation41 + $0x8] sm:$0xff] %vm471, %v4706
    // Predicated region
    $region254: #{narrow_transformer_forward.1} parent=1 // pred_check
      _
    $region255: #{narrow_transformer_forward.1} parent=1 // pred_check_branch
      %4710 = sbr.rel (0) target = $region257
    $region256: #{narrow_transformer_forward.1} parent=1 // pred_region
      %s4712 = ssub.s32 256, 256
      %4713 = vsyncadd [#allocation4], %s4712
      %s4714 = sshll.u32 [#allocation41], 4
      %s4715 = int_to_ptr.vmem [resolvable:$true] %s4714
      %4720 = dma.vmem_to_hbm [thread:$0]  %s4715, 256, %s77, [#allocation4], 128, 128, 8
    $region257: #{narrow_transformer_forward.1} parent=1 // pred_fallthru
      _
    // Predicated region
    $region258: #{narrow_transformer_forward.1} parent=1 // pred_check
      _
    $region259: #{narrow_transformer_forward.1} parent=1 // pred_check_branch
      %4722 = sbr.rel (0) target = $region261
    $region260: #{narrow_transformer_forward.1} parent=1 // pred_region
      %4723 = dma.done [#allocation4], 256
    $region261: #{narrow_transformer_forward.1} parent=1 // pred_fallthru
      _
    %4724 = vsyncpa [#allocation3], 1
    %4725 = vsyncpa [#allocation6], 1
    %4726 = vsyncpa [#allocation9], 1
    %4727 = vsyncpa [#allocation12], 1
    %4728 = vsyncpa [#allocation15], 1
    %4729 = vsyncpa [#allocation18], 1
    %4730 = vsyncpa [#allocation21], 1
    %4731 = vsyncpa [#allocation24], 1
    %4732 = vsyncpa [#allocation27], 1
    %4733 = vsyncpa [#allocation30], 1
    %4734 = vsyncpa [#allocation33], 1
    %4735 = vsyncpa [#allocation36], 1
    %4736 = vsyncpa [#allocation39], 1
    %4737 = vsyncpa [#allocation4], 1

</llo_original>
